<compile_context>
chip_gen: v7x
topology: tpu7x:2x2x1
jax: 0.10.0
libtpu: 0.0.40
codegen_flags: <defaults>
</compile_context>

<pallas_src>
import jax
import jax.numpy as jnp
import numpy as np
from jax.experimental import pallas as pl
from jax.experimental.pallas import tpu as pltpu


def _cdiv(a, b):
    return (a + b - 1) // b


def _choose_hw_tile(hw, bytes_per_col, n_batch, vmem_budget=16 << 20,
                    max_tile=2048):
    """Lane tile over the flattened H*W axis.

    Multiple of 128 (or the full HW when HW < 128); sized so the per-step VMEM
    footprint (incl. double buffering) stays within `vmem_budget`; the last
    block may be partial, so no HBM padding pass is needed.
    """
    if hw < 128:
        return hw
    cap = (vmem_budget // max(bytes_per_col, 1)) // 128 * 128
    cap = max(128, min(max_tile, cap))
    tile = min(cap, (hw // 128) * 128)
    # Keep >= 2 grid steps so both v7x TensorCores get work.
    while n_batch * _cdiv(hw, tile) < 2 and tile > 128:
        tile = max(128, (tile // 2) // 128 * 128)
    return tile


def _make_fuse_kernel(T_f, T_out, K, alpha, pad, compute_dtype):
    """relu(BN(conv3d[K,1,1], stride [alpha,1,1])) for one (batch, hw-tile) block.

    The temporal unfold (zero-padded, stride alpha) is done here: out-of-range
    taps are skipped statically, so zero padding is exact.
    """

    def kernel(x_ref, w_ref, shift_ref, o_ref):
        # x_ref:     (1, C_in, T_f, tile)    fast pathway block, native dtype
        # w_ref:     (K, C_out, C_in)        conv weight with BN scale folded in
        # shift_ref: (C_out, 1)              BN shift (f32)
        # o_ref:     (1, C_out, T_out, tile)
        shift = shift_ref[...]
        c_out = o_ref.shape[1]
        tile = o_ref.shape[3]
        for t in range(T_out):                       # static unroll
            acc = None
            for k in range(K):                       # static unroll
                src = t * alpha - pad + k
                if 0 <= src < T_f:                   # invalid taps skipped at trace time
                    xk = x_ref[0, :, src, :].astype(compute_dtype)   # (C_in, tile)
                    d = jnp.dot(w_ref[k], xk,
                                preferred_element_type=jnp.float32)  # (C_out, tile)
                    acc = d if acc is None else acc + d
            if acc is None:   # cannot happen for a valid conv geometry
                acc = jnp.zeros((c_out, tile), jnp.float32)
            o_ref[0, :, t, :] = jnp.maximum(acc + shift, 0.0).astype(o_ref.dtype)

    return kernel


def fuse_fast_to_slow(x_s, x_f, weight, gamma, beta, running_mean, running_var,
                      *, fusion_kernel, alpha, eps=1e-5, compute_dtype=None):
    """Forward of FuseFastToSlow.  x_s, x_f are NCTHW."""
    N, C_in, T_f, H, W = x_f.shape
    C_out = weight.shape[0]
    K = fusion_kernel
    pad = K // 2
    HW = H * W
    T_out = (T_f + 2 * pad - K) // alpha + 1

    if compute_dtype is None:
        compute_dtype = x_f.dtype          # module-default numerics
    out_dtype = x_f.dtype

    # ---- per-step VMEM budget -> lane tile over H*W ----
    xb = np.dtype(x_f.dtype).itemsize
    ob = np.dtype(out_dtype).itemsize
    bytes_per_col = 2 * (C_in * T_f * xb + C_out * T_out * ob) + 4 * C_out
    tile = _choose_hw_tile(HW, bytes_per_col, N)
    num_m = _cdiv(HW, tile)

    # ---- glue (tiny): fold eval-mode BN into the conv weight + a shift ----
    scale = (gamma / jnp.sqrt(running_var + eps)).astype(jnp.float32)
    shift = (beta.astype(jnp.float32)
             - running_mean.astype(jnp.float32) * scale).reshape(C_out, 1)
    # weight (C_out, C_in, K, 1, 1) -> (K, C_out, C_in), BN scale folded in.
    w = jnp.transpose(weight[:, :, :, 0, 0], (2, 0, 1)) * scale[None, :, None]
    w = w.astype(compute_dtype)

    x4 = x_f.reshape(N, C_in, T_f, HW)     # free reshape, no HBM copy

    kernel = _make_fuse_kernel(T_f, T_out, K, alpha, pad, compute_dtype)

    flops = int(2 * N * C_out * C_in * K * T_out * HW)
    bytes_accessed = int(N * C_in * T_f * HW * xb
                         + N * C_out * T_out * HW * ob
                         + K * C_out * C_in * np.dtype(compute_dtype).itemsize)

    fuse = pl.pallas_call(
        kernel,
        out_shape=jax.ShapeDtypeStruct((N, C_out, T_out, HW), out_dtype),
        grid=(N, num_m),
        in_specs=[
            pl.BlockSpec((1, C_in, T_f, tile), lambda n, m: (n, 0, 0, m)),
            pl.BlockSpec((K, C_out, C_in), lambda n, m: (0, 0, 0)),
            pl.BlockSpec((C_out, 1), lambda n, m: (0, 0)),
        ],
        out_specs=pl.BlockSpec((1, C_out, T_out, tile),
                               lambda n, m: (n, 0, 0, m)),
        compiler_params=pltpu.CompilerParams(
            dimension_semantics=("parallel", "parallel")),
        cost_estimate=pl.CostEstimate(flops=flops, transcendentals=0,
                                      bytes_accessed=bytes_accessed),
    )(x4, w, shift)

    # Channel-major kernel output -> NCTHW is a free reshape (no transpose,
    # no padded-lane slice pass).
    fuse_ncthw = fuse.reshape(N, C_out, T_out, H, W)

    # ---- pad_pathways semantics ----
    T_s = x_s.shape[2]
    out_T = max(T_s, T_out)
    pad_s = out_T - T_s
    pad_f = out_T - T_out
    if pad_s > 0:
        x_s = jnp.pad(x_s, ((0, 0), (0, 0),
                            (pad_s // 2, pad_s - pad_s // 2), (0, 0), (0, 0)))
    if pad_f > 0:
        fuse_ncthw = jnp.pad(fuse_ncthw, ((0, 0), (0, 0),
                                          (pad_f // 2, pad_f - pad_f // 2),
                                          (0, 0), (0, 0)))

    x_s_fuse = jnp.concatenate([x_s, fuse_ncthw], axis=1)
    return [x_s_fuse, x_f]


if __name__ == "__main__":
    # Module hyperparameters (small but consistent with the forward pass)
    N = 2
    dim_in = 4                    # fast-pathway channels (Conv3d in-channels)
    fusion_conv_channel_ratio = 2
    fusion_kernel = 5
    alpha = 4
    eps = 1e-5
    C_out = dim_in * fusion_conv_channel_ratio

    T_s, H, W = 8, 8, 8
    T_f = T_s * alpha             # fast pathway has alpha x more frames
    C_slow = 16

    key = jax.random.PRNGKey(0)
    ks = jax.random.split(key, 7)
    x_s = jax.random.normal(ks[0], (N, C_slow, T_s, H, W), jnp.float32)
    x_f = jax.random.normal(ks[1], (N, dim_in, T_f, H, W), jnp.float32)
    weight = 0.1 * jax.random.normal(ks[2], (C_out, dim_in, fusion_kernel, 1, 1),
                                     jnp.float32)
    gamma = jax.random.uniform(ks[3], (C_out,), jnp.float32, 0.5, 1.5)
    beta = 0.1 * jax.random.normal(ks[4], (C_out,), jnp.float32)
    running_mean = 0.1 * jax.random.normal(ks[5], (C_out,), jnp.float32)
    running_var = jax.random.uniform(ks[6], (C_out,), jnp.float32, 0.5, 1.5)

    fused_fn = jax.jit(fuse_fast_to_slow,
                       static_argnames=("fusion_kernel", "alpha", "eps",
                                        "compute_dtype"))

    # ---- f32 path (module-default numerics) ----
    out = fused_fn(x_s, x_f, weight, gamma, beta, running_mean, running_var,
                   fusion_kernel=fusion_kernel, alpha=alpha, eps=eps)
    jax.block_until_ready(out)
    x_s_fuse, x_f_out = out

    scale_v = gamma / jnp.sqrt(running_var + eps)
    shift_v = beta - running_mean * scale_v
    conv = jax.lax.conv_general_dilated(
        x_f, weight, window_strides=(alpha, 1, 1),
        padding=((fusion_kernel // 2, fusion_kernel // 2), (0, 0), (0, 0)),
        dimension_numbers=("NCDHW", "OIDHW", "NCDHW"),
        precision=jax.lax.Precision.HIGHEST)
    fuse_ref = jnp.maximum(conv * scale_v.reshape(1, -1, 1, 1, 1)
                           + shift_v.reshape(1, -1, 1, 1, 1), 0.0)
    ref_cat = jnp.concatenate([x_s, fuse_ref], axis=1)   # T_out == T_s here

    np.testing.assert_allclose(np.asarray(x_s_fuse), np.asarray(ref_cat),
                               rtol=1e-4, atol=1e-4)
    np.testing.assert_allclose(np.asarray(x_f_out), np.asarray(x_f))
    assert x_s_fuse.shape == (N, C_slow + C_out, T_s, H, W)

    # ---- bf16 MXU-operand path (works on v5e/v6e/v7x; HBM traffic is
    # unchanged now that the unfold happens in-kernel) ----
    out_bf = fused_fn(x_s, x_f, weight, gamma, beta, running_mean, running_var,
                      fusion_kernel=fusion_kernel, alpha=alpha, eps=eps,
                      compute_dtype=jnp.bfloat16)
    jax.block_until_ready(out_bf)
    x_s_fuse_bf = out_bf[0]
    # Reference with identically bf16-rounded operands (BN scale pre-folded).
    w_fold_bf = (weight * scale_v.reshape(-1, 1, 1, 1, 1)
                 ).astype(jnp.bfloat16).astype(jnp.float32)
    x_f_bf = x_f.astype(jnp.bfloat16).astype(jnp.float32)
    conv_bf = jax.lax.conv_general_dilated(
        x_f_bf, w_fold_bf, window_strides=(alpha, 1, 1),
        padding=((fusion_kernel // 2, fusion_kernel // 2), (0, 0), (0, 0)),
        dimension_numbers=("NCDHW", "OIDHW", "NCDHW"),
        precision=jax.lax.Precision.HIGHEST)
    fuse_ref_bf = jnp.maximum(conv_bf + shift_v.reshape(1, -1, 1, 1, 1), 0.0)
    np.testing.assert_allclose(np.asarray(x_s_fuse_bf[:, C_slow:]),
                               np.asarray(fuse_ref_bf), rtol=2e-2, atol=2e-2)

    print("KERNEL_OK")
</pallas_src>

<mosaic_0001>
module attributes {stable_mosaic.version = 11 : i64} {
  func.func @kernel(%arg0: i32, %arg1: i32, %arg2: memref<1x4x32x64xf32, #tpu.memory_space<vmem>>, %arg3: memref<5x8x4xf32, #tpu.memory_space<vmem>>, %arg4: memref<8x1xf32, #tpu.memory_space<vmem>>, %arg5: memref<1x8x8x64xf32, #tpu.memory_space<vmem>>) attributes {dimension_semantics = [#tpu.dimension_semantics<parallel>, #tpu.dimension_semantics<parallel>], iteration_bounds = array<i64: 2, 1>, scalar_prefetch = 0 : i64, scratch_operands = 0 : i64, tpu.core_type = #tpu.core_type<tc>, window_params = [{transform_indices = @transform_0, window_bounds = array<i64: 1, 4, 32, 64>}, {pipeline_mode = #tpu.pipeline_mode<synchronous>, transform_indices = @transform_1, window_bounds = array<i64: 5, 8, 4>}, {pipeline_mode = #tpu.pipeline_mode<synchronous>, transform_indices = @transform_2, window_bounds = array<i64: 8, 1>}, {transform_indices = @transform_3, window_bounds = array<i64: 1, 8, 8, 64>}]} {
    %c0 = arith.constant 0 : index
    %c0_0 = arith.constant 0 : index
    %0 = vector.load %arg4[%c0, %c0_0] : memref<8x1xf32, #tpu.memory_space<vmem>>, vector<8x1xf32>
    %c0_1 = arith.constant 0 : index
    %c0_2 = arith.constant 0 : index
    %c0_3 = arith.constant 0 : index
    %c0_4 = arith.constant 0 : index
    %1 = vector.load %arg2[%c0_1, %c0_2, %c0_3, %c0_4] : memref<1x4x32x64xf32, #tpu.memory_space<vmem>>, vector<1x4x1x64xf32>
    %2 = vector.shape_cast %1 : vector<1x4x1x64xf32> to vector<4x64xf32>
    %c2 = arith.constant 2 : index
    %c0_5 = arith.constant 0 : index
    %c0_6 = arith.constant 0 : index
    %3 = vector.load %arg3[%c2, %c0_5, %c0_6] : memref<5x8x4xf32, #tpu.memory_space<vmem>>, vector<1x8x4xf32>
    %4 = vector.shape_cast %3 : vector<1x8x4xf32> to vector<8x4xf32>
    %cst = arith.constant dense<0.000000e+00> : vector<8x64xf32>
    %5 = tpu.matmul %4, %2, %cst {dimension_numbers = #tpu.dot_dimension_numbers<[1], [0], [0], [1], [0, 0, 1, 1], [], []>} : vector<8x4xf32>, vector<4x64xf32>, vector<8x64xf32> -> vector<8x64xf32>
    %c0_7 = arith.constant 0 : index
    %c0_8 = arith.constant 0 : index
    %c1 = arith.constant 1 : index
    %c0_9 = arith.constant 0 : index
    %6 = vector.load %arg2[%c0_7, %c0_8, %c1, %c0_9] : memref<1x4x32x64xf32, #tpu.memory_space<vmem>>, vector<1x4x1x64xf32>
    %7 = vector.shape_cast %6 : vector<1x4x1x64xf32> to vector<4x64xf32>
    %c3 = arith.constant 3 : index
    %c0_10 = arith.constant 0 : index
    %c0_11 = arith.constant 0 : index
    %8 = vector.load %arg3[%c3, %c0_10, %c0_11] : memref<5x8x4xf32, #tpu.memory_space<vmem>>, vector<1x8x4xf32>
    %9 = vector.shape_cast %8 : vector<1x8x4xf32> to vector<8x4xf32>
    %cst_12 = arith.constant dense<0.000000e+00> : vector<8x64xf32>
    %10 = tpu.matmul %9, %7, %cst_12 {dimension_numbers = #tpu.dot_dimension_numbers<[1], [0], [0], [1], [0, 0, 1, 1], [], []>} : vector<8x4xf32>, vector<4x64xf32>, vector<8x64xf32> -> vector<8x64xf32>
    %11 = arith.addf %5, %10 : vector<8x64xf32>
    %c0_13 = arith.constant 0 : index
    %c0_14 = arith.constant 0 : index
    %c2_15 = arith.constant 2 : index
    %c0_16 = arith.constant 0 : index
    %12 = vector.load %arg2[%c0_13, %c0_14, %c2_15, %c0_16] : memref<1x4x32x64xf32, #tpu.memory_space<vmem>>, vector<1x4x1x64xf32>
    %13 = vector.shape_cast %12 : vector<1x4x1x64xf32> to vector<4x64xf32>
    %c4 = arith.constant 4 : index
    %c0_17 = arith.constant 0 : index
    %c0_18 = arith.constant 0 : index
    %14 = vector.load %arg3[%c4, %c0_17, %c0_18] : memref<5x8x4xf32, #tpu.memory_space<vmem>>, vector<1x8x4xf32>
    %15 = vector.shape_cast %14 : vector<1x8x4xf32> to vector<8x4xf32>
    %cst_19 = arith.constant dense<0.000000e+00> : vector<8x64xf32>
    %16 = tpu.matmul %15, %13, %cst_19 {dimension_numbers = #tpu.dot_dimension_numbers<[1], [0], [0], [1], [0, 0, 1, 1], [], []>} : vector<8x4xf32>, vector<4x64xf32>, vector<8x64xf32> -> vector<8x64xf32>
    %17 = arith.addf %11, %16 : vector<8x64xf32>
    %18 = vector.broadcast %0 : vector<8x1xf32> to vector<8x64xf32>
    %19 = arith.addf %17, %18 : vector<8x64xf32>
    %cst_20 = arith.constant 0.000000e+00 : f32
    %20 = vector.broadcast %cst_20 : f32 to vector<8x64xf32>
    %21 = arith.maximumf %19, %20 : vector<8x64xf32>
    %c0_21 = arith.constant 0 : index
    %c0_22 = arith.constant 0 : index
    %c0_23 = arith.constant 0 : index
    %c0_24 = arith.constant 0 : index
    %22 = vector.load %arg5[%c0_21, %c0_22, %c0_23, %c0_24] : memref<1x8x8x64xf32, #tpu.memory_space<vmem>>, vector<1x8x1x64xf32>
    %23 = vector.shape_cast %22 : vector<1x8x1x64xf32> to vector<8x64xf32>
    %24 = vector.shape_cast %21 : vector<8x64xf32> to vector<1x8x1x64xf32>
    tpu.vector_store %arg5[%c0_21, %c0_22, %c0_23, %c0_24], %24 {strides = array<i32>} : memref<1x8x8x64xf32, #tpu.memory_space<vmem>>, vector<1x8x1x64xf32>,
    %c0_25 = arith.constant 0 : index
    %c0_26 = arith.constant 0 : index
    %c2_27 = arith.constant 2 : index
    %c0_28 = arith.constant 0 : index
    %25 = vector.load %arg2[%c0_25, %c0_26, %c2_27, %c0_28] : memref<1x4x32x64xf32, #tpu.memory_space<vmem>>, vector<1x4x1x64xf32>
    %26 = vector.shape_cast %25 : vector<1x4x1x64xf32> to vector<4x64xf32>
    %c0_29 = arith.constant 0 : index
    %c0_30 = arith.constant 0 : index
    %c0_31 = arith.constant 0 : index
    %27 = vector.load %arg3[%c0_29, %c0_30, %c0_31] : memref<5x8x4xf32, #tpu.memory_space<vmem>>, vector<1x8x4xf32>
    %28 = vector.shape_cast %27 : vector<1x8x4xf32> to vector<8x4xf32>
    %cst_32 = arith.constant dense<0.000000e+00> : vector<8x64xf32>
    %29 = tpu.matmul %28, %26, %cst_32 {dimension_numbers = #tpu.dot_dimension_numbers<[1], [0], [0], [1], [0, 0, 1, 1], [], []>} : vector<8x4xf32>, vector<4x64xf32>, vector<8x64xf32> -> vector<8x64xf32>
    %c0_33 = arith.constant 0 : index
    %c0_34 = arith.constant 0 : index
    %c3_35 = arith.constant 3 : index
    %c0_36 = arith.constant 0 : index
    %30 = vector.load %arg2[%c0_33, %c0_34, %c3_35, %c0_36] : memref<1x4x32x64xf32, #tpu.memory_space<vmem>>, vector<1x4x1x64xf32>
    %31 = vector.shape_cast %30 : vector<1x4x1x64xf32> to vector<4x64xf32>
    %c1_37 = arith.constant 1 : index
    %c0_38 = arith.constant 0 : index
    %c0_39 = arith.constant 0 : index
    %32 = vector.load %arg3[%c1_37, %c0_38, %c0_39] : memref<5x8x4xf32, #tpu.memory_space<vmem>>, vector<1x8x4xf32>
    %33 = vector.shape_cast %32 : vector<1x8x4xf32> to vector<8x4xf32>
    %cst_40 = arith.constant dense<0.000000e+00> : vector<8x64xf32>
    %34 = tpu.matmul %33, %31, %cst_40 {dimension_numbers = #tpu.dot_dimension_numbers<[1], [0], [0], [1], [0, 0, 1, 1], [], []>} : vector<8x4xf32>, vector<4x64xf32>, vector<8x64xf32> -> vector<8x64xf32>
    %35 = arith.addf %29, %34 : vector<8x64xf32>
    %c0_41 = arith.constant 0 : index
    %c0_42 = arith.constant 0 : index
    %c4_43 = arith.constant 4 : index
    %c0_44 = arith.constant 0 : index
    %36 = vector.load %arg2[%c0_41, %c0_42, %c4_43, %c0_44] : memref<1x4x32x64xf32, #tpu.memory_space<vmem>>, vector<1x4x1x64xf32>
    %37 = vector.shape_cast %36 : vector<1x4x1x64xf32> to vector<4x64xf32>
    %c2_45 = arith.constant 2 : index
    %c0_46 = arith.constant 0 : index
    %c0_47 = arith.constant 0 : index
    %38 = vector.load %arg3[%c2_45, %c0_46, %c0_47] : memref<5x8x4xf32, #tpu.memory_space<vmem>>, vector<1x8x4xf32>
    %39 = vector.shape_cast %38 : vector<1x8x4xf32> to vector<8x4xf32>
    %cst_48 = arith.constant dense<0.000000e+00> : vector<8x64xf32>
    %40 = tpu.matmul %39, %37, %cst_48 {dimension_numbers = #tpu.dot_dimension_numbers<[1], [0], [0], [1], [0, 0, 1, 1], [], []>} : vector<8x4xf32>, vector<4x64xf32>, vector<8x64xf32> -> vector<8x64xf32>
    %41 = arith.addf %35, %40 : vector<8x64xf32>
    %c0_49 = arith.constant 0 : index
    %c0_50 = arith.constant 0 : index
    %c5 = arith.constant 5 : index
    %c0_51 = arith.constant 0 : index
    %42 = vector.load %arg2[%c0_49, %c0_50, %c5, %c0_51] : memref<1x4x32x64xf32, #tpu.memory_space<vmem>>, vector<1x4x1x64xf32>
    %43 = vector.shape_cast %42 : vector<1x4x1x64xf32> to vector<4x64xf32>
    %c3_52 = arith.constant 3 : index
    %c0_53 = arith.constant 0 : index
    %c0_54 = arith.constant 0 : index
    %44 = vector.load %arg3[%c3_52, %c0_53, %c0_54] : memref<5x8x4xf32, #tpu.memory_space<vmem>>, vector<1x8x4xf32>
    %45 = vector.shape_cast %44 : vector<1x8x4xf32> to vector<8x4xf32>
    %cst_55 = arith.constant dense<0.000000e+00> : vector<8x64xf32>
    %46 = tpu.matmul %45, %43, %cst_55 {dimension_numbers = #tpu.dot_dimension_numbers<[1], [0], [0], [1], [0, 0, 1, 1], [], []>} : vector<8x4xf32>, vector<4x64xf32>, vector<8x64xf32> -> vector<8x64xf32>
    %47 = arith.addf %41, %46 : vector<8x64xf32>
    %c0_56 = arith.constant 0 : index
    %c0_57 = arith.constant 0 : index
    %c6 = arith.constant 6 : index
    %c0_58 = arith.constant 0 : index
    %48 = vector.load %arg2[%c0_56, %c0_57, %c6, %c0_58] : memref<1x4x32x64xf32, #tpu.memory_space<vmem>>, vector<1x4x1x64xf32>
    %49 = vector.shape_cast %48 : vector<1x4x1x64xf32> to vector<4x64xf32>
    %c4_59 = arith.constant 4 : index
    %c0_60 = arith.constant 0 : index
    %c0_61 = arith.constant 0 : index
    %50 = vector.load %arg3[%c4_59, %c0_60, %c0_61] : memref<5x8x4xf32, #tpu.memory_space<vmem>>, vector<1x8x4xf32>
    %51 = vector.shape_cast %50 : vector<1x8x4xf32> to vector<8x4xf32>
    %cst_62 = arith.constant dense<0.000000e+00> : vector<8x64xf32>
    %52 = tpu.matmul %51, %49, %cst_62 {dimension_numbers = #tpu.dot_dimension_numbers<[1], [0], [0], [1], [0, 0, 1, 1], [], []>} : vector<8x4xf32>, vector<4x64xf32>, vector<8x64xf32> -> vector<8x64xf32>
    %53 = arith.addf %47, %52 : vector<8x64xf32>
    %54 = vector.broadcast %0 : vector<8x1xf32> to vector<8x64xf32>
    %55 = arith.addf %53, %54 : vector<8x64xf32>
    %cst_63 = arith.constant 0.000000e+00 : f32
    %56 = vector.broadcast %cst_63 : f32 to vector<8x64xf32>
    %57 = arith.maximumf %55, %56 : vector<8x64xf32>
    %c0_64 = arith.constant 0 : index
    %c0_65 = arith.constant 0 : index
    %c1_66 = arith.constant 1 : index
    %c0_67 = arith.constant 0 : index
    %58 = vector.load %arg5[%c0_64, %c0_65, %c1_66, %c0_67] : memref<1x8x8x64xf32, #tpu.memory_space<vmem>>, vector<1x8x1x64xf32>
    %59 = vector.shape_cast %58 : vector<1x8x1x64xf32> to vector<8x64xf32>
    %60 = vector.shape_cast %57 : vector<8x64xf32> to vector<1x8x1x64xf32>
    tpu.vector_store %arg5[%c0_64, %c0_65, %c1_66, %c0_67], %60 {strides = array<i32>} : memref<1x8x8x64xf32, #tpu.memory_space<vmem>>, vector<1x8x1x64xf32>,
    %c0_68 = arith.constant 0 : index
    %c0_69 = arith.constant 0 : index
    %c6_70 = arith.constant 6 : index
    %c0_71 = arith.constant 0 : index
    %61 = vector.load %arg2[%c0_68, %c0_69, %c6_70, %c0_71] : memref<1x4x32x64xf32, #tpu.memory_space<vmem>>, vector<1x4x1x64xf32>
    %62 = vector.shape_cast %61 : vector<1x4x1x64xf32> to vector<4x64xf32>
    %c0_72 = arith.constant 0 : index
    %c0_73 = arith.constant 0 : index
    %c0_74 = arith.constant 0 : index
    %63 = vector.load %arg3[%c0_72, %c0_73, %c0_74] : memref<5x8x4xf32, #tpu.memory_space<vmem>>, vector<1x8x4xf32>
    %64 = vector.shape_cast %63 : vector<1x8x4xf32> to vector<8x4xf32>
    %cst_75 = arith.constant dense<0.000000e+00> : vector<8x64xf32>
    %65 = tpu.matmul %64, %62, %cst_75 {dimension_numbers = #tpu.dot_dimension_numbers<[1], [0], [0], [1], [0, 0, 1, 1], [], []>} : vector<8x4xf32>, vector<4x64xf32>, vector<8x64xf32> -> vector<8x64xf32>
    %c0_76 = arith.constant 0 : index
    %c0_77 = arith.constant 0 : index
    %c7 = arith.constant 7 : index
    %c0_78 = arith.constant 0 : index
    %66 = vector.load %arg2[%c0_76, %c0_77, %c7, %c0_78] : memref<1x4x32x64xf32, #tpu.memory_space<vmem>>, vector<1x4x1x64xf32>
    %67 = vector.shape_cast %66 : vector<1x4x1x64xf32> to vector<4x64xf32>
    %c1_79 = arith.constant 1 : index
    %c0_80 = arith.constant 0 : index
    %c0_81 = arith.constant 0 : index
    %68 = vector.load %arg3[%c1_79, %c0_80, %c0_81] : memref<5x8x4xf32, #tpu.memory_space<vmem>>, vector<1x8x4xf32>
    %69 = vector.shape_cast %68 : vector<1x8x4xf32> to vector<8x4xf32>
    %cst_82 = arith.constant dense<0.000000e+00> : vector<8x64xf32>
    %70 = tpu.matmul %69, %67, %cst_82 {dimension_numbers = #tpu.dot_dimension_numbers<[1], [0], [0], [1], [0, 0, 1, 1], [], []>} : vector<8x4xf32>, vector<4x64xf32>, vector<8x64xf32> -> vector<8x64xf32>
    %71 = arith.addf %65, %70 : vector<8x64xf32>
    %c0_83 = arith.constant 0 : index
    %c0_84 = arith.constant 0 : index
    %c8 = arith.constant 8 : index
    %c0_85 = arith.constant 0 : index
    %72 = vector.load %arg2[%c0_83, %c0_84, %c8, %c0_85] : memref<1x4x32x64xf32, #tpu.memory_space<vmem>>, vector<1x4x1x64xf32>
    %73 = vector.shape_cast %72 : vector<1x4x1x64xf32> to vector<4x64xf32>
    %c2_86 = arith.constant 2 : index
    %c0_87 = arith.constant 0 : index
    %c0_88 = arith.constant 0 : index
    %74 = vector.load %arg3[%c2_86, %c0_87, %c0_88] : memref<5x8x4xf32, #tpu.memory_space<vmem>>, vector<1x8x4xf32>
    %75 = vector.shape_cast %74 : vector<1x8x4xf32> to vector<8x4xf32>
    %cst_89 = arith.constant dense<0.000000e+00> : vector<8x64xf32>
    %76 = tpu.matmul %75, %73, %cst_89 {dimension_numbers = #tpu.dot_dimension_numbers<[1], [0], [0], [1], [0, 0, 1, 1], [], []>} : vector<8x4xf32>, vector<4x64xf32>, vector<8x64xf32> -> vector<8x64xf32>
    %77 = arith.addf %71, %76 : vector<8x64xf32>
    %c0_90 = arith.constant 0 : index
    %c0_91 = arith.constant 0 : index
    %c9 = arith.constant 9 : index
    %c0_92 = arith.constant 0 : index
    %78 = vector.load %arg2[%c0_90, %c0_91, %c9, %c0_92] : memref<1x4x32x64xf32, #tpu.memory_space<vmem>>, vector<1x4x1x64xf32>
    %79 = vector.shape_cast %78 : vector<1x4x1x64xf32> to vector<4x64xf32>
    %c3_93 = arith.constant 3 : index
    %c0_94 = arith.constant 0 : index
    %c0_95 = arith.constant 0 : index
    %80 = vector.load %arg3[%c3_93, %c0_94, %c0_95] : memref<5x8x4xf32, #tpu.memory_space<vmem>>, vector<1x8x4xf32>
    %81 = vector.shape_cast %80 : vector<1x8x4xf32> to vector<8x4xf32>
    %cst_96 = arith.constant dense<0.000000e+00> : vector<8x64xf32>
    %82 = tpu.matmul %81, %79, %cst_96 {dimension_numbers = #tpu.dot_dimension_numbers<[1], [0], [0], [1], [0, 0, 1, 1], [], []>} : vector<8x4xf32>, vector<4x64xf32>, vector<8x64xf32> -> vector<8x64xf32>
    %83 = arith.addf %77, %82 : vector<8x64xf32>
    %c0_97 = arith.constant 0 : index
    %c0_98 = arith.constant 0 : index
    %c10 = arith.constant 10 : index
    %c0_99 = arith.constant 0 : index
    %84 = vector.load %arg2[%c0_97, %c0_98, %c10, %c0_99] : memref<1x4x32x64xf32, #tpu.memory_space<vmem>>, vector<1x4x1x64xf32>
    %85 = vector.shape_cast %84 : vector<1x4x1x64xf32> to vector<4x64xf32>
    %c4_100 = arith.constant 4 : index
    %c0_101 = arith.constant 0 : index
    %c0_102 = arith.constant 0 : index
    %86 = vector.load %arg3[%c4_100, %c0_101, %c0_102] : memref<5x8x4xf32, #tpu.memory_space<vmem>>, vector<1x8x4xf32>
    %87 = vector.shape_cast %86 : vector<1x8x4xf32> to vector<8x4xf32>
    %cst_103 = arith.constant dense<0.000000e+00> : vector<8x64xf32>
    %88 = tpu.matmul %87, %85, %cst_103 {dimension_numbers = #tpu.dot_dimension_numbers<[1], [0], [0], [1], [0, 0, 1, 1], [], []>} : vector<8x4xf32>, vector<4x64xf32>, vector<8x64xf32> -> vector<8x64xf32>
    %89 = arith.addf %83, %88 : vector<8x64xf32>
    %90 = vector.broadcast %0 : vector<8x1xf32> to vector<8x64xf32>
    %91 = arith.addf %89, %90 : vector<8x64xf32>
    %cst_104 = arith.constant 0.000000e+00 : f32
    %92 = vector.broadcast %cst_104 : f32 to vector<8x64xf32>
    %93 = arith.maximumf %91, %92 : vector<8x64xf32>
    %c0_105 = arith.constant 0 : index
    %c0_106 = arith.constant 0 : index
    %c2_107 = arith.constant 2 : index
    %c0_108 = arith.constant 0 : index
    %94 = vector.load %arg5[%c0_105, %c0_106, %c2_107, %c0_108] : memref<1x8x8x64xf32, #tpu.memory_space<vmem>>, vector<1x8x1x64xf32>
    %95 = vector.shape_cast %94 : vector<1x8x1x64xf32> to vector<8x64xf32>
    %96 = vector.shape_cast %93 : vector<8x64xf32> to vector<1x8x1x64xf32>
    tpu.vector_store %arg5[%c0_105, %c0_106, %c2_107, %c0_108], %96 {strides = array<i32>} : memref<1x8x8x64xf32, #tpu.memory_space<vmem>>, vector<1x8x1x64xf32>,
    %c0_109 = arith.constant 0 : index
    %c0_110 = arith.constant 0 : index
    %c10_111 = arith.constant 10 : index
    %c0_112 = arith.constant 0 : index
    %97 = vector.load %arg2[%c0_109, %c0_110, %c10_111, %c0_112] : memref<1x4x32x64xf32, #tpu.memory_space<vmem>>, vector<1x4x1x64xf32>
    %98 = vector.shape_cast %97 : vector<1x4x1x64xf32> to vector<4x64xf32>
    %c0_113 = arith.constant 0 : index
    %c0_114 = arith.constant 0 : index
    %c0_115 = arith.constant 0 : index
    %99 = vector.load %arg3[%c0_113, %c0_114, %c0_115] : memref<5x8x4xf32, #tpu.memory_space<vmem>>, vector<1x8x4xf32>
    %100 = vector.shape_cast %99 : vector<1x8x4xf32> to vector<8x4xf32>
    %cst_116 = arith.constant dense<0.000000e+00> : vector<8x64xf32>
    %101 = tpu.matmul %100, %98, %cst_116 {dimension_numbers = #tpu.dot_dimension_numbers<[1], [0], [0], [1], [0, 0, 1, 1], [], []>} : vector<8x4xf32>, vector<4x64xf32>, vector<8x64xf32> -> vector<8x64xf32>
    %c0_117 = arith.constant 0 : index
    %c0_118 = arith.constant 0 : index
    %c11 = arith.constant 11 : index
    %c0_119 = arith.constant 0 : index
    %102 = vector.load %arg2[%c0_117, %c0_118, %c11, %c0_119] : memref<1x4x32x64xf32, #tpu.memory_space<vmem>>, vector<1x4x1x64xf32>
    %103 = vector.shape_cast %102 : vector<1x4x1x64xf32> to vector<4x64xf32>
    %c1_120 = arith.constant 1 : index
    %c0_121 = arith.constant 0 : index
    %c0_122 = arith.constant 0 : index
    %104 = vector.load %arg3[%c1_120, %c0_121, %c0_122] : memref<5x8x4xf32, #tpu.memory_space<vmem>>, vector<1x8x4xf32>
    %105 = vector.shape_cast %104 : vector<1x8x4xf32> to vector<8x4xf32>
    %cst_123 = arith.constant dense<0.000000e+00> : vector<8x64xf32>
    %106 = tpu.matmul %105, %103, %cst_123 {dimension_numbers = #tpu.dot_dimension_numbers<[1], [0], [0], [1], [0, 0, 1, 1], [], []>} : vector<8x4xf32>, vector<4x64xf32>, vector<8x64xf32> -> vector<8x64xf32>
    %107 = arith.addf %101, %106 : vector<8x64xf32>
    %c0_124 = arith.constant 0 : index
    %c0_125 = arith.constant 0 : index
    %c12 = arith.constant 12 : index
    %c0_126 = arith.constant 0 : index
    %108 = vector.load %arg2[%c0_124, %c0_125, %c12, %c0_126] : memref<1x4x32x64xf32, #tpu.memory_space<vmem>>, vector<1x4x1x64xf32>
    %109 = vector.shape_cast %108 : vector<1x4x1x64xf32> to vector<4x64xf32>
    %c2_127 = arith.constant 2 : index
    %c0_128 = arith.constant 0 : index
    %c0_129 = arith.constant 0 : index
    %110 = vector.load %arg3[%c2_127, %c0_128, %c0_129] : memref<5x8x4xf32, #tpu.memory_space<vmem>>, vector<1x8x4xf32>
    %111 = vector.shape_cast %110 : vector<1x8x4xf32> to vector<8x4xf32>
    %cst_130 = arith.constant dense<0.000000e+00> : vector<8x64xf32>
    %112 = tpu.matmul %111, %109, %cst_130 {dimension_numbers = #tpu.dot_dimension_numbers<[1], [0], [0], [1], [0, 0, 1, 1], [], []>} : vector<8x4xf32>, vector<4x64xf32>, vector<8x64xf32> -> vector<8x64xf32>
    %113 = arith.addf %107, %112 : vector<8x64xf32>
    %c0_131 = arith.constant 0 : index
    %c0_132 = arith.constant 0 : index
    %c13 = arith.constant 13 : index
    %c0_133 = arith.constant 0 : index
    %114 = vector.load %arg2[%c0_131, %c0_132, %c13, %c0_133] : memref<1x4x32x64xf32, #tpu.memory_space<vmem>>, vector<1x4x1x64xf32>
    %115 = vector.shape_cast %114 : vector<1x4x1x64xf32> to vector<4x64xf32>
    %c3_134 = arith.constant 3 : index
    %c0_135 = arith.constant 0 : index
    %c0_136 = arith.constant 0 : index
    %116 = vector.load %arg3[%c3_134, %c0_135, %c0_136] : memref<5x8x4xf32, #tpu.memory_space<vmem>>, vector<1x8x4xf32>
    %117 = vector.shape_cast %116 : vector<1x8x4xf32> to vector<8x4xf32>
    %cst_137 = arith.constant dense<0.000000e+00> : vector<8x64xf32>
    %118 = tpu.matmul %117, %115, %cst_137 {dimension_numbers = #tpu.dot_dimension_numbers<[1], [0], [0], [1], [0, 0, 1, 1], [], []>} : vector<8x4xf32>, vector<4x64xf32>, vector<8x64xf32> -> vector<8x64xf32>
    %119 = arith.addf %113, %118 : vector<8x64xf32>
    %c0_138 = arith.constant 0 : index
    %c0_139 = arith.constant 0 : index
    %c14 = arith.constant 14 : index
    %c0_140 = arith.constant 0 : index
    %120 = vector.load %arg2[%c0_138, %c0_139, %c14, %c0_140] : memref<1x4x32x64xf32, #tpu.memory_space<vmem>>, vector<1x4x1x64xf32>
    %121 = vector.shape_cast %120 : vector<1x4x1x64xf32> to vector<4x64xf32>
    %c4_141 = arith.constant 4 : index
    %c0_142 = arith.constant 0 : index
    %c0_143 = arith.constant 0 : index
    %122 = vector.load %arg3[%c4_141, %c0_142, %c0_143] : memref<5x8x4xf32, #tpu.memory_space<vmem>>, vector<1x8x4xf32>
    %123 = vector.shape_cast %122 : vector<1x8x4xf32> to vector<8x4xf32>
    %cst_144 = arith.constant dense<0.000000e+00> : vector<8x64xf32>
    %124 = tpu.matmul %123, %121, %cst_144 {dimension_numbers = #tpu.dot_dimension_numbers<[1], [0], [0], [1], [0, 0, 1, 1], [], []>} : vector<8x4xf32>, vector<4x64xf32>, vector<8x64xf32> -> vector<8x64xf32>
    %125 = arith.addf %119, %124 : vector<8x64xf32>
    %126 = vector.broadcast %0 : vector<8x1xf32> to vector<8x64xf32>
    %127 = arith.addf %125, %126 : vector<8x64xf32>
    %cst_145 = arith.constant 0.000000e+00 : f32
    %128 = vector.broadcast %cst_145 : f32 to vector<8x64xf32>
    %129 = arith.maximumf %127, %128 : vector<8x64xf32>
    %c0_146 = arith.constant 0 : index
    %c0_147 = arith.constant 0 : index
    %c3_148 = arith.constant 3 : index
    %c0_149 = arith.constant 0 : index
    %130 = vector.load %arg5[%c0_146, %c0_147, %c3_148, %c0_149] : memref<1x8x8x64xf32, #tpu.memory_space<vmem>>, vector<1x8x1x64xf32>
    %131 = vector.shape_cast %130 : vector<1x8x1x64xf32> to vector<8x64xf32>
    %132 = vector.shape_cast %129 : vector<8x64xf32> to vector<1x8x1x64xf32>
    tpu.vector_store %arg5[%c0_146, %c0_147, %c3_148, %c0_149], %132 {strides = array<i32>} : memref<1x8x8x64xf32, #tpu.memory_space<vmem>>, vector<1x8x1x64xf32>,
    %c0_150 = arith.constant 0 : index
    %c0_151 = arith.constant 0 : index
    %c14_152 = arith.constant 14 : index
    %c0_153 = arith.constant 0 : index
    %133 = vector.load %arg2[%c0_150, %c0_151, %c14_152, %c0_153] : memref<1x4x32x64xf32, #tpu.memory_space<vmem>>, vector<1x4x1x64xf32>
    %134 = vector.shape_cast %133 : vector<1x4x1x64xf32> to vector<4x64xf32>
    %c0_154 = arith.constant 0 : index
    %c0_155 = arith.constant 0 : index
    %c0_156 = arith.constant 0 : index
    %135 = vector.load %arg3[%c0_154, %c0_155, %c0_156] : memref<5x8x4xf32, #tpu.memory_space<vmem>>, vector<1x8x4xf32>
    %136 = vector.shape_cast %135 : vector<1x8x4xf32> to vector<8x4xf32>
    %cst_157 = arith.constant dense<0.000000e+00> : vector<8x64xf32>
    %137 = tpu.matmul %136, %134, %cst_157 {dimension_numbers = #tpu.dot_dimension_numbers<[1], [0], [0], [1], [0, 0, 1, 1], [], []>} : vector<8x4xf32>, vector<4x64xf32>, vector<8x64xf32> -> vector<8x64xf32>
    %c0_158 = arith.constant 0 : index
    %c0_159 = arith.constant 0 : index
    %c15 = arith.constant 15 : index
    %c0_160 = arith.constant 0 : index
    %138 = vector.load %arg2[%c0_158, %c0_159, %c15, %c0_160] : memref<1x4x32x64xf32, #tpu.memory_space<vmem>>, vector<1x4x1x64xf32>
    %139 = vector.shape_cast %138 : vector<1x4x1x64xf32> to vector<4x64xf32>
    %c1_161 = arith.constant 1 : index
    %c0_162 = arith.constant 0 : index
    %c0_163 = arith.constant 0 : index
    %140 = vector.load %arg3[%c1_161, %c0_162, %c0_163] : memref<5x8x4xf32, #tpu.memory_space<vmem>>, vector<1x8x4xf32>
    %141 = vector.shape_cast %140 : vector<1x8x4xf32> to vector<8x4xf32>
    %cst_164 = arith.constant dense<0.000000e+00> : vector<8x64xf32>
    %142 = tpu.matmul %141, %139, %cst_164 {dimension_numbers = #tpu.dot_dimension_numbers<[1], [0], [0], [1], [0, 0, 1, 1], [], []>} : vector<8x4xf32>, vector<4x64xf32>, vector<8x64xf32> -> vector<8x64xf32>
    %143 = arith.addf %137, %142 : vector<8x64xf32>
    %c0_165 = arith.constant 0 : index
    %c0_166 = arith.constant 0 : index
    %c16 = arith.constant 16 : index
    %c0_167 = arith.constant 0 : index
    %144 = vector.load %arg2[%c0_165, %c0_166, %c16, %c0_167] : memref<1x4x32x64xf32, #tpu.memory_space<vmem>>, vector<1x4x1x64xf32>
    %145 = vector.shape_cast %144 : vector<1x4x1x64xf32> to vector<4x64xf32>
    %c2_168 = arith.constant 2 : index
    %c0_169 = arith.constant 0 : index
    %c0_170 = arith.constant 0 : index
    %146 = vector.load %arg3[%c2_168, %c0_169, %c0_170] : memref<5x8x4xf32, #tpu.memory_space<vmem>>, vector<1x8x4xf32>
    %147 = vector.shape_cast %146 : vector<1x8x4xf32> to vector<8x4xf32>
    %cst_171 = arith.constant dense<0.000000e+00> : vector<8x64xf32>
    %148 = tpu.matmul %147, %145, %cst_171 {dimension_numbers = #tpu.dot_dimension_numbers<[1], [0], [0], [1], [0, 0, 1, 1], [], []>} : vector<8x4xf32>, vector<4x64xf32>, vector<8x64xf32> -> vector<8x64xf32>
    %149 = arith.addf %143, %148 : vector<8x64xf32>
    %c0_172 = arith.constant 0 : index
    %c0_173 = arith.constant 0 : index
    %c17 = arith.constant 17 : index
    %c0_174 = arith.constant 0 : index
    %150 = vector.load %arg2[%c0_172, %c0_173, %c17, %c0_174] : memref<1x4x32x64xf32, #tpu.memory_space<vmem>>, vector<1x4x1x64xf32>
    %151 = vector.shape_cast %150 : vector<1x4x1x64xf32> to vector<4x64xf32>
    %c3_175 = arith.constant 3 : index
    %c0_176 = arith.constant 0 : index
    %c0_177 = arith.constant 0 : index
    %152 = vector.load %arg3[%c3_175, %c0_176, %c0_177] : memref<5x8x4xf32, #tpu.memory_space<vmem>>, vector<1x8x4xf32>
    %153 = vector.shape_cast %152 : vector<1x8x4xf32> to vector<8x4xf32>
    %cst_178 = arith.constant dense<0.000000e+00> : vector<8x64xf32>
    %154 = tpu.matmul %153, %151, %cst_178 {dimension_numbers = #tpu.dot_dimension_numbers<[1], [0], [0], [1], [0, 0, 1, 1], [], []>} : vector<8x4xf32>, vector<4x64xf32>, vector<8x64xf32> -> vector<8x64xf32>
    %155 = arith.addf %149, %154 : vector<8x64xf32>
    %c0_179 = arith.constant 0 : index
    %c0_180 = arith.constant 0 : index
    %c18 = arith.constant 18 : index
    %c0_181 = arith.constant 0 : index
    %156 = vector.load %arg2[%c0_179, %c0_180, %c18, %c0_181] : memref<1x4x32x64xf32, #tpu.memory_space<vmem>>, vector<1x4x1x64xf32>
    %157 = vector.shape_cast %156 : vector<1x4x1x64xf32> to vector<4x64xf32>
    %c4_182 = arith.constant 4 : index
    %c0_183 = arith.constant 0 : index
    %c0_184 = arith.constant 0 : index
    %158 = vector.load %arg3[%c4_182, %c0_183, %c0_184] : memref<5x8x4xf32, #tpu.memory_space<vmem>>, vector<1x8x4xf32>
    %159 = vector.shape_cast %158 : vector<1x8x4xf32> to vector<8x4xf32>
    %cst_185 = arith.constant dense<0.000000e+00> : vector<8x64xf32>
    %160 = tpu.matmul %159, %157, %cst_185 {dimension_numbers = #tpu.dot_dimension_numbers<[1], [0], [0], [1], [0, 0, 1, 1], [], []>} : vector<8x4xf32>, vector<4x64xf32>, vector<8x64xf32> -> vector<8x64xf32>
    %161 = arith.addf %155, %160 : vector<8x64xf32>
    %162 = vector.broadcast %0 : vector<8x1xf32> to vector<8x64xf32>
    %163 = arith.addf %161, %162 : vector<8x64xf32>
    %cst_186 = arith.constant 0.000000e+00 : f32
    %164 = vector.broadcast %cst_186 : f32 to vector<8x64xf32>
    %165 = arith.maximumf %163, %164 : vector<8x64xf32>
    %c0_187 = arith.constant 0 : index
    %c0_188 = arith.constant 0 : index
    %c4_189 = arith.constant 4 : index
    %c0_190 = arith.constant 0 : index
    %166 = vector.load %arg5[%c0_187, %c0_188, %c4_189, %c0_190] : memref<1x8x8x64xf32, #tpu.memory_space<vmem>>, vector<1x8x1x64xf32>
    %167 = vector.shape_cast %166 : vector<1x8x1x64xf32> to vector<8x64xf32>
    %168 = vector.shape_cast %165 : vector<8x64xf32> to vector<1x8x1x64xf32>
    tpu.vector_store %arg5[%c0_187, %c0_188, %c4_189, %c0_190], %168 {strides = array<i32>} : memref<1x8x8x64xf32, #tpu.memory_space<vmem>>, vector<1x8x1x64xf32>,
    %c0_191 = arith.constant 0 : index
    %c0_192 = arith.constant 0 : index
    %c18_193 = arith.constant 18 : index
    %c0_194 = arith.constant 0 : index
    %169 = vector.load %arg2[%c0_191, %c0_192, %c18_193, %c0_194] : memref<1x4x32x64xf32, #tpu.memory_space<vmem>>, vector<1x4x1x64xf32>
    %170 = vector.shape_cast %169 : vector<1x4x1x64xf32> to vector<4x64xf32>
    %c0_195 = arith.constant 0 : index
    %c0_196 = arith.constant 0 : index
    %c0_197 = arith.constant 0 : index
    %171 = vector.load %arg3[%c0_195, %c0_196, %c0_197] : memref<5x8x4xf32, #tpu.memory_space<vmem>>, vector<1x8x4xf32>
    %172 = vector.shape_cast %171 : vector<1x8x4xf32> to vector<8x4xf32>
    %cst_198 = arith.constant dense<0.000000e+00> : vector<8x64xf32>
    %173 = tpu.matmul %172, %170, %cst_198 {dimension_numbers = #tpu.dot_dimension_numbers<[1], [0], [0], [1], [0, 0, 1, 1], [], []>} : vector<8x4xf32>, vector<4x64xf32>, vector<8x64xf32> -> vector<8x64xf32>
    %c0_199 = arith.constant 0 : index
    %c0_200 = arith.constant 0 : index
    %c19 = arith.constant 19 : index
    %c0_201 = arith.constant 0 : index
    %174 = vector.load %arg2[%c0_199, %c0_200, %c19, %c0_201] : memref<1x4x32x64xf32, #tpu.memory_space<vmem>>, vector<1x4x1x64xf32>
    %175 = vector.shape_cast %174 : vector<1x4x1x64xf32> to vector<4x64xf32>
    %c1_202 = arith.constant 1 : index
    %c0_203 = arith.constant 0 : index
    %c0_204 = arith.constant 0 : index
    %176 = vector.load %arg3[%c1_202, %c0_203, %c0_204] : memref<5x8x4xf32, #tpu.memory_space<vmem>>, vector<1x8x4xf32>
    %177 = vector.shape_cast %176 : vector<1x8x4xf32> to vector<8x4xf32>
    %cst_205 = arith.constant dense<0.000000e+00> : vector<8x64xf32>
    %178 = tpu.matmul %177, %175, %cst_205 {dimension_numbers = #tpu.dot_dimension_numbers<[1], [0], [0], [1], [0, 0, 1, 1], [], []>} : vector<8x4xf32>, vector<4x64xf32>, vector<8x64xf32> -> vector<8x64xf32>
    %179 = arith.addf %173, %178 : vector<8x64xf32>
    %c0_206 = arith.constant 0 : index
    %c0_207 = arith.constant 0 : index
    %c20 = arith.constant 20 : index
    %c0_208 = arith.constant 0 : index
    %180 = vector.load %arg2[%c0_206, %c0_207, %c20, %c0_208] : memref<1x4x32x64xf32, #tpu.memory_space<vmem>>, vector<1x4x1x64xf32>
    %181 = vector.shape_cast %180 : vector<1x4x1x64xf32> to vector<4x64xf32>
    %c2_209 = arith.constant 2 : index
    %c0_210 = arith.constant 0 : index
    %c0_211 = arith.constant 0 : index
    %182 = vector.load %arg3[%c2_209, %c0_210, %c0_211] : memref<5x8x4xf32, #tpu.memory_space<vmem>>, vector<1x8x4xf32>
    %183 = vector.shape_cast %182 : vector<1x8x4xf32> to vector<8x4xf32>
    %cst_212 = arith.constant dense<0.000000e+00> : vector<8x64xf32>
    %184 = tpu.matmul %183, %181, %cst_212 {dimension_numbers = #tpu.dot_dimension_numbers<[1], [0], [0], [1], [0, 0, 1, 1], [], []>} : vector<8x4xf32>, vector<4x64xf32>, vector<8x64xf32> -> vector<8x64xf32>
    %185 = arith.addf %179, %184 : vector<8x64xf32>
    %c0_213 = arith.constant 0 : index
    %c0_214 = arith.constant 0 : index
    %c21 = arith.constant 21 : index
    %c0_215 = arith.constant 0 : index
    %186 = vector.load %arg2[%c0_213, %c0_214, %c21, %c0_215] : memref<1x4x32x64xf32, #tpu.memory_space<vmem>>, vector<1x4x1x64xf32>
    %187 = vector.shape_cast %186 : vector<1x4x1x64xf32> to vector<4x64xf32>
    %c3_216 = arith.constant 3 : index
    %c0_217 = arith.constant 0 : index
    %c0_218 = arith.constant 0 : index
    %188 = vector.load %arg3[%c3_216, %c0_217, %c0_218] : memref<5x8x4xf32, #tpu.memory_space<vmem>>, vector<1x8x4xf32>
    %189 = vector.shape_cast %188 : vector<1x8x4xf32> to vector<8x4xf32>
    %cst_219 = arith.constant dense<0.000000e+00> : vector<8x64xf32>
    %190 = tpu.matmul %189, %187, %cst_219 {dimension_numbers = #tpu.dot_dimension_numbers<[1], [0], [0], [1], [0, 0, 1, 1], [], []>} : vector<8x4xf32>, vector<4x64xf32>, vector<8x64xf32> -> vector<8x64xf32>
    %191 = arith.addf %185, %190 : vector<8x64xf32>
    %c0_220 = arith.constant 0 : index
    %c0_221 = arith.constant 0 : index
    %c22 = arith.constant 22 : index
    %c0_222 = arith.constant 0 : index
    %192 = vector.load %arg2[%c0_220, %c0_221, %c22, %c0_222] : memref<1x4x32x64xf32, #tpu.memory_space<vmem>>, vector<1x4x1x64xf32>
    %193 = vector.shape_cast %192 : vector<1x4x1x64xf32> to vector<4x64xf32>
    %c4_223 = arith.constant 4 : index
    %c0_224 = arith.constant 0 : index
    %c0_225 = arith.constant 0 : index
    %194 = vector.load %arg3[%c4_223, %c0_224, %c0_225] : memref<5x8x4xf32, #tpu.memory_space<vmem>>, vector<1x8x4xf32>
    %195 = vector.shape_cast %194 : vector<1x8x4xf32> to vector<8x4xf32>
    %cst_226 = arith.constant dense<0.000000e+00> : vector<8x64xf32>
    %196 = tpu.matmul %195, %193, %cst_226 {dimension_numbers = #tpu.dot_dimension_numbers<[1], [0], [0], [1], [0, 0, 1, 1], [], []>} : vector<8x4xf32>, vector<4x64xf32>, vector<8x64xf32> -> vector<8x64xf32>
    %197 = arith.addf %191, %196 : vector<8x64xf32>
    %198 = vector.broadcast %0 : vector<8x1xf32> to vector<8x64xf32>
    %199 = arith.addf %197, %198 : vector<8x64xf32>
    %cst_227 = arith.constant 0.000000e+00 : f32
    %200 = vector.broadcast %cst_227 : f32 to vector<8x64xf32>
    %201 = arith.maximumf %199, %200 : vector<8x64xf32>
    %c0_228 = arith.constant 0 : index
    %c0_229 = arith.constant 0 : index
    %c5_230 = arith.constant 5 : index
    %c0_231 = arith.constant 0 : index
    %202 = vector.load %arg5[%c0_228, %c0_229, %c5_230, %c0_231] : memref<1x8x8x64xf32, #tpu.memory_space<vmem>>, vector<1x8x1x64xf32>
    %203 = vector.shape_cast %202 : vector<1x8x1x64xf32> to vector<8x64xf32>
    %204 = vector.shape_cast %201 : vector<8x64xf32> to vector<1x8x1x64xf32>
    tpu.vector_store %arg5[%c0_228, %c0_229, %c5_230, %c0_231], %204 {strides = array<i32>} : memref<1x8x8x64xf32, #tpu.memory_space<vmem>>, vector<1x8x1x64xf32>,
    %c0_232 = arith.constant 0 : index
    %c0_233 = arith.constant 0 : index
    %c22_234 = arith.constant 22 : index
    %c0_235 = arith.constant 0 : index
    %205 = vector.load %arg2[%c0_232, %c0_233, %c22_234, %c0_235] : memref<1x4x32x64xf32, #tpu.memory_space<vmem>>, vector<1x4x1x64xf32>
    %206 = vector.shape_cast %205 : vector<1x4x1x64xf32> to vector<4x64xf32>
    %c0_236 = arith.constant 0 : index
    %c0_237 = arith.constant 0 : index
    %c0_238 = arith.constant 0 : index
    %207 = vector.load %arg3[%c0_236, %c0_237, %c0_238] : memref<5x8x4xf32, #tpu.memory_space<vmem>>, vector<1x8x4xf32>
    %208 = vector.shape_cast %207 : vector<1x8x4xf32> to vector<8x4xf32>
    %cst_239 = arith.constant dense<0.000000e+00> : vector<8x64xf32>
    %209 = tpu.matmul %208, %206, %cst_239 {dimension_numbers = #tpu.dot_dimension_numbers<[1], [0], [0], [1], [0, 0, 1, 1], [], []>} : vector<8x4xf32>, vector<4x64xf32>, vector<8x64xf32> -> vector<8x64xf32>
    %c0_240 = arith.constant 0 : index
    %c0_241 = arith.constant 0 : index
    %c23 = arith.constant 23 : index
    %c0_242 = arith.constant 0 : index
    %210 = vector.load %arg2[%c0_240, %c0_241, %c23, %c0_242] : memref<1x4x32x64xf32, #tpu.memory_space<vmem>>, vector<1x4x1x64xf32>
    %211 = vector.shape_cast %210 : vector<1x4x1x64xf32> to vector<4x64xf32>
    %c1_243 = arith.constant 1 : index
    %c0_244 = arith.constant 0 : index
    %c0_245 = arith.constant 0 : index
    %212 = vector.load %arg3[%c1_243, %c0_244, %c0_245] : memref<5x8x4xf32, #tpu.memory_space<vmem>>, vector<1x8x4xf32>
    %213 = vector.shape_cast %212 : vector<1x8x4xf32> to vector<8x4xf32>
    %cst_246 = arith.constant dense<0.000000e+00> : vector<8x64xf32>
    %214 = tpu.matmul %213, %211, %cst_246 {dimension_numbers = #tpu.dot_dimension_numbers<[1], [0], [0], [1], [0, 0, 1, 1], [], []>} : vector<8x4xf32>, vector<4x64xf32>, vector<8x64xf32> -> vector<8x64xf32>
    %215 = arith.addf %209, %214 : vector<8x64xf32>
    %c0_247 = arith.constant 0 : index
    %c0_248 = arith.constant 0 : index
    %c24 = arith.constant 24 : index
    %c0_249 = arith.constant 0 : index
    %216 = vector.load %arg2[%c0_247, %c0_248, %c24, %c0_249] : memref<1x4x32x64xf32, #tpu.memory_space<vmem>>, vector<1x4x1x64xf32>
    %217 = vector.shape_cast %216 : vector<1x4x1x64xf32> to vector<4x64xf32>
    %c2_250 = arith.constant 2 : index
    %c0_251 = arith.constant 0 : index
    %c0_252 = arith.constant 0 : index
    %218 = vector.load %arg3[%c2_250, %c0_251, %c0_252] : memref<5x8x4xf32, #tpu.memory_space<vmem>>, vector<1x8x4xf32>
    %219 = vector.shape_cast %218 : vector<1x8x4xf32> to vector<8x4xf32>
    %cst_253 = arith.constant dense<0.000000e+00> : vector<8x64xf32>
    %220 = tpu.matmul %219, %217, %cst_253 {dimension_numbers = #tpu.dot_dimension_numbers<[1], [0], [0], [1], [0, 0, 1, 1], [], []>} : vector<8x4xf32>, vector<4x64xf32>, vector<8x64xf32> -> vector<8x64xf32>
    %221 = arith.addf %215, %220 : vector<8x64xf32>
    %c0_254 = arith.constant 0 : index
    %c0_255 = arith.constant 0 : index
    %c25 = arith.constant 25 : index
    %c0_256 = arith.constant 0 : index
    %222 = vector.load %arg2[%c0_254, %c0_255, %c25, %c0_256] : memref<1x4x32x64xf32, #tpu.memory_space<vmem>>, vector<1x4x1x64xf32>
    %223 = vector.shape_cast %222 : vector<1x4x1x64xf32> to vector<4x64xf32>
    %c3_257 = arith.constant 3 : index
    %c0_258 = arith.constant 0 : index
    %c0_259 = arith.constant 0 : index
    %224 = vector.load %arg3[%c3_257, %c0_258, %c0_259] : memref<5x8x4xf32, #tpu.memory_space<vmem>>, vector<1x8x4xf32>
    %225 = vector.shape_cast %224 : vector<1x8x4xf32> to vector<8x4xf32>
    %cst_260 = arith.constant dense<0.000000e+00> : vector<8x64xf32>
    %226 = tpu.matmul %225, %223, %cst_260 {dimension_numbers = #tpu.dot_dimension_numbers<[1], [0], [0], [1], [0, 0, 1, 1], [], []>} : vector<8x4xf32>, vector<4x64xf32>, vector<8x64xf32> -> vector<8x64xf32>
    %227 = arith.addf %221, %226 : vector<8x64xf32>
    %c0_261 = arith.constant 0 : index
    %c0_262 = arith.constant 0 : index
    %c26 = arith.constant 26 : index
    %c0_263 = arith.constant 0 : index
    %228 = vector.load %arg2[%c0_261, %c0_262, %c26, %c0_263] : memref<1x4x32x64xf32, #tpu.memory_space<vmem>>, vector<1x4x1x64xf32>
    %229 = vector.shape_cast %228 : vector<1x4x1x64xf32> to vector<4x64xf32>
    %c4_264 = arith.constant 4 : index
    %c0_265 = arith.constant 0 : index
    %c0_266 = arith.constant 0 : index
    %230 = vector.load %arg3[%c4_264, %c0_265, %c0_266] : memref<5x8x4xf32, #tpu.memory_space<vmem>>, vector<1x8x4xf32>
    %231 = vector.shape_cast %230 : vector<1x8x4xf32> to vector<8x4xf32>
    %cst_267 = arith.constant dense<0.000000e+00> : vector<8x64xf32>
    %232 = tpu.matmul %231, %229, %cst_267 {dimension_numbers = #tpu.dot_dimension_numbers<[1], [0], [0], [1], [0, 0, 1, 1], [], []>} : vector<8x4xf32>, vector<4x64xf32>, vector<8x64xf32> -> vector<8x64xf32>
    %233 = arith.addf %227, %232 : vector<8x64xf32>
    %234 = vector.broadcast %0 : vector<8x1xf32> to vector<8x64xf32>
    %235 = arith.addf %233, %234 : vector<8x64xf32>
    %cst_268 = arith.constant 0.000000e+00 : f32
    %236 = vector.broadcast %cst_268 : f32 to vector<8x64xf32>
    %237 = arith.maximumf %235, %236 : vector<8x64xf32>
    %c0_269 = arith.constant 0 : index
    %c0_270 = arith.constant 0 : index
    %c6_271 = arith.constant 6 : index
    %c0_272 = arith.constant 0 : index
    %238 = vector.load %arg5[%c0_269, %c0_270, %c6_271, %c0_272] : memref<1x8x8x64xf32, #tpu.memory_space<vmem>>, vector<1x8x1x64xf32>
    %239 = vector.shape_cast %238 : vector<1x8x1x64xf32> to vector<8x64xf32>
    %240 = vector.shape_cast %237 : vector<8x64xf32> to vector<1x8x1x64xf32>
    tpu.vector_store %arg5[%c0_269, %c0_270, %c6_271, %c0_272], %240 {strides = array<i32>} : memref<1x8x8x64xf32, #tpu.memory_space<vmem>>, vector<1x8x1x64xf32>,
    %c0_273 = arith.constant 0 : index
    %c0_274 = arith.constant 0 : index
    %c26_275 = arith.constant 26 : index
    %c0_276 = arith.constant 0 : index
    %241 = vector.load %arg2[%c0_273, %c0_274, %c26_275, %c0_276] : memref<1x4x32x64xf32, #tpu.memory_space<vmem>>, vector<1x4x1x64xf32>
    %242 = vector.shape_cast %241 : vector<1x4x1x64xf32> to vector<4x64xf32>
    %c0_277 = arith.constant 0 : index
    %c0_278 = arith.constant 0 : index
    %c0_279 = arith.constant 0 : index
    %243 = vector.load %arg3[%c0_277, %c0_278, %c0_279] : memref<5x8x4xf32, #tpu.memory_space<vmem>>, vector<1x8x4xf32>
    %244 = vector.shape_cast %243 : vector<1x8x4xf32> to vector<8x4xf32>
    %cst_280 = arith.constant dense<0.000000e+00> : vector<8x64xf32>
    %245 = tpu.matmul %244, %242, %cst_280 {dimension_numbers = #tpu.dot_dimension_numbers<[1], [0], [0], [1], [0, 0, 1, 1], [], []>} : vector<8x4xf32>, vector<4x64xf32>, vector<8x64xf32> -> vector<8x64xf32>
    %c0_281 = arith.constant 0 : index
    %c0_282 = arith.constant 0 : index
    %c27 = arith.constant 27 : index
    %c0_283 = arith.constant 0 : index
    %246 = vector.load %arg2[%c0_281, %c0_282, %c27, %c0_283] : memref<1x4x32x64xf32, #tpu.memory_space<vmem>>, vector<1x4x1x64xf32>
    %247 = vector.shape_cast %246 : vector<1x4x1x64xf32> to vector<4x64xf32>
    %c1_284 = arith.constant 1 : index
    %c0_285 = arith.constant 0 : index
    %c0_286 = arith.constant 0 : index
    %248 = vector.load %arg3[%c1_284, %c0_285, %c0_286] : memref<5x8x4xf32, #tpu.memory_space<vmem>>, vector<1x8x4xf32>
    %249 = vector.shape_cast %248 : vector<1x8x4xf32> to vector<8x4xf32>
    %cst_287 = arith.constant dense<0.000000e+00> : vector<8x64xf32>
    %250 = tpu.matmul %249, %247, %cst_287 {dimension_numbers = #tpu.dot_dimension_numbers<[1], [0], [0], [1], [0, 0, 1, 1], [], []>} : vector<8x4xf32>, vector<4x64xf32>, vector<8x64xf32> -> vector<8x64xf32>
    %251 = arith.addf %245, %250 : vector<8x64xf32>
    %c0_288 = arith.constant 0 : index
    %c0_289 = arith.constant 0 : index
    %c28 = arith.constant 28 : index
    %c0_290 = arith.constant 0 : index
    %252 = vector.load %arg2[%c0_288, %c0_289, %c28, %c0_290] : memref<1x4x32x64xf32, #tpu.memory_space<vmem>>, vector<1x4x1x64xf32>
    %253 = vector.shape_cast %252 : vector<1x4x1x64xf32> to vector<4x64xf32>
    %c2_291 = arith.constant 2 : index
    %c0_292 = arith.constant 0 : index
    %c0_293 = arith.constant 0 : index
    %254 = vector.load %arg3[%c2_291, %c0_292, %c0_293] : memref<5x8x4xf32, #tpu.memory_space<vmem>>, vector<1x8x4xf32>
    %255 = vector.shape_cast %254 : vector<1x8x4xf32> to vector<8x4xf32>
    %cst_294 = arith.constant dense<0.000000e+00> : vector<8x64xf32>
    %256 = tpu.matmul %255, %253, %cst_294 {dimension_numbers = #tpu.dot_dimension_numbers<[1], [0], [0], [1], [0, 0, 1, 1], [], []>} : vector<8x4xf32>, vector<4x64xf32>, vector<8x64xf32> -> vector<8x64xf32>
    %257 = arith.addf %251, %256 : vector<8x64xf32>
    %c0_295 = arith.constant 0 : index
    %c0_296 = arith.constant 0 : index
    %c29 = arith.constant 29 : index
    %c0_297 = arith.constant 0 : index
    %258 = vector.load %arg2[%c0_295, %c0_296, %c29, %c0_297] : memref<1x4x32x64xf32, #tpu.memory_space<vmem>>, vector<1x4x1x64xf32>
    %259 = vector.shape_cast %258 : vector<1x4x1x64xf32> to vector<4x64xf32>
    %c3_298 = arith.constant 3 : index
    %c0_299 = arith.constant 0 : index
    %c0_300 = arith.constant 0 : index
    %260 = vector.load %arg3[%c3_298, %c0_299, %c0_300] : memref<5x8x4xf32, #tpu.memory_space<vmem>>, vector<1x8x4xf32>
    %261 = vector.shape_cast %260 : vector<1x8x4xf32> to vector<8x4xf32>
    %cst_301 = arith.constant dense<0.000000e+00> : vector<8x64xf32>
    %262 = tpu.matmul %261, %259, %cst_301 {dimension_numbers = #tpu.dot_dimension_numbers<[1], [0], [0], [1], [0, 0, 1, 1], [], []>} : vector<8x4xf32>, vector<4x64xf32>, vector<8x64xf32> -> vector<8x64xf32>
    %263 = arith.addf %257, %262 : vector<8x64xf32>
    %c0_302 = arith.constant 0 : index
    %c0_303 = arith.constant 0 : index
    %c30 = arith.constant 30 : index
    %c0_304 = arith.constant 0 : index
    %264 = vector.load %arg2[%c0_302, %c0_303, %c30, %c0_304] : memref<1x4x32x64xf32, #tpu.memory_space<vmem>>, vector<1x4x1x64xf32>
    %265 = vector.shape_cast %264 : vector<1x4x1x64xf32> to vector<4x64xf32>
    %c4_305 = arith.constant 4 : index
    %c0_306 = arith.constant 0 : index
    %c0_307 = arith.constant 0 : index
    %266 = vector.load %arg3[%c4_305, %c0_306, %c0_307] : memref<5x8x4xf32, #tpu.memory_space<vmem>>, vector<1x8x4xf32>
    %267 = vector.shape_cast %266 : vector<1x8x4xf32> to vector<8x4xf32>
    %cst_308 = arith.constant dense<0.000000e+00> : vector<8x64xf32>
    %268 = tpu.matmul %267, %265, %cst_308 {dimension_numbers = #tpu.dot_dimension_numbers<[1], [0], [0], [1], [0, 0, 1, 1], [], []>} : vector<8x4xf32>, vector<4x64xf32>, vector<8x64xf32> -> vector<8x64xf32>
    %269 = arith.addf %263, %268 : vector<8x64xf32>
    %270 = vector.broadcast %0 : vector<8x1xf32> to vector<8x64xf32>
    %271 = arith.addf %269, %270 : vector<8x64xf32>
    %cst_309 = arith.constant 0.000000e+00 : f32
    %272 = vector.broadcast %cst_309 : f32 to vector<8x64xf32>
    %273 = arith.maximumf %271, %272 : vector<8x64xf32>
    %c0_310 = arith.constant 0 : index
    %c0_311 = arith.constant 0 : index
    %c7_312 = arith.constant 7 : index
    %c0_313 = arith.constant 0 : index
    %274 = vector.load %arg5[%c0_310, %c0_311, %c7_312, %c0_313] : memref<1x8x8x64xf32, #tpu.memory_space<vmem>>, vector<1x8x1x64xf32>
    %275 = vector.shape_cast %274 : vector<1x8x1x64xf32> to vector<8x64xf32>
    %276 = vector.shape_cast %273 : vector<8x64xf32> to vector<1x8x1x64xf32>
    tpu.vector_store %arg5[%c0_310, %c0_311, %c7_312, %c0_313], %276 {strides = array<i32>} : memref<1x8x8x64xf32, #tpu.memory_space<vmem>>, vector<1x8x1x64xf32>,
    return
  }
  func.func @transform_0(%arg0: i32, %arg1: i32) -> (i32, i32, i32, i32) {
    %c0_i32 = arith.constant 0 : i32
    %c0_i32_0 = arith.constant 0 : i32
    %c0_i32_1 = arith.constant 0 : i32
    return %arg0, %c0_i32, %c0_i32_0, %arg1 : i32, i32, i32, i32
  }
  func.func @transform_1(%arg0: i32, %arg1: i32) -> (i32, i32, i32) {
    %c0_i32 = arith.constant 0 : i32
    %c0_i32_0 = arith.constant 0 : i32
    %c0_i32_1 = arith.constant 0 : i32
    %c0_i32_2 = arith.constant 0 : i32
    return %c0_i32, %c0_i32_0, %c0_i32_1 : i32, i32, i32
  }
  func.func @transform_2(%arg0: i32, %arg1: i32) -> (i32, i32) {
    %c0_i32 = arith.constant 0 : i32
    %c0_i32_0 = arith.constant 0 : i32
    %c0_i32_1 = arith.constant 0 : i32
    return %c0_i32, %c0_i32_0 : i32, i32
  }
  func.func @transform_3(%arg0: i32, %arg1: i32) -> (i32, i32, i32, i32) {
    %c0_i32 = arith.constant 0 : i32
    %c0_i32_0 = arith.constant 0 : i32
    %c0_i32_1 = arith.constant 0 : i32
    return %arg0, %c0_i32, %c0_i32_0, %arg1 : i32, i32, i32, i32
  }
}

</mosaic_0001>

<llo_original>
// kernel: fuse_fast_to_slow.1
$region0: #{fuse_fast_to_slow.1}
  #allocation0 [shape = 'u32[]', space=smem, size = 0x4, offset = 0x4, fixed_abs, tag = 'smem constant byte address 0x4 - core index']
  #allocation1 [shape = 'u32[144,128]{1,0:T(1,128)}', space=vmem, size = 0x12000, scoped, tag = 'internal scratch']
  %s0 = inlined_call_operand.vmem [shape: f32[2,4,32,64], index: 0, kind: input, shape index: {}]
  %s1 = inlined_call_operand.vmem [shape: f32[5,8,4], index: 1, kind: input, shape index: {}]
  %s2 = inlined_call_operand.vmem [shape: f32[8,1], index: 2, kind: input, shape index: {}]
  %s3 = inlined_call_operand.vmem [shape: f32[2,8,8,64], index: 3, kind: output, shape index: {}]
  %s4 = sld [smem:[#allocation0]]
  $region45: #{fuse_fast_to_slow.1} parent=0
    _
  %s6 = ssub.s32 1, %s4
  %s7 = scalar_select 0, %s6, %s4
  loop: start=0, step=1, limit=4
  $region2: #{fuse_fast_to_slow.1} parent=0 // loop_pre_header
    _
  $region3: #{fuse_fast_to_slow.1} parent=0 // loop_header
    %s9 = sphi 0, %s13
    %p10 = scmp.ge.s32.totalorder %s9, 4
    %s16 = sphi 0, %s28
    %s17 = sphi 0, %s24
    %s18 = sphi 0, %s16
    %s19 = sphi 0, %s17
    %s20 = sphi 0, %s18
    %s21 = sphi 0, %s19
    %s33 = sphi 0, %s35
    %s36 = sphi 0, %s33
    %s37 = sphi 0, %s36
    %s53 = sphi 0, %s37
    %s57 = sphi 0, %s57
    %s59 = sphi 0, %s57
    %s60 = sphi 0, %s59
    %s74 = sphi 0, %s60
    %s78 = sphi 0, %s78
    %s80 = sphi 0, %s78
    %s81 = sphi 0, %s80
    %s95 = sphi 0, %s81
    %s103 = sphi 0, %s105
    %s106 = sphi 0, %s103
    %s107 = sphi 0, %s106
    %s123 = sphi 0, %s107
  $region4: #{fuse_fast_to_slow.1} parent=0 // loop_header_branch
    %12 = sbr.rel (%p10) target = $region8
  $region5: #{fuse_fast_to_slow.1} parent=0 // loop_body
    %s14 = ssub.s32 %s9, 1
    %s15 = ssub.s32 %s9, 2
    %s22 = sadd.s32 1, %s17
    %p23 = scmp.ge.s32.totalorder %s22, 1
    %s24 = scalar_select %p23, 0, %s22
    %s25 = sadd.s32 1, %s16
    %s26 = scalar_select %p23, %s25, %s16
    %p27 = scmp.ge.s32.totalorder %s26, 2
    %s28 = scalar_select %p27, 0, %s26
    %s29 = ssub.s32 %s16, %s28
    %s30 = ssub.s32 %s17, %s24
    %s31 = sor.u32 %s29, %s30
    %p32 = scmp.eq.s32.totalorder %s31, 0
    %s34 = sadd.s32 %s33, 1
    %s35 = scalar_select %p32, %s33, %s34
    %p38 = pneg %p32
    %p39 = scmp.eq.s32.totalorder %s9, 1
    %p40 = por %p38, %p39
    %p41 = scmp.ne.s32.totalorder %s33, %s36
    %p42 = scmp.eq.s32.totalorder %s9, 0
    %p43 = por %p41, %p42
    %p44 = scmp.ne.s32.totalorder %s33, %s36
    %p45 = scmp.eq.s32.totalorder %s14, 1
    %p46 = por %p44, %p45
    %p47 = scmp.ne.s32.totalorder %s36, %s37
    %p48 = scmp.eq.s32.totalorder %s14, 0
    %p49 = por %p47, %p48
    %p50 = scmp.ne.s32.totalorder %s36, %s37
    %p51 = scmp.eq.s32.totalorder %s15, 1
    %p52 = por %p50, %p51
    %p54 = scmp.ne.s32.totalorder %s37, %s53
    %p55 = scmp.eq.s32.totalorder %s15, 0
    %p56 = por %p54, %p55
    %s58 = sadd.s32 %s57, 1
    %p61 = scmp.eq.s32.totalorder %s9, 1
    %p62 = scmp.ne.s32.totalorder %s57, %s59
    %p63 = scmp.eq.s32.totalorder %s9, 0
    %p64 = por %p62, %p63
    %p65 = scmp.ne.s32.totalorder %s57, %s59
    %p66 = scmp.eq.s32.totalorder %s14, 1
    %p67 = por %p65, %p66
    %p68 = scmp.ne.s32.totalorder %s59, %s60
    %p69 = scmp.eq.s32.totalorder %s14, 0
    %p70 = por %p68, %p69
    %p71 = scmp.ne.s32.totalorder %s59, %s60
    %p72 = scmp.eq.s32.totalorder %s15, 1
    %p73 = por %p71, %p72
    %p75 = scmp.ne.s32.totalorder %s60, %s74
    %p76 = scmp.eq.s32.totalorder %s15, 0
    %p77 = por %p75, %p76
    %s79 = sadd.s32 %s78, 1
    %p82 = scmp.eq.s32.totalorder %s9, 1
    %p83 = scmp.ne.s32.totalorder %s78, %s80
    %p84 = scmp.eq.s32.totalorder %s9, 0
    %p85 = por %p83, %p84
    %p86 = scmp.ne.s32.totalorder %s78, %s80
    %p87 = scmp.eq.s32.totalorder %s14, 1
    %p88 = por %p86, %p87
    %p89 = scmp.ne.s32.totalorder %s80, %s81
    %p90 = scmp.eq.s32.totalorder %s14, 0
    %p91 = por %p89, %p90
    %p92 = scmp.ne.s32.totalorder %s80, %s81
    %p93 = scmp.eq.s32.totalorder %s15, 1
    %p94 = por %p92, %p93
    %p96 = scmp.ne.s32.totalorder %s81, %s95
    %p97 = scmp.eq.s32.totalorder %s15, 0
    %p98 = por %p96, %p97
    %s99 = ssub.s32 %s16, %s28
    %s100 = ssub.s32 %s17, %s24
    %s101 = sor.u32 %s99, %s100
    %p102 = scmp.eq.s32.totalorder %s101, 0
    %s104 = sadd.s32 %s103, 1
    %s105 = scalar_select %p102, %s103, %s104
    %p108 = pneg %p102
    %p109 = scmp.eq.s32.totalorder %s9, 1
    %p110 = por %p108, %p109
    %p111 = scmp.ne.s32.totalorder %s103, %s106
    %p112 = scmp.eq.s32.totalorder %s9, 0
    %p113 = por %p111, %p112
    %p114 = scmp.ne.s32.totalorder %s103, %s106
    %p115 = scmp.eq.s32.totalorder %s14, 1
    %p116 = por %p114, %p115
    %p117 = scmp.ne.s32.totalorder %s106, %s107
    %p118 = scmp.eq.s32.totalorder %s14, 0
    %p119 = por %p117, %p118
    %p120 = scmp.ne.s32.totalorder %s106, %s107
    %p121 = scmp.eq.s32.totalorder %s15, 1
    %p122 = por %p120, %p121
    %p124 = scmp.ne.s32.totalorder %s107, %s123
    %p125 = scmp.eq.s32.totalorder %s15, 0
    %p126 = por %p124, %p125
    %p127 = scmp.le.s32.totalorder 1, %s9
    %p128 = scmp.lt.s32.totalorder %s9, 3
    %p129 = pnand %p127, %p128
    %p130 = pneg %p129
    // Predicated region
    $region9: #{fuse_fast_to_slow.1} parent=5 // pred_check
      _
    $region10: #{fuse_fast_to_slow.1} parent=5 // pred_check_branch
      %132 = sbr.rel (%p129) target = $region12
    $region11: #{fuse_fast_to_slow.1} parent=5 // pred_region
      %s133 = ssub.s32 %s9, 1
      // Predicated region
      $region13: #{fuse_fast_to_slow.1} parent=11 // pred_check
        %p134 = pneg %p70
      $region14: #{fuse_fast_to_slow.1} parent=11 // pred_check_branch
        %136 = sbr.rel (%p134) target = $region16
      $region15: #{fuse_fast_to_slow.1} parent=11 // pred_region
        _
      $region16: #{fuse_fast_to_slow.1} parent=11 // pred_fallthru
        _
      // Predicated region
      $region17: #{fuse_fast_to_slow.1} parent=11 // pred_check
        %p137 = pneg %p91
      $region18: #{fuse_fast_to_slow.1} parent=11 // pred_check_branch
        %139 = sbr.rel (%p137) target = $region20
      $region19: #{fuse_fast_to_slow.1} parent=11 // pred_region
        _
      $region20: #{fuse_fast_to_slow.1} parent=11 // pred_fallthru
        _
    $region12: #{fuse_fast_to_slow.1} parent=5 // pred_fallthru
      _
    %p140 = scmp.lt.s32.totalorder %s9, 2
    // Predicated region
    $region21: #{fuse_fast_to_slow.1} parent=5 // pred_check
      %p141 = pneg %p140
    $region22: #{fuse_fast_to_slow.1} parent=5 // pred_check_branch
      %143 = sbr.rel (%p141) target = $region24
    $region23: #{fuse_fast_to_slow.1} parent=5 // pred_region
      // Predicated region
      $region25: #{fuse_fast_to_slow.1} parent=23 // pred_check
        %p144 = pneg %p43
      $region26: #{fuse_fast_to_slow.1} parent=23 // pred_check_branch
        %146 = sbr.rel (%p144) target = $region28
      $region27: #{fuse_fast_to_slow.1} parent=23 // pred_region
        %p147 = scmp.lt.s32.totalorder %s16, 1
        %s148 = scalar_select %p147, %s16, 1
        %p149 = scmp.lt.s32.totalorder %s17, 0
        %s150 = scalar_select %p149, %s17, 0
        %s151 = smul.addr %s148, 16
        %s152 = sadd.s32 %s150, %s151
        %s153 = smul.addr %s152, 8
        %s154 = scalar_lea.vmem %s0, %s153
      $region28: #{fuse_fast_to_slow.1} parent=23 // pred_fallthru
        _
    $region24: #{fuse_fast_to_slow.1} parent=5 // pred_fallthru
      _
    %p155 = scmp.le.s32.totalorder 1, %s9
    %p156 = scmp.lt.s32.totalorder %s9, 3
    %p157 = pnand %p155, %p156
    %p158 = pneg %p157
    // Predicated region
    $region29: #{fuse_fast_to_slow.1} parent=5 // pred_check
      _
    $region30: #{fuse_fast_to_slow.1} parent=5 // pred_check_branch
      %160 = sbr.rel (%p157) target = $region32
    $region31: #{fuse_fast_to_slow.1} parent=5 // pred_region
      %s161 = ssub.s32 %s9, 1
      %p162 = scmp.lt.s32.totalorder %s18, 1
      %s163 = scalar_select %p162, %s18, 1
      %p164 = scmp.lt.s32.totalorder %s19, 0
      %s165 = scalar_select %p164, %s19, 0
      %s166 = smul.addr %s163, 16
      %s167 = sadd.s32 %s165, %s166
      %s168 = smul.addr %s167, 8
      %s169 = scalar_lea.vmem %s0, %s168
      %p170 = pneg %p49
      %p171 = pneg %p46
      %p172 = pneg %p70
      %p173 = pneg %p67
      %p174 = pneg %p91
      %p175 = pneg %p88
      %p176 = pneg %p119
      %p177 = pneg %p116
      %p178 = scmp.lt.s32.totalorder %s18, 1
      %s179 = scalar_select %p178, %s18, 1
      %p180 = scmp.lt.s32.totalorder %s19, 0
      %s181 = scalar_select %p180, %s19, 0
      %s182 = smul.addr %s179, 8
      %s183 = sadd.s32 %s181, %s182
      %s184 = smul.addr %s183, 8
      %s185 = scalar_lea.vmem %s3, %s184
      %p186 = scmp.lt.s32.totalorder %s18, 1
      %s187 = scalar_select %p186, %s18, 1
      %p188 = scmp.lt.s32.totalorder %s19, 0
      %s189 = scalar_select %p188, %s19, 0
      %s190 = smul.addr %s187, 16
      %s191 = sadd.s32 %s189, %s190
      %s192 = smul.addr %s191, 8
      %s193 = scalar_lea.vmem %s0, %s192
      %p194 = scmp.lt.s32.totalorder %s18, 1
      %s195 = scalar_select %p194, %s18, 1
      %p196 = scmp.lt.s32.totalorder %s19, 0
      %s197 = scalar_select %p196, %s19, 0
      %s198 = smul.addr %s195, 8
      %s199 = sadd.s32 %s197, %s198
      %s200 = smul.addr %s199, 8
      %s201 = scalar_lea.vmem %s3, %s200
      %v202 = vld [vmem:[%s2] sm:$0xff]
      %v203 = vld [vmem:[%s193] sm:$0x1]
      %v204 = vld [vmem:[%s193 + $0x20] sm:$0x1]
      %v205 = vld [vmem:[%s193 + $0x40] sm:$0x1]
      %v206 = vld [vmem:[%s193 + $0x60] sm:$0x1]
      %s207 = scalar_lea.vmem %s1, 16
      %v208 = vld [vmem:[%s207] sm:$0xff]
      %v209 = vld [vmem:[%s193 + $0x1] sm:$0x1]
      %v210 = vld [vmem:[%s193 + $0x21] sm:$0x1]
      %v211 = vld [vmem:[%s193 + $0x41] sm:$0x1]
      %v212 = vld [vmem:[%s193 + $0x61] sm:$0x1]
      %s213 = scalar_lea.vmem %s1, 24
      %v214 = vld [vmem:[%s213] sm:$0xff]
      %v219 = vrot.slane %v210, 7
      %vm220 = vcmask 1041409
      %v221 = vsel %vm220, %v219, %v209
      %v222 = vrot.slane %v211, 6
      %vm223 = vcmask 1042434
      %v224 = vsel %vm223, %v222, %v221
      %v225 = vrot.slane %v212, 5
      %vm226 = vcmask 1043459
      %v227 = vsel %vm226, %v225, %v224
      %vm228 = vcmask 31744
      %v230 = vsel %vm228, %v214, 0
      %vm232 = vcmask 1043456
      %v233 = vsel %vm232, %v227, 0
      %235 = vmatprep.subr.mxu0 0.0
      %236 = vmatpush1.msra.mxu0 %v233
      %237 = vmatprep.subr.mxu0 0.0
      %238 = vmatpush1.msra.mxu0 0.0
      %239 = vmatprep.subr.mxu0 0.0
      %240 = vmatpush1.msra.mxu0 0.0
      %241 = vmatprep.subr.mxu0 0.0
      %242 = vmatpush1.msra.mxu0 0.0
      %243 = vmatprep.subr.mxu0 0.0
      %244 = vmatpush1.msra.mxu0 0.0
      %245 = vmatprep.subr.mxu0 0.0
      %246 = vmatpush1.msra.mxu0 0.0
      %247 = vmatprep.subr.mxu0 0.0
      %248 = vmatpush1.msra.mxu0 0.0
      %249 = vmatprep.subr.mxu0 0.0
      %250 = vmatpush1.msra.mxu0 0.0
      %251 = vmatprep.subr.mxu0 0.0
      %252 = vmatpush1.msra.mxu0 0.0
      %253 = vmatprep.subr.mxu0 0.0
      %254 = vmatpush1.msra.mxu0 0.0
      %255 = vmatprep.subr.mxu0 0.0
      %256 = vmatpush1.msra.mxu0 0.0
      %257 = vmatprep.subr.mxu0 0.0
      %258 = vmatpush1.msra.mxu0 0.0
      %259 = vmatprep.subr.mxu0 0.0
      %260 = vmatpush1.msra.mxu0 0.0
      %261 = vmatprep.subr.mxu0 0.0
      %262 = vmatpush1.msra.mxu0 0.0
      %263 = vmatprep.subr.mxu0 0.0
      %264 = vmatpush1.msra.mxu0 0.0
      %265 = vmatprep.subr.mxu0 0.0
      %266 = vmatpush1.msra.mxu0 0.0
      %267 = vmatprep.subr.mxu0 0.0
      %268 = vmatpush1.msra.mxu0 0.0
      %269 = vmatprep.subr.mxu0 0.0
      %270 = vmatpush1.msra.mxu0 0.0
      %271 = vmatprep.subr.mxu0 0.0
      %272 = vmatpush1.msra.mxu0 0.0
      %273 = vmatprep.subr.mxu0 0.0
      %274 = vmatpush1.msra.mxu0 0.0
      %275 = vmatprep.subr.mxu0 0.0
      %276 = vmatpush1.msra.mxu0 0.0
      %277 = vmatprep.subr.mxu0 0.0
      %278 = vmatpush1.msra.mxu0 0.0
      %279 = vmatprep.subr.mxu0 0.0
      %280 = vmatpush1.msra.mxu0 0.0
      %281 = vmatprep.subr.mxu0 0.0
      %282 = vmatpush1.msra.mxu0 0.0
      %283 = vmatprep.subr.mxu0 0.0
      %284 = vmatpush1.msra.mxu0 0.0
      %285 = vmatprep.subr.mxu0 0.0
      %286 = vmatpush1.msra.mxu0 0.0
      %287 = vmatprep.subr.mxu0 0.0
      %288 = vmatpush1.msra.mxu0 0.0
      %289 = vmatprep.subr.mxu0 0.0
      %290 = vmatpush1.msra.mxu0 0.0
      %291 = vmatprep.subr.mxu0 0.0
      %292 = vmatpush1.msra.mxu0 0.0
      %293 = vmatprep.subr.mxu0 0.0
      %294 = vmatpush1.msra.mxu0 0.0
      %295 = vmatprep.subr.mxu0 0.0
      %296 = vmatpush1.msra.mxu0 0.0
      %297 = vmatprep.subr.mxu0 0.0
      %298 = vmatpush1.msra.mxu0 0.0
      %299 = vmatprep.mubr.f32.mxu0 0.0
      %300 = vmatmul.mubr.f32.gmra.mrb[0].mxu0 %v230
      %v301 = vpop.f32.mrb[0].mxu0
      %v302 = vadd.f32 0.0, %v301
      %v303 = vpop.f32.mrb[0].mxu0
      %304 = vdwg.mxu0
      %v309 = vrot.slane %v204, 7
      %v310 = vsel %vm220, %v309, %v203
      %v311 = vrot.slane %v205, 6
      %v312 = vsel %vm223, %v311, %v310
      %v313 = vrot.slane %v206, 5
      %v314 = vsel %vm226, %v313, %v312
      %v316 = vsel %vm228, %v208, 0
      %v318 = vsel %vm232, %v314, 0
      %320 = vmatprep.subr.mxu0 0.0
      %321 = vmatpush1.msra.mxu0 %v318
      %322 = vmatprep.subr.mxu0 0.0
      %323 = vmatpush1.msra.mxu0 0.0
      %324 = vmatprep.subr.mxu0 0.0
      %325 = vmatpush1.msra.mxu0 0.0
      %326 = vmatprep.subr.mxu0 0.0
      %327 = vmatpush1.msra.mxu0 0.0
      %328 = vmatprep.subr.mxu0 0.0
      %329 = vmatpush1.msra.mxu0 0.0
      %330 = vmatprep.subr.mxu0 0.0
      %331 = vmatpush1.msra.mxu0 0.0
      %332 = vmatprep.subr.mxu0 0.0
      %333 = vmatpush1.msra.mxu0 0.0
      %334 = vmatprep.subr.mxu0 0.0
      %335 = vmatpush1.msra.mxu0 0.0
      %336 = vmatprep.subr.mxu0 0.0
      %337 = vmatpush1.msra.mxu0 0.0
      %338 = vmatprep.subr.mxu0 0.0
      %339 = vmatpush1.msra.mxu0 0.0
      %340 = vmatprep.subr.mxu0 0.0
      %341 = vmatpush1.msra.mxu0 0.0
      %342 = vmatprep.subr.mxu0 0.0
      %343 = vmatpush1.msra.mxu0 0.0
      %344 = vmatprep.subr.mxu0 0.0
      %345 = vmatpush1.msra.mxu0 0.0
      %346 = vmatprep.subr.mxu0 0.0
      %347 = vmatpush1.msra.mxu0 0.0
      %348 = vmatprep.subr.mxu0 0.0
      %349 = vmatpush1.msra.mxu0 0.0
      %350 = vmatprep.subr.mxu0 0.0
      %351 = vmatpush1.msra.mxu0 0.0
      %352 = vmatprep.subr.mxu0 0.0
      %353 = vmatpush1.msra.mxu0 0.0
      %354 = vmatprep.subr.mxu0 0.0
      %355 = vmatpush1.msra.mxu0 0.0
      %356 = vmatprep.subr.mxu0 0.0
      %357 = vmatpush1.msra.mxu0 0.0
      %358 = vmatprep.subr.mxu0 0.0
      %359 = vmatpush1.msra.mxu0 0.0
      %360 = vmatprep.subr.mxu0 0.0
      %361 = vmatpush1.msra.mxu0 0.0
      %362 = vmatprep.subr.mxu0 0.0
      %363 = vmatpush1.msra.mxu0 0.0
      %364 = vmatprep.subr.mxu0 0.0
      %365 = vmatpush1.msra.mxu0 0.0
      %366 = vmatprep.subr.mxu0 0.0
      %367 = vmatpush1.msra.mxu0 0.0
      %368 = vmatprep.subr.mxu0 0.0
      %369 = vmatpush1.msra.mxu0 0.0
      %370 = vmatprep.subr.mxu0 0.0
      %371 = vmatpush1.msra.mxu0 0.0
      %372 = vmatprep.subr.mxu0 0.0
      %373 = vmatpush1.msra.mxu0 0.0
      %374 = vmatprep.subr.mxu0 0.0
      %375 = vmatpush1.msra.mxu0 0.0
      %376 = vmatprep.subr.mxu0 0.0
      %377 = vmatpush1.msra.mxu0 0.0
      %378 = vmatprep.subr.mxu0 0.0
      %379 = vmatpush1.msra.mxu0 0.0
      %380 = vmatprep.subr.mxu0 0.0
      %381 = vmatpush1.msra.mxu0 0.0
      %382 = vmatprep.subr.mxu0 0.0
      %383 = vmatpush1.msra.mxu0 0.0
      %384 = vmatprep.mubr.f32.mxu0 0.0
      %385 = vmatmul.mubr.f32.gmra.mrb[0].mxu0 %v316
      %v386 = vpop.f32.mrb[0].mxu0
      %v387 = vadd.f32 %v302, %v386
      %v388 = vpop.f32.mrb[0].mxu0
      %389 = vdwg.mxu0
      %v390 = vld [vmem:[%s193 + $0x2] sm:$0x1]
      %v391 = vld [vmem:[%s193 + $0x22] sm:$0x1]
      %v392 = vld [vmem:[%s193 + $0x42] sm:$0x1]
      %v393 = vld [vmem:[%s193 + $0x62] sm:$0x1]
      %s394 = scalar_lea.vmem %s1, 32
      %v395 = vld [vmem:[%s394] sm:$0xff]
      %v400 = vrot.slane %v391, 7
      %v401 = vsel %vm220, %v400, %v390
      %v402 = vrot.slane %v392, 6
      %v403 = vsel %vm223, %v402, %v401
      %v404 = vrot.slane %v393, 5
      %v405 = vsel %vm226, %v404, %v403
      %v407 = vsel %vm228, %v395, 0
      %v409 = vsel %vm232, %v405, 0
      %411 = vmatprep.subr.mxu0 0.0
      %412 = vmatpush1.msra.mxu0 %v409
      %413 = vmatprep.subr.mxu0 0.0
      %414 = vmatpush1.msra.mxu0 0.0
      %415 = vmatprep.subr.mxu0 0.0
      %416 = vmatpush1.msra.mxu0 0.0
      %417 = vmatprep.subr.mxu0 0.0
      %418 = vmatpush1.msra.mxu0 0.0
      %419 = vmatprep.subr.mxu0 0.0
      %420 = vmatpush1.msra.mxu0 0.0
      %421 = vmatprep.subr.mxu0 0.0
      %422 = vmatpush1.msra.mxu0 0.0
      %423 = vmatprep.subr.mxu0 0.0
      %424 = vmatpush1.msra.mxu0 0.0
      %425 = vmatprep.subr.mxu0 0.0
      %426 = vmatpush1.msra.mxu0 0.0
      %427 = vmatprep.subr.mxu0 0.0
      %428 = vmatpush1.msra.mxu0 0.0
      %429 = vmatprep.subr.mxu0 0.0
      %430 = vmatpush1.msra.mxu0 0.0
      %431 = vmatprep.subr.mxu0 0.0
      %432 = vmatpush1.msra.mxu0 0.0
      %433 = vmatprep.subr.mxu0 0.0
      %434 = vmatpush1.msra.mxu0 0.0
      %435 = vmatprep.subr.mxu0 0.0
      %436 = vmatpush1.msra.mxu0 0.0
      %437 = vmatprep.subr.mxu0 0.0
      %438 = vmatpush1.msra.mxu0 0.0
      %439 = vmatprep.subr.mxu0 0.0
      %440 = vmatpush1.msra.mxu0 0.0
      %441 = vmatprep.subr.mxu0 0.0
      %442 = vmatpush1.msra.mxu0 0.0
      %443 = vmatprep.subr.mxu0 0.0
      %444 = vmatpush1.msra.mxu0 0.0
      %445 = vmatprep.subr.mxu0 0.0
      %446 = vmatpush1.msra.mxu0 0.0
      %447 = vmatprep.subr.mxu0 0.0
      %448 = vmatpush1.msra.mxu0 0.0
      %449 = vmatprep.subr.mxu0 0.0
      %450 = vmatpush1.msra.mxu0 0.0
      %451 = vmatprep.subr.mxu0 0.0
      %452 = vmatpush1.msra.mxu0 0.0
      %453 = vmatprep.subr.mxu0 0.0
      %454 = vmatpush1.msra.mxu0 0.0
      %455 = vmatprep.subr.mxu0 0.0
      %456 = vmatpush1.msra.mxu0 0.0
      %457 = vmatprep.subr.mxu0 0.0
      %458 = vmatpush1.msra.mxu0 0.0
      %459 = vmatprep.subr.mxu0 0.0
      %460 = vmatpush1.msra.mxu0 0.0
      %461 = vmatprep.subr.mxu0 0.0
      %462 = vmatpush1.msra.mxu0 0.0
      %463 = vmatprep.subr.mxu0 0.0
      %464 = vmatpush1.msra.mxu0 0.0
      %465 = vmatprep.subr.mxu0 0.0
      %466 = vmatpush1.msra.mxu0 0.0
      %467 = vmatprep.subr.mxu0 0.0
      %468 = vmatpush1.msra.mxu0 0.0
      %469 = vmatprep.subr.mxu0 0.0
      %470 = vmatpush1.msra.mxu0 0.0
      %471 = vmatprep.subr.mxu0 0.0
      %472 = vmatpush1.msra.mxu0 0.0
      %473 = vmatprep.subr.mxu0 0.0
      %474 = vmatpush1.msra.mxu0 0.0
      %475 = vmatprep.mubr.f32.mxu0 0.0
      %476 = vmatmul.mubr.f32.gmra.mrb[0].mxu0 %v407
      %v477 = vpop.f32.mrb[0].mxu0
      %v478 = vadd.f32 0.0, %v477
      %v479 = vpop.f32.mrb[0].mxu0
      %480 = vdwg.mxu0
      %v481 = vadd.f32 %v387, %v478
      %483 = vset.pattern.permute.xlu0 0
      %484 = vperm.xlu0 %483, %v202
      %v485 = vpop.permute.xlu0 %484
      %v487 = vadd.f32 %v481, %v485
      %v488 = vmax.f32 %v487, 0.0
      %v490 = vcombine.high %v488, %v488
      %v492 = vunpack.c.l.s4 1966171168
      %v493 = vunpack.c.0.s8 %v492
      %v494 = vlaneseq
      %v495 = vshrl.u32 %v494, 7
      %v496 = vsub.s32 %v493, %v495
      %v497 = vrot.slane %v488, %v496
      %v499 = vunpack.c.l.s4 1966171168
      %v500 = vunpack.c.0.s8 %v499
      %v501 = vlaneseq
      %v502 = vshrl.u32 %v501, 7
      %v503 = vsub.s32 %v500, %v502
      %v504 = vrot.slane %v490, %v503
      %v505 = vcombine.high %v497, %v497
      %v506 = vcombine.high %v504, %v504
      %v508 = vunpack.c.l.s4 1966171168
      %v509 = vunpack.c.0.s8 %v508
      %v510 = vlaneseq
      %v511 = vshrl.u32 %v510, 7
      %v512 = vsub.s32 %v509, %v511
      %v513 = vrot.slane %v497, %v512
      %v515 = vunpack.c.l.s4 1966171168
      %v516 = vunpack.c.0.s8 %v515
      %v517 = vlaneseq
      %v518 = vshrl.u32 %v517, 7
      %v519 = vsub.s32 %v516, %v518
      %v520 = vrot.slane %v504, %v519
      %v522 = vunpack.c.l.s4 1966171168
      %v523 = vunpack.c.0.s8 %v522
      %v524 = vlaneseq
      %v525 = vshrl.u32 %v524, 7
      %v526 = vsub.s32 %v523, %v525
      %v527 = vrot.slane %v505, %v526
      %v529 = vunpack.c.l.s4 1966171168
      %v530 = vunpack.c.0.s8 %v529
      %v531 = vlaneseq
      %v532 = vshrl.u32 %v531, 7
      %v533 = vsub.s32 %v530, %v532
      %v534 = vrot.slane %v506, %v533
      %v535 = vcombine.high %v513, %v513
      %v536 = vcombine.high %v520, %v520
      %v537 = vcombine.high %v527, %v527
      %v538 = vcombine.high %v534, %v534
      %vm547 = vcmask 516096
      %548 = vst.msk [vmem:[%s201] sm:$0x1] %vm547, %v513
      %549 = vst.msk [vmem:[%s201 + $0x8] sm:$0x1] %vm547, %v527
      %550 = vst.msk [vmem:[%s201 + $0x10] sm:$0x1] %vm547, %v535
      %551 = vst.msk [vmem:[%s201 + $0x18] sm:$0x1] %vm547, %v537
      %552 = vst.msk [vmem:[%s201 + $0x20] sm:$0x1] %vm547, %v520
      %553 = vst.msk [vmem:[%s201 + $0x28] sm:$0x1] %vm547, %v534
      %554 = vst.msk [vmem:[%s201 + $0x30] sm:$0x1] %vm547, %v536
      %555 = vst.msk [vmem:[%s201 + $0x38] sm:$0x1] %vm547, %v538
      %v556 = vld [vmem:[%s193 + $0x2] sm:$0x1]
      %v557 = vld [vmem:[%s193 + $0x22] sm:$0x1]
      %v558 = vld [vmem:[%s193 + $0x42] sm:$0x1]
      %v559 = vld [vmem:[%s193 + $0x62] sm:$0x1]
      %v560 = vld [vmem:[%s1] sm:$0xff]
      %v561 = vld [vmem:[%s193 + $0x3] sm:$0x1]
      %v562 = vld [vmem:[%s193 + $0x23] sm:$0x1]
      %v563 = vld [vmem:[%s193 + $0x43] sm:$0x1]
      %v564 = vld [vmem:[%s193 + $0x63] sm:$0x1]
      %s565 = scalar_lea.vmem %s1, 8
      %v566 = vld [vmem:[%s565] sm:$0xff]
      %v571 = vrot.slane %v562, 7
      %v572 = vsel %vm220, %v571, %v561
      %v573 = vrot.slane %v563, 6
      %v574 = vsel %vm223, %v573, %v572
      %v575 = vrot.slane %v564, 5
      %v576 = vsel %vm226, %v575, %v574
      %v578 = vsel %vm228, %v566, 0
      %v580 = vsel %vm232, %v576, 0
      %582 = vmatprep.subr.mxu0 0.0
      %583 = vmatpush1.msra.mxu0 %v580
      %584 = vmatprep.subr.mxu0 0.0
      %585 = vmatpush1.msra.mxu0 0.0
      %586 = vmatprep.subr.mxu0 0.0
      %587 = vmatpush1.msra.mxu0 0.0
      %588 = vmatprep.subr.mxu0 0.0
      %589 = vmatpush1.msra.mxu0 0.0
      %590 = vmatprep.subr.mxu0 0.0
      %591 = vmatpush1.msra.mxu0 0.0
      %592 = vmatprep.subr.mxu0 0.0
      %593 = vmatpush1.msra.mxu0 0.0
      %594 = vmatprep.subr.mxu0 0.0
      %595 = vmatpush1.msra.mxu0 0.0
      %596 = vmatprep.subr.mxu0 0.0
      %597 = vmatpush1.msra.mxu0 0.0
      %598 = vmatprep.subr.mxu0 0.0
      %599 = vmatpush1.msra.mxu0 0.0
      %600 = vmatprep.subr.mxu0 0.0
      %601 = vmatpush1.msra.mxu0 0.0
      %602 = vmatprep.subr.mxu0 0.0
      %603 = vmatpush1.msra.mxu0 0.0
      %604 = vmatprep.subr.mxu0 0.0
      %605 = vmatpush1.msra.mxu0 0.0
      %606 = vmatprep.subr.mxu0 0.0
      %607 = vmatpush1.msra.mxu0 0.0
      %608 = vmatprep.subr.mxu0 0.0
      %609 = vmatpush1.msra.mxu0 0.0
      %610 = vmatprep.subr.mxu0 0.0
      %611 = vmatpush1.msra.mxu0 0.0
      %612 = vmatprep.subr.mxu0 0.0
      %613 = vmatpush1.msra.mxu0 0.0
      %614 = vmatprep.subr.mxu0 0.0
      %615 = vmatpush1.msra.mxu0 0.0
      %616 = vmatprep.subr.mxu0 0.0
      %617 = vmatpush1.msra.mxu0 0.0
      %618 = vmatprep.subr.mxu0 0.0
      %619 = vmatpush1.msra.mxu0 0.0
      %620 = vmatprep.subr.mxu0 0.0
      %621 = vmatpush1.msra.mxu0 0.0
      %622 = vmatprep.subr.mxu0 0.0
      %623 = vmatpush1.msra.mxu0 0.0
      %624 = vmatprep.subr.mxu0 0.0
      %625 = vmatpush1.msra.mxu0 0.0
      %626 = vmatprep.subr.mxu0 0.0
      %627 = vmatpush1.msra.mxu0 0.0
      %628 = vmatprep.subr.mxu0 0.0
      %629 = vmatpush1.msra.mxu0 0.0
      %630 = vmatprep.subr.mxu0 0.0
      %631 = vmatpush1.msra.mxu0 0.0
      %632 = vmatprep.subr.mxu0 0.0
      %633 = vmatpush1.msra.mxu0 0.0
      %634 = vmatprep.subr.mxu0 0.0
      %635 = vmatpush1.msra.mxu0 0.0
      %636 = vmatprep.subr.mxu0 0.0
      %637 = vmatpush1.msra.mxu0 0.0
      %638 = vmatprep.subr.mxu0 0.0
      %639 = vmatpush1.msra.mxu0 0.0
      %640 = vmatprep.subr.mxu0 0.0
      %641 = vmatpush1.msra.mxu0 0.0
      %642 = vmatprep.subr.mxu0 0.0
      %643 = vmatpush1.msra.mxu0 0.0
      %644 = vmatprep.subr.mxu0 0.0
      %645 = vmatpush1.msra.mxu0 0.0
      %646 = vmatprep.mubr.f32.mxu0 0.0
      %647 = vmatmul.mubr.f32.gmra.mrb[0].mxu0 %v578
      %v648 = vpop.f32.mrb[0].mxu0
      %v649 = vadd.f32 0.0, %v648
      %v650 = vpop.f32.mrb[0].mxu0
      %651 = vdwg.mxu0
      %v656 = vrot.slane %v557, 7
      %v657 = vsel %vm220, %v656, %v556
      %v658 = vrot.slane %v558, 6
      %v659 = vsel %vm223, %v658, %v657
      %v660 = vrot.slane %v559, 5
      %v661 = vsel %vm226, %v660, %v659
      %v663 = vsel %vm228, %v560, 0
      %v665 = vsel %vm232, %v661, 0
      %667 = vmatprep.subr.mxu0 0.0
      %668 = vmatpush1.msra.mxu0 %v665
      %669 = vmatprep.subr.mxu0 0.0
      %670 = vmatpush1.msra.mxu0 0.0
      %671 = vmatprep.subr.mxu0 0.0
      %672 = vmatpush1.msra.mxu0 0.0
      %673 = vmatprep.subr.mxu0 0.0
      %674 = vmatpush1.msra.mxu0 0.0
      %675 = vmatprep.subr.mxu0 0.0
      %676 = vmatpush1.msra.mxu0 0.0
      %677 = vmatprep.subr.mxu0 0.0
      %678 = vmatpush1.msra.mxu0 0.0
      %679 = vmatprep.subr.mxu0 0.0
      %680 = vmatpush1.msra.mxu0 0.0
      %681 = vmatprep.subr.mxu0 0.0
      %682 = vmatpush1.msra.mxu0 0.0
      %683 = vmatprep.subr.mxu0 0.0
      %684 = vmatpush1.msra.mxu0 0.0
      %685 = vmatprep.subr.mxu0 0.0
      %686 = vmatpush1.msra.mxu0 0.0
      %687 = vmatprep.subr.mxu0 0.0
      %688 = vmatpush1.msra.mxu0 0.0
      %689 = vmatprep.subr.mxu0 0.0
      %690 = vmatpush1.msra.mxu0 0.0
      %691 = vmatprep.subr.mxu0 0.0
      %692 = vmatpush1.msra.mxu0 0.0
      %693 = vmatprep.subr.mxu0 0.0
      %694 = vmatpush1.msra.mxu0 0.0
      %695 = vmatprep.subr.mxu0 0.0
      %696 = vmatpush1.msra.mxu0 0.0
      %697 = vmatprep.subr.mxu0 0.0
      %698 = vmatpush1.msra.mxu0 0.0
      %699 = vmatprep.subr.mxu0 0.0
      %700 = vmatpush1.msra.mxu0 0.0
      %701 = vmatprep.subr.mxu0 0.0
      %702 = vmatpush1.msra.mxu0 0.0
      %703 = vmatprep.subr.mxu0 0.0
      %704 = vmatpush1.msra.mxu0 0.0
      %705 = vmatprep.subr.mxu0 0.0
      %706 = vmatpush1.msra.mxu0 0.0
      %707 = vmatprep.subr.mxu0 0.0
      %708 = vmatpush1.msra.mxu0 0.0
      %709 = vmatprep.subr.mxu0 0.0
      %710 = vmatpush1.msra.mxu0 0.0
      %711 = vmatprep.subr.mxu0 0.0
      %712 = vmatpush1.msra.mxu0 0.0
      %713 = vmatprep.subr.mxu0 0.0
      %714 = vmatpush1.msra.mxu0 0.0
      %715 = vmatprep.subr.mxu0 0.0
      %716 = vmatpush1.msra.mxu0 0.0
      %717 = vmatprep.subr.mxu0 0.0
      %718 = vmatpush1.msra.mxu0 0.0
      %719 = vmatprep.subr.mxu0 0.0
      %720 = vmatpush1.msra.mxu0 0.0
      %721 = vmatprep.subr.mxu0 0.0
      %722 = vmatpush1.msra.mxu0 0.0
      %723 = vmatprep.subr.mxu0 0.0
      %724 = vmatpush1.msra.mxu0 0.0
      %725 = vmatprep.subr.mxu0 0.0
      %726 = vmatpush1.msra.mxu0 0.0
      %727 = vmatprep.subr.mxu0 0.0
      %728 = vmatpush1.msra.mxu0 0.0
      %729 = vmatprep.subr.mxu0 0.0
      %730 = vmatpush1.msra.mxu0 0.0
      %731 = vmatprep.mubr.f32.mxu0 0.0
      %732 = vmatmul.mubr.f32.gmra.mrb[0].mxu0 %v663
      %v733 = vpop.f32.mrb[0].mxu0
      %v734 = vadd.f32 %v649, %v733
      %v735 = vpop.f32.mrb[0].mxu0
      %736 = vdwg.mxu0
      %v737 = vld [vmem:[%s193 + $0x4] sm:$0x1]
      %v738 = vld [vmem:[%s193 + $0x24] sm:$0x1]
      %v739 = vld [vmem:[%s193 + $0x44] sm:$0x1]
      %v740 = vld [vmem:[%s193 + $0x64] sm:$0x1]
      %v741 = vld [vmem:[%s207] sm:$0xff]
      %v746 = vrot.slane %v738, 7
      %v747 = vsel %vm220, %v746, %v737
      %v748 = vrot.slane %v739, 6
      %v749 = vsel %vm223, %v748, %v747
      %v750 = vrot.slane %v740, 5
      %v751 = vsel %vm226, %v750, %v749
      %v753 = vsel %vm228, %v741, 0
      %v755 = vsel %vm232, %v751, 0
      %757 = vmatprep.subr.mxu0 0.0
      %758 = vmatpush1.msra.mxu0 %v755
      %759 = vmatprep.subr.mxu0 0.0
      %760 = vmatpush1.msra.mxu0 0.0
      %761 = vmatprep.subr.mxu0 0.0
      %762 = vmatpush1.msra.mxu0 0.0
      %763 = vmatprep.subr.mxu0 0.0
      %764 = vmatpush1.msra.mxu0 0.0
      %765 = vmatprep.subr.mxu0 0.0
      %766 = vmatpush1.msra.mxu0 0.0
      %767 = vmatprep.subr.mxu0 0.0
      %768 = vmatpush1.msra.mxu0 0.0
      %769 = vmatprep.subr.mxu0 0.0
      %770 = vmatpush1.msra.mxu0 0.0
      %771 = vmatprep.subr.mxu0 0.0
      %772 = vmatpush1.msra.mxu0 0.0
      %773 = vmatprep.subr.mxu0 0.0
      %774 = vmatpush1.msra.mxu0 0.0
      %775 = vmatprep.subr.mxu0 0.0
      %776 = vmatpush1.msra.mxu0 0.0
      %777 = vmatprep.subr.mxu0 0.0
      %778 = vmatpush1.msra.mxu0 0.0
      %779 = vmatprep.subr.mxu0 0.0
      %780 = vmatpush1.msra.mxu0 0.0
      %781 = vmatprep.subr.mxu0 0.0
      %782 = vmatpush1.msra.mxu0 0.0
      %783 = vmatprep.subr.mxu0 0.0
      %784 = vmatpush1.msra.mxu0 0.0
      %785 = vmatprep.subr.mxu0 0.0
      %786 = vmatpush1.msra.mxu0 0.0
      %787 = vmatprep.subr.mxu0 0.0
      %788 = vmatpush1.msra.mxu0 0.0
      %789 = vmatprep.subr.mxu0 0.0
      %790 = vmatpush1.msra.mxu0 0.0
      %791 = vmatprep.subr.mxu0 0.0
      %792 = vmatpush1.msra.mxu0 0.0
      %793 = vmatprep.subr.mxu0 0.0
      %794 = vmatpush1.msra.mxu0 0.0
      %795 = vmatprep.subr.mxu0 0.0
      %796 = vmatpush1.msra.mxu0 0.0
      %797 = vmatprep.subr.mxu0 0.0
      %798 = vmatpush1.msra.mxu0 0.0
      %799 = vmatprep.subr.mxu0 0.0
      %800 = vmatpush1.msra.mxu0 0.0
      %801 = vmatprep.subr.mxu0 0.0
      %802 = vmatpush1.msra.mxu0 0.0
      %803 = vmatprep.subr.mxu0 0.0
      %804 = vmatpush1.msra.mxu0 0.0
      %805 = vmatprep.subr.mxu0 0.0
      %806 = vmatpush1.msra.mxu0 0.0
      %807 = vmatprep.subr.mxu0 0.0
      %808 = vmatpush1.msra.mxu0 0.0
      %809 = vmatprep.subr.mxu0 0.0
      %810 = vmatpush1.msra.mxu0 0.0
      %811 = vmatprep.subr.mxu0 0.0
      %812 = vmatpush1.msra.mxu0 0.0
      %813 = vmatprep.subr.mxu0 0.0
      %814 = vmatpush1.msra.mxu0 0.0
      %815 = vmatprep.subr.mxu0 0.0
      %816 = vmatpush1.msra.mxu0 0.0
      %817 = vmatprep.subr.mxu0 0.0
      %818 = vmatpush1.msra.mxu0 0.0
      %819 = vmatprep.subr.mxu0 0.0
      %820 = vmatpush1.msra.mxu0 0.0
      %821 = vmatprep.mubr.f32.mxu0 0.0
      %822 = vmatmul.mubr.f32.gmra.mrb[0].mxu0 %v753
      %v823 = vpop.f32.mrb[0].mxu0
      %v824 = vadd.f32 0.0, %v823
      %v825 = vpop.f32.mrb[0].mxu0
      %826 = vdwg.mxu0
      %v827 = vadd.f32 %v734, %v824
      %v828 = vld [vmem:[%s193 + $0x5] sm:$0x1]
      %v829 = vld [vmem:[%s193 + $0x25] sm:$0x1]
      %v830 = vld [vmem:[%s193 + $0x45] sm:$0x1]
      %v831 = vld [vmem:[%s193 + $0x65] sm:$0x1]
      %v832 = vld [vmem:[%s213] sm:$0xff]
      %v837 = vrot.slane %v829, 7
      %v838 = vsel %vm220, %v837, %v828
      %v839 = vrot.slane %v830, 6
      %v840 = vsel %vm223, %v839, %v838
      %v841 = vrot.slane %v831, 5
      %v842 = vsel %vm226, %v841, %v840
      %v844 = vsel %vm228, %v832, 0
      %v846 = vsel %vm232, %v842, 0
      %848 = vmatprep.subr.mxu0 0.0
      %849 = vmatpush1.msra.mxu0 %v846
      %850 = vmatprep.subr.mxu0 0.0
      %851 = vmatpush1.msra.mxu0 0.0
      %852 = vmatprep.subr.mxu0 0.0
      %853 = vmatpush1.msra.mxu0 0.0
      %854 = vmatprep.subr.mxu0 0.0
      %855 = vmatpush1.msra.mxu0 0.0
      %856 = vmatprep.subr.mxu0 0.0
      %857 = vmatpush1.msra.mxu0 0.0
      %858 = vmatprep.subr.mxu0 0.0
      %859 = vmatpush1.msra.mxu0 0.0
      %860 = vmatprep.subr.mxu0 0.0
      %861 = vmatpush1.msra.mxu0 0.0
      %862 = vmatprep.subr.mxu0 0.0
      %863 = vmatpush1.msra.mxu0 0.0
      %864 = vmatprep.subr.mxu0 0.0
      %865 = vmatpush1.msra.mxu0 0.0
      %866 = vmatprep.subr.mxu0 0.0
      %867 = vmatpush1.msra.mxu0 0.0
      %868 = vmatprep.subr.mxu0 0.0
      %869 = vmatpush1.msra.mxu0 0.0
      %870 = vmatprep.subr.mxu0 0.0
      %871 = vmatpush1.msra.mxu0 0.0
      %872 = vmatprep.subr.mxu0 0.0
      %873 = vmatpush1.msra.mxu0 0.0
      %874 = vmatprep.subr.mxu0 0.0
      %875 = vmatpush1.msra.mxu0 0.0
      %876 = vmatprep.subr.mxu0 0.0
      %877 = vmatpush1.msra.mxu0 0.0
      %878 = vmatprep.subr.mxu0 0.0
      %879 = vmatpush1.msra.mxu0 0.0
      %880 = vmatprep.subr.mxu0 0.0
      %881 = vmatpush1.msra.mxu0 0.0
      %882 = vmatprep.subr.mxu0 0.0
      %883 = vmatpush1.msra.mxu0 0.0
      %884 = vmatprep.subr.mxu0 0.0
      %885 = vmatpush1.msra.mxu0 0.0
      %886 = vmatprep.subr.mxu0 0.0
      %887 = vmatpush1.msra.mxu0 0.0
      %888 = vmatprep.subr.mxu0 0.0
      %889 = vmatpush1.msra.mxu0 0.0
      %890 = vmatprep.subr.mxu0 0.0
      %891 = vmatpush1.msra.mxu0 0.0
      %892 = vmatprep.subr.mxu0 0.0
      %893 = vmatpush1.msra.mxu0 0.0
      %894 = vmatprep.subr.mxu0 0.0
      %895 = vmatpush1.msra.mxu0 0.0
      %896 = vmatprep.subr.mxu0 0.0
      %897 = vmatpush1.msra.mxu0 0.0
      %898 = vmatprep.subr.mxu0 0.0
      %899 = vmatpush1.msra.mxu0 0.0
      %900 = vmatprep.subr.mxu0 0.0
      %901 = vmatpush1.msra.mxu0 0.0
      %902 = vmatprep.subr.mxu0 0.0
      %903 = vmatpush1.msra.mxu0 0.0
      %904 = vmatprep.subr.mxu0 0.0
      %905 = vmatpush1.msra.mxu0 0.0
      %906 = vmatprep.subr.mxu0 0.0
      %907 = vmatpush1.msra.mxu0 0.0
      %908 = vmatprep.subr.mxu0 0.0
      %909 = vmatpush1.msra.mxu0 0.0
      %910 = vmatprep.subr.mxu0 0.0
      %911 = vmatpush1.msra.mxu0 0.0
      %912 = vmatprep.mubr.f32.mxu0 0.0
      %913 = vmatmul.mubr.f32.gmra.mrb[0].mxu0 %v844
      %v914 = vpop.f32.mrb[0].mxu0
      %v915 = vadd.f32 0.0, %v914
      %v916 = vpop.f32.mrb[0].mxu0
      %917 = vdwg.mxu0
      %v918 = vadd.f32 %v827, %v915
      %v919 = vld [vmem:[%s193 + $0x6] sm:$0x1]
      %v920 = vld [vmem:[%s193 + $0x26] sm:$0x1]
      %v921 = vld [vmem:[%s193 + $0x46] sm:$0x1]
      %v922 = vld [vmem:[%s193 + $0x66] sm:$0x1]
      %v923 = vld [vmem:[%s394] sm:$0xff]
      %v928 = vrot.slane %v920, 7
      %v929 = vsel %vm220, %v928, %v919
      %v930 = vrot.slane %v921, 6
      %v931 = vsel %vm223, %v930, %v929
      %v932 = vrot.slane %v922, 5
      %v933 = vsel %vm226, %v932, %v931
      %v935 = vsel %vm228, %v923, 0
      %v937 = vsel %vm232, %v933, 0
      %939 = vmatprep.subr.mxu0 0.0
      %940 = vmatpush1.msra.mxu0 %v937
      %941 = vmatprep.subr.mxu0 0.0
      %942 = vmatpush1.msra.mxu0 0.0
      %943 = vmatprep.subr.mxu0 0.0
      %944 = vmatpush1.msra.mxu0 0.0
      %945 = vmatprep.subr.mxu0 0.0
      %946 = vmatpush1.msra.mxu0 0.0
      %947 = vmatprep.subr.mxu0 0.0
      %948 = vmatpush1.msra.mxu0 0.0
      %949 = vmatprep.subr.mxu0 0.0
      %950 = vmatpush1.msra.mxu0 0.0
      %951 = vmatprep.subr.mxu0 0.0
      %952 = vmatpush1.msra.mxu0 0.0
      %953 = vmatprep.subr.mxu0 0.0
      %954 = vmatpush1.msra.mxu0 0.0
      %955 = vmatprep.subr.mxu0 0.0
      %956 = vmatpush1.msra.mxu0 0.0
      %957 = vmatprep.subr.mxu0 0.0
      %958 = vmatpush1.msra.mxu0 0.0
      %959 = vmatprep.subr.mxu0 0.0
      %960 = vmatpush1.msra.mxu0 0.0
      %961 = vmatprep.subr.mxu0 0.0
      %962 = vmatpush1.msra.mxu0 0.0
      %963 = vmatprep.subr.mxu0 0.0
      %964 = vmatpush1.msra.mxu0 0.0
      %965 = vmatprep.subr.mxu0 0.0
      %966 = vmatpush1.msra.mxu0 0.0
      %967 = vmatprep.subr.mxu0 0.0
      %968 = vmatpush1.msra.mxu0 0.0
      %969 = vmatprep.subr.mxu0 0.0
      %970 = vmatpush1.msra.mxu0 0.0
      %971 = vmatprep.subr.mxu0 0.0
      %972 = vmatpush1.msra.mxu0 0.0
      %973 = vmatprep.subr.mxu0 0.0
      %974 = vmatpush1.msra.mxu0 0.0
      %975 = vmatprep.subr.mxu0 0.0
      %976 = vmatpush1.msra.mxu0 0.0
      %977 = vmatprep.subr.mxu0 0.0
      %978 = vmatpush1.msra.mxu0 0.0
      %979 = vmatprep.subr.mxu0 0.0
      %980 = vmatpush1.msra.mxu0 0.0
      %981 = vmatprep.subr.mxu0 0.0
      %982 = vmatpush1.msra.mxu0 0.0
      %983 = vmatprep.subr.mxu0 0.0
      %984 = vmatpush1.msra.mxu0 0.0
      %985 = vmatprep.subr.mxu0 0.0
      %986 = vmatpush1.msra.mxu0 0.0
      %987 = vmatprep.subr.mxu0 0.0
      %988 = vmatpush1.msra.mxu0 0.0
      %989 = vmatprep.subr.mxu0 0.0
      %990 = vmatpush1.msra.mxu0 0.0
      %991 = vmatprep.subr.mxu0 0.0
      %992 = vmatpush1.msra.mxu0 0.0
      %993 = vmatprep.subr.mxu0 0.0
      %994 = vmatpush1.msra.mxu0 0.0
      %995 = vmatprep.subr.mxu0 0.0
      %996 = vmatpush1.msra.mxu0 0.0
      %997 = vmatprep.subr.mxu0 0.0
      %998 = vmatpush1.msra.mxu0 0.0
      %999 = vmatprep.subr.mxu0 0.0
      %1000 = vmatpush1.msra.mxu0 0.0
      %1001 = vmatprep.subr.mxu0 0.0
      %1002 = vmatpush1.msra.mxu0 0.0
      %1003 = vmatprep.mubr.f32.mxu0 0.0
      %1004 = vmatmul.mubr.f32.gmra.mrb[0].mxu0 %v935
      %v1005 = vpop.f32.mrb[0].mxu0
      %v1006 = vadd.f32 0.0, %v1005
      %v1007 = vpop.f32.mrb[0].mxu0
      %1008 = vdwg.mxu0
      %v1009 = vadd.f32 %v918, %v1006
      %v1010 = vadd.f32 %v1009, %v485
      %v1011 = vmax.f32 %v1010, 0.0
      %v1013 = vcombine.high %v1011, %v1011
      %v1015 = vunpack.c.l.s4 1966171168
      %v1016 = vunpack.c.0.s8 %v1015
      %v1017 = vlaneseq
      %v1018 = vshrl.u32 %v1017, 7
      %v1019 = vsub.s32 %v1016, %v1018
      %v1020 = vrot.slane %v1011, %v1019
      %v1022 = vunpack.c.l.s4 1966171168
      %v1023 = vunpack.c.0.s8 %v1022
      %v1024 = vlaneseq
      %v1025 = vshrl.u32 %v1024, 7
      %v1026 = vsub.s32 %v1023, %v1025
      %v1027 = vrot.slane %v1013, %v1026
      %v1028 = vcombine.high %v1020, %v1020
      %v1029 = vcombine.high %v1027, %v1027
      %v1031 = vunpack.c.l.s4 1966171168
      %v1032 = vunpack.c.0.s8 %v1031
      %v1033 = vlaneseq
      %v1034 = vshrl.u32 %v1033, 7
      %v1035 = vsub.s32 %v1032, %v1034
      %v1036 = vrot.slane %v1020, %v1035
      %v1038 = vunpack.c.l.s4 1966171168
      %v1039 = vunpack.c.0.s8 %v1038
      %v1040 = vlaneseq
      %v1041 = vshrl.u32 %v1040, 7
      %v1042 = vsub.s32 %v1039, %v1041
      %v1043 = vrot.slane %v1027, %v1042
      %v1045 = vunpack.c.l.s4 1966171168
      %v1046 = vunpack.c.0.s8 %v1045
      %v1047 = vlaneseq
      %v1048 = vshrl.u32 %v1047, 7
      %v1049 = vsub.s32 %v1046, %v1048
      %v1050 = vrot.slane %v1028, %v1049
      %v1052 = vunpack.c.l.s4 1966171168
      %v1053 = vunpack.c.0.s8 %v1052
      %v1054 = vlaneseq
      %v1055 = vshrl.u32 %v1054, 7
      %v1056 = vsub.s32 %v1053, %v1055
      %v1057 = vrot.slane %v1029, %v1056
      %v1058 = vcombine.high %v1036, %v1036
      %v1059 = vcombine.high %v1043, %v1043
      %v1060 = vcombine.high %v1050, %v1050
      %v1061 = vcombine.high %v1057, %v1057
      %1070 = vst.msk [vmem:[%s201 + $0x1] sm:$0x1] %vm547, %v1036
      %1071 = vst.msk [vmem:[%s201 + $0x9] sm:$0x1] %vm547, %v1050
      %1072 = vst.msk [vmem:[%s201 + $0x11] sm:$0x1] %vm547, %v1058
      %1073 = vst.msk [vmem:[%s201 + $0x19] sm:$0x1] %vm547, %v1060
      %1074 = vst.msk [vmem:[%s201 + $0x21] sm:$0x1] %vm547, %v1043
      %1075 = vst.msk [vmem:[%s201 + $0x29] sm:$0x1] %vm547, %v1057
      %1076 = vst.msk [vmem:[%s201 + $0x31] sm:$0x1] %vm547, %v1059
      %1077 = vst.msk [vmem:[%s201 + $0x39] sm:$0x1] %vm547, %v1061
      %v1078 = vld [vmem:[%s193 + $0x6] sm:$0x1]
      %v1079 = vld [vmem:[%s193 + $0x26] sm:$0x1]
      %v1080 = vld [vmem:[%s193 + $0x46] sm:$0x1]
      %v1081 = vld [vmem:[%s193 + $0x66] sm:$0x1]
      %v1082 = vld [vmem:[%s1] sm:$0xff]
      %v1083 = vld [vmem:[%s193 + $0x7] sm:$0x1]
      %v1084 = vld [vmem:[%s193 + $0x27] sm:$0x1]
      %v1085 = vld [vmem:[%s193 + $0x47] sm:$0x1]
      %v1086 = vld [vmem:[%s193 + $0x67] sm:$0x1]
      %v1087 = vld [vmem:[%s565] sm:$0xff]
      %v1092 = vrot.slane %v1084, 7
      %v1093 = vsel %vm220, %v1092, %v1083
      %v1094 = vrot.slane %v1085, 6
      %v1095 = vsel %vm223, %v1094, %v1093
      %v1096 = vrot.slane %v1086, 5
      %v1097 = vsel %vm226, %v1096, %v1095
      %v1099 = vsel %vm228, %v1087, 0
      %v1101 = vsel %vm232, %v1097, 0
      %1103 = vmatprep.subr.mxu0 0.0
      %1104 = vmatpush1.msra.mxu0 %v1101
      %1105 = vmatprep.subr.mxu0 0.0
      %1106 = vmatpush1.msra.mxu0 0.0
      %1107 = vmatprep.subr.mxu0 0.0
      %1108 = vmatpush1.msra.mxu0 0.0
      %1109 = vmatprep.subr.mxu0 0.0
      %1110 = vmatpush1.msra.mxu0 0.0
      %1111 = vmatprep.subr.mxu0 0.0
      %1112 = vmatpush1.msra.mxu0 0.0
      %1113 = vmatprep.subr.mxu0 0.0
      %1114 = vmatpush1.msra.mxu0 0.0
      %1115 = vmatprep.subr.mxu0 0.0
      %1116 = vmatpush1.msra.mxu0 0.0
      %1117 = vmatprep.subr.mxu0 0.0
      %1118 = vmatpush1.msra.mxu0 0.0
      %1119 = vmatprep.subr.mxu0 0.0
      %1120 = vmatpush1.msra.mxu0 0.0
      %1121 = vmatprep.subr.mxu0 0.0
      %1122 = vmatpush1.msra.mxu0 0.0
      %1123 = vmatprep.subr.mxu0 0.0
      %1124 = vmatpush1.msra.mxu0 0.0
      %1125 = vmatprep.subr.mxu0 0.0
      %1126 = vmatpush1.msra.mxu0 0.0
      %1127 = vmatprep.subr.mxu0 0.0
      %1128 = vmatpush1.msra.mxu0 0.0
      %1129 = vmatprep.subr.mxu0 0.0
      %1130 = vmatpush1.msra.mxu0 0.0
      %1131 = vmatprep.subr.mxu0 0.0
      %1132 = vmatpush1.msra.mxu0 0.0
      %1133 = vmatprep.subr.mxu0 0.0
      %1134 = vmatpush1.msra.mxu0 0.0
      %1135 = vmatprep.subr.mxu0 0.0
      %1136 = vmatpush1.msra.mxu0 0.0
      %1137 = vmatprep.subr.mxu0 0.0
      %1138 = vmatpush1.msra.mxu0 0.0
      %1139 = vmatprep.subr.mxu0 0.0
      %1140 = vmatpush1.msra.mxu0 0.0
      %1141 = vmatprep.subr.mxu0 0.0
      %1142 = vmatpush1.msra.mxu0 0.0
      %1143 = vmatprep.subr.mxu0 0.0
      %1144 = vmatpush1.msra.mxu0 0.0
      %1145 = vmatprep.subr.mxu0 0.0
      %1146 = vmatpush1.msra.mxu0 0.0
      %1147 = vmatprep.subr.mxu0 0.0
      %1148 = vmatpush1.msra.mxu0 0.0
      %1149 = vmatprep.subr.mxu0 0.0
      %1150 = vmatpush1.msra.mxu0 0.0
      %1151 = vmatprep.subr.mxu0 0.0
      %1152 = vmatpush1.msra.mxu0 0.0
      %1153 = vmatprep.subr.mxu0 0.0
      %1154 = vmatpush1.msra.mxu0 0.0
      %1155 = vmatprep.subr.mxu0 0.0
      %1156 = vmatpush1.msra.mxu0 0.0
      %1157 = vmatprep.subr.mxu0 0.0
      %1158 = vmatpush1.msra.mxu0 0.0
      %1159 = vmatprep.subr.mxu0 0.0
      %1160 = vmatpush1.msra.mxu0 0.0
      %1161 = vmatprep.subr.mxu0 0.0
      %1162 = vmatpush1.msra.mxu0 0.0
      %1163 = vmatprep.subr.mxu0 0.0
      %1164 = vmatpush1.msra.mxu0 0.0
      %1165 = vmatprep.subr.mxu0 0.0
      %1166 = vmatpush1.msra.mxu0 0.0
      %1167 = vmatprep.mubr.f32.mxu0 0.0
      %1168 = vmatmul.mubr.f32.gmra.mrb[0].mxu0 %v1099
      %v1169 = vpop.f32.mrb[0].mxu0
      %v1170 = vadd.f32 0.0, %v1169
      %v1171 = vpop.f32.mrb[0].mxu0
      %1172 = vdwg.mxu0
      %v1177 = vrot.slane %v1079, 7
      %v1178 = vsel %vm220, %v1177, %v1078
      %v1179 = vrot.slane %v1080, 6
      %v1180 = vsel %vm223, %v1179, %v1178
      %v1181 = vrot.slane %v1081, 5
      %v1182 = vsel %vm226, %v1181, %v1180
      %v1184 = vsel %vm228, %v1082, 0
      %v1186 = vsel %vm232, %v1182, 0
      %1188 = vmatprep.subr.mxu0 0.0
      %1189 = vmatpush1.msra.mxu0 %v1186
      %1190 = vmatprep.subr.mxu0 0.0
      %1191 = vmatpush1.msra.mxu0 0.0
      %1192 = vmatprep.subr.mxu0 0.0
      %1193 = vmatpush1.msra.mxu0 0.0
      %1194 = vmatprep.subr.mxu0 0.0
      %1195 = vmatpush1.msra.mxu0 0.0
      %1196 = vmatprep.subr.mxu0 0.0
      %1197 = vmatpush1.msra.mxu0 0.0
      %1198 = vmatprep.subr.mxu0 0.0
      %1199 = vmatpush1.msra.mxu0 0.0
      %1200 = vmatprep.subr.mxu0 0.0
      %1201 = vmatpush1.msra.mxu0 0.0
      %1202 = vmatprep.subr.mxu0 0.0
      %1203 = vmatpush1.msra.mxu0 0.0
      %1204 = vmatprep.subr.mxu0 0.0
      %1205 = vmatpush1.msra.mxu0 0.0
      %1206 = vmatprep.subr.mxu0 0.0
      %1207 = vmatpush1.msra.mxu0 0.0
      %1208 = vmatprep.subr.mxu0 0.0
      %1209 = vmatpush1.msra.mxu0 0.0
      %1210 = vmatprep.subr.mxu0 0.0
      %1211 = vmatpush1.msra.mxu0 0.0
      %1212 = vmatprep.subr.mxu0 0.0
      %1213 = vmatpush1.msra.mxu0 0.0
      %1214 = vmatprep.subr.mxu0 0.0
      %1215 = vmatpush1.msra.mxu0 0.0
      %1216 = vmatprep.subr.mxu0 0.0
      %1217 = vmatpush1.msra.mxu0 0.0
      %1218 = vmatprep.subr.mxu0 0.0
      %1219 = vmatpush1.msra.mxu0 0.0
      %1220 = vmatprep.subr.mxu0 0.0
      %1221 = vmatpush1.msra.mxu0 0.0
      %1222 = vmatprep.subr.mxu0 0.0
      %1223 = vmatpush1.msra.mxu0 0.0
      %1224 = vmatprep.subr.mxu0 0.0
      %1225 = vmatpush1.msra.mxu0 0.0
      %1226 = vmatprep.subr.mxu0 0.0
      %1227 = vmatpush1.msra.mxu0 0.0
      %1228 = vmatprep.subr.mxu0 0.0
      %1229 = vmatpush1.msra.mxu0 0.0
      %1230 = vmatprep.subr.mxu0 0.0
      %1231 = vmatpush1.msra.mxu0 0.0
      %1232 = vmatprep.subr.mxu0 0.0
      %1233 = vmatpush1.msra.mxu0 0.0
      %1234 = vmatprep.subr.mxu0 0.0
      %1235 = vmatpush1.msra.mxu0 0.0
      %1236 = vmatprep.subr.mxu0 0.0
      %1237 = vmatpush1.msra.mxu0 0.0
      %1238 = vmatprep.subr.mxu0 0.0
      %1239 = vmatpush1.msra.mxu0 0.0
      %1240 = vmatprep.subr.mxu0 0.0
      %1241 = vmatpush1.msra.mxu0 0.0
      %1242 = vmatprep.subr.mxu0 0.0
      %1243 = vmatpush1.msra.mxu0 0.0
      %1244 = vmatprep.subr.mxu0 0.0
      %1245 = vmatpush1.msra.mxu0 0.0
      %1246 = vmatprep.subr.mxu0 0.0
      %1247 = vmatpush1.msra.mxu0 0.0
      %1248 = vmatprep.subr.mxu0 0.0
      %1249 = vmatpush1.msra.mxu0 0.0
      %1250 = vmatprep.subr.mxu0 0.0
      %1251 = vmatpush1.msra.mxu0 0.0
      %1252 = vmatprep.mubr.f32.mxu0 0.0
      %1253 = vmatmul.mubr.f32.gmra.mrb[0].mxu0 %v1184
      %v1254 = vpop.f32.mrb[0].mxu0
      %v1255 = vadd.f32 %v1170, %v1254
      %v1256 = vpop.f32.mrb[0].mxu0
      %1257 = vdwg.mxu0
      %v1258 = vld [vmem:[%s193 + $0x8] sm:$0x1]
      %v1259 = vld [vmem:[%s193 + $0x28] sm:$0x1]
      %v1260 = vld [vmem:[%s193 + $0x48] sm:$0x1]
      %v1261 = vld [vmem:[%s193 + $0x68] sm:$0x1]
      %v1262 = vld [vmem:[%s207] sm:$0xff]
      %v1267 = vrot.slane %v1259, 7
      %v1268 = vsel %vm220, %v1267, %v1258
      %v1269 = vrot.slane %v1260, 6
      %v1270 = vsel %vm223, %v1269, %v1268
      %v1271 = vrot.slane %v1261, 5
      %v1272 = vsel %vm226, %v1271, %v1270
      %v1274 = vsel %vm228, %v1262, 0
      %v1276 = vsel %vm232, %v1272, 0
      %1278 = vmatprep.subr.mxu0 0.0
      %1279 = vmatpush1.msra.mxu0 %v1276
      %1280 = vmatprep.subr.mxu0 0.0
      %1281 = vmatpush1.msra.mxu0 0.0
      %1282 = vmatprep.subr.mxu0 0.0
      %1283 = vmatpush1.msra.mxu0 0.0
      %1284 = vmatprep.subr.mxu0 0.0
      %1285 = vmatpush1.msra.mxu0 0.0
      %1286 = vmatprep.subr.mxu0 0.0
      %1287 = vmatpush1.msra.mxu0 0.0
      %1288 = vmatprep.subr.mxu0 0.0
      %1289 = vmatpush1.msra.mxu0 0.0
      %1290 = vmatprep.subr.mxu0 0.0
      %1291 = vmatpush1.msra.mxu0 0.0
      %1292 = vmatprep.subr.mxu0 0.0
      %1293 = vmatpush1.msra.mxu0 0.0
      %1294 = vmatprep.subr.mxu0 0.0
      %1295 = vmatpush1.msra.mxu0 0.0
      %1296 = vmatprep.subr.mxu0 0.0
      %1297 = vmatpush1.msra.mxu0 0.0
      %1298 = vmatprep.subr.mxu0 0.0
      %1299 = vmatpush1.msra.mxu0 0.0
      %1300 = vmatprep.subr.mxu0 0.0
      %1301 = vmatpush1.msra.mxu0 0.0
      %1302 = vmatprep.subr.mxu0 0.0
      %1303 = vmatpush1.msra.mxu0 0.0
      %1304 = vmatprep.subr.mxu0 0.0
      %1305 = vmatpush1.msra.mxu0 0.0
      %1306 = vmatprep.subr.mxu0 0.0
      %1307 = vmatpush1.msra.mxu0 0.0
      %1308 = vmatprep.subr.mxu0 0.0
      %1309 = vmatpush1.msra.mxu0 0.0
      %1310 = vmatprep.subr.mxu0 0.0
      %1311 = vmatpush1.msra.mxu0 0.0
      %1312 = vmatprep.subr.mxu0 0.0
      %1313 = vmatpush1.msra.mxu0 0.0
      %1314 = vmatprep.subr.mxu0 0.0
      %1315 = vmatpush1.msra.mxu0 0.0
      %1316 = vmatprep.subr.mxu0 0.0
      %1317 = vmatpush1.msra.mxu0 0.0
      %1318 = vmatprep.subr.mxu0 0.0
      %1319 = vmatpush1.msra.mxu0 0.0
      %1320 = vmatprep.subr.mxu0 0.0
      %1321 = vmatpush1.msra.mxu0 0.0
      %1322 = vmatprep.subr.mxu0 0.0
      %1323 = vmatpush1.msra.mxu0 0.0
      %1324 = vmatprep.subr.mxu0 0.0
      %1325 = vmatpush1.msra.mxu0 0.0
      %1326 = vmatprep.subr.mxu0 0.0
      %1327 = vmatpush1.msra.mxu0 0.0
      %1328 = vmatprep.subr.mxu0 0.0
      %1329 = vmatpush1.msra.mxu0 0.0
      %1330 = vmatprep.subr.mxu0 0.0
      %1331 = vmatpush1.msra.mxu0 0.0
      %1332 = vmatprep.subr.mxu0 0.0
      %1333 = vmatpush1.msra.mxu0 0.0
      %1334 = vmatprep.subr.mxu0 0.0
      %1335 = vmatpush1.msra.mxu0 0.0
      %1336 = vmatprep.subr.mxu0 0.0
      %1337 = vmatpush1.msra.mxu0 0.0
      %1338 = vmatprep.subr.mxu0 0.0
      %1339 = vmatpush1.msra.mxu0 0.0
      %1340 = vmatprep.subr.mxu0 0.0
      %1341 = vmatpush1.msra.mxu0 0.0
      %1342 = vmatprep.mubr.f32.mxu0 0.0
      %1343 = vmatmul.mubr.f32.gmra.mrb[0].mxu0 %v1274
      %v1344 = vpop.f32.mrb[0].mxu0
      %v1345 = vadd.f32 0.0, %v1344
      %v1346 = vpop.f32.mrb[0].mxu0
      %1347 = vdwg.mxu0
      %v1348 = vadd.f32 %v1255, %v1345
      %v1349 = vld [vmem:[%s193 + $0x9] sm:$0x1]
      %v1350 = vld [vmem:[%s193 + $0x29] sm:$0x1]
      %v1351 = vld [vmem:[%s193 + $0x49] sm:$0x1]
      %v1352 = vld [vmem:[%s193 + $0x69] sm:$0x1]
      %v1353 = vld [vmem:[%s213] sm:$0xff]
      %v1358 = vrot.slane %v1350, 7
      %v1359 = vsel %vm220, %v1358, %v1349
      %v1360 = vrot.slane %v1351, 6
      %v1361 = vsel %vm223, %v1360, %v1359
      %v1362 = vrot.slane %v1352, 5
      %v1363 = vsel %vm226, %v1362, %v1361
      %v1365 = vsel %vm228, %v1353, 0
      %v1367 = vsel %vm232, %v1363, 0
      %1369 = vmatprep.subr.mxu0 0.0
      %1370 = vmatpush1.msra.mxu0 %v1367
      %1371 = vmatprep.subr.mxu0 0.0
      %1372 = vmatpush1.msra.mxu0 0.0
      %1373 = vmatprep.subr.mxu0 0.0
      %1374 = vmatpush1.msra.mxu0 0.0
      %1375 = vmatprep.subr.mxu0 0.0
      %1376 = vmatpush1.msra.mxu0 0.0
      %1377 = vmatprep.subr.mxu0 0.0
      %1378 = vmatpush1.msra.mxu0 0.0
      %1379 = vmatprep.subr.mxu0 0.0
      %1380 = vmatpush1.msra.mxu0 0.0
      %1381 = vmatprep.subr.mxu0 0.0
      %1382 = vmatpush1.msra.mxu0 0.0
      %1383 = vmatprep.subr.mxu0 0.0
      %1384 = vmatpush1.msra.mxu0 0.0
      %1385 = vmatprep.subr.mxu0 0.0
      %1386 = vmatpush1.msra.mxu0 0.0
      %1387 = vmatprep.subr.mxu0 0.0
      %1388 = vmatpush1.msra.mxu0 0.0
      %1389 = vmatprep.subr.mxu0 0.0
      %1390 = vmatpush1.msra.mxu0 0.0
      %1391 = vmatprep.subr.mxu0 0.0
      %1392 = vmatpush1.msra.mxu0 0.0
      %1393 = vmatprep.subr.mxu0 0.0
      %1394 = vmatpush1.msra.mxu0 0.0
      %1395 = vmatprep.subr.mxu0 0.0
      %1396 = vmatpush1.msra.mxu0 0.0
      %1397 = vmatprep.subr.mxu0 0.0
      %1398 = vmatpush1.msra.mxu0 0.0
      %1399 = vmatprep.subr.mxu0 0.0
      %1400 = vmatpush1.msra.mxu0 0.0
      %1401 = vmatprep.subr.mxu0 0.0
      %1402 = vmatpush1.msra.mxu0 0.0
      %1403 = vmatprep.subr.mxu0 0.0
      %1404 = vmatpush1.msra.mxu0 0.0
      %1405 = vmatprep.subr.mxu0 0.0
      %1406 = vmatpush1.msra.mxu0 0.0
      %1407 = vmatprep.subr.mxu0 0.0
      %1408 = vmatpush1.msra.mxu0 0.0
      %1409 = vmatprep.subr.mxu0 0.0
      %1410 = vmatpush1.msra.mxu0 0.0
      %1411 = vmatprep.subr.mxu0 0.0
      %1412 = vmatpush1.msra.mxu0 0.0
      %1413 = vmatprep.subr.mxu0 0.0
      %1414 = vmatpush1.msra.mxu0 0.0
      %1415 = vmatprep.subr.mxu0 0.0
      %1416 = vmatpush1.msra.mxu0 0.0
      %1417 = vmatprep.subr.mxu0 0.0
      %1418 = vmatpush1.msra.mxu0 0.0
      %1419 = vmatprep.subr.mxu0 0.0
      %1420 = vmatpush1.msra.mxu0 0.0
      %1421 = vmatprep.subr.mxu0 0.0
      %1422 = vmatpush1.msra.mxu0 0.0
      %1423 = vmatprep.subr.mxu0 0.0
      %1424 = vmatpush1.msra.mxu0 0.0
      %1425 = vmatprep.subr.mxu0 0.0
      %1426 = vmatpush1.msra.mxu0 0.0
      %1427 = vmatprep.subr.mxu0 0.0
      %1428 = vmatpush1.msra.mxu0 0.0
      %1429 = vmatprep.subr.mxu0 0.0
      %1430 = vmatpush1.msra.mxu0 0.0
      %1431 = vmatprep.subr.mxu0 0.0
      %1432 = vmatpush1.msra.mxu0 0.0
      %1433 = vmatprep.mubr.f32.mxu0 0.0
      %1434 = vmatmul.mubr.f32.gmra.mrb[0].mxu0 %v1365
      %v1435 = vpop.f32.mrb[0].mxu0
      %v1436 = vadd.f32 0.0, %v1435
      %v1437 = vpop.f32.mrb[0].mxu0
      %1438 = vdwg.mxu0
      %v1439 = vadd.f32 %v1348, %v1436
      %v1440 = vld [vmem:[%s193 + $0xa] sm:$0x1]
      %v1441 = vld [vmem:[%s193 + $0x2a] sm:$0x1]
      %v1442 = vld [vmem:[%s193 + $0x4a] sm:$0x1]
      %v1443 = vld [vmem:[%s193 + $0x6a] sm:$0x1]
      %v1444 = vld [vmem:[%s394] sm:$0xff]
      %v1449 = vrot.slane %v1441, 7
      %v1450 = vsel %vm220, %v1449, %v1440
      %v1451 = vrot.slane %v1442, 6
      %v1452 = vsel %vm223, %v1451, %v1450
      %v1453 = vrot.slane %v1443, 5
      %v1454 = vsel %vm226, %v1453, %v1452
      %v1456 = vsel %vm228, %v1444, 0
      %v1458 = vsel %vm232, %v1454, 0
      %1460 = vmatprep.subr.mxu0 0.0
      %1461 = vmatpush1.msra.mxu0 %v1458
      %1462 = vmatprep.subr.mxu0 0.0
      %1463 = vmatpush1.msra.mxu0 0.0
      %1464 = vmatprep.subr.mxu0 0.0
      %1465 = vmatpush1.msra.mxu0 0.0
      %1466 = vmatprep.subr.mxu0 0.0
      %1467 = vmatpush1.msra.mxu0 0.0
      %1468 = vmatprep.subr.mxu0 0.0
      %1469 = vmatpush1.msra.mxu0 0.0
      %1470 = vmatprep.subr.mxu0 0.0
      %1471 = vmatpush1.msra.mxu0 0.0
      %1472 = vmatprep.subr.mxu0 0.0
      %1473 = vmatpush1.msra.mxu0 0.0
      %1474 = vmatprep.subr.mxu0 0.0
      %1475 = vmatpush1.msra.mxu0 0.0
      %1476 = vmatprep.subr.mxu0 0.0
      %1477 = vmatpush1.msra.mxu0 0.0
      %1478 = vmatprep.subr.mxu0 0.0
      %1479 = vmatpush1.msra.mxu0 0.0
      %1480 = vmatprep.subr.mxu0 0.0
      %1481 = vmatpush1.msra.mxu0 0.0
      %1482 = vmatprep.subr.mxu0 0.0
      %1483 = vmatpush1.msra.mxu0 0.0
      %1484 = vmatprep.subr.mxu0 0.0
      %1485 = vmatpush1.msra.mxu0 0.0
      %1486 = vmatprep.subr.mxu0 0.0
      %1487 = vmatpush1.msra.mxu0 0.0
      %1488 = vmatprep.subr.mxu0 0.0
      %1489 = vmatpush1.msra.mxu0 0.0
      %1490 = vmatprep.subr.mxu0 0.0
      %1491 = vmatpush1.msra.mxu0 0.0
      %1492 = vmatprep.subr.mxu0 0.0
      %1493 = vmatpush1.msra.mxu0 0.0
      %1494 = vmatprep.subr.mxu0 0.0
      %1495 = vmatpush1.msra.mxu0 0.0
      %1496 = vmatprep.subr.mxu0 0.0
      %1497 = vmatpush1.msra.mxu0 0.0
      %1498 = vmatprep.subr.mxu0 0.0
      %1499 = vmatpush1.msra.mxu0 0.0
      %1500 = vmatprep.subr.mxu0 0.0
      %1501 = vmatpush1.msra.mxu0 0.0
      %1502 = vmatprep.subr.mxu0 0.0
      %1503 = vmatpush1.msra.mxu0 0.0
      %1504 = vmatprep.subr.mxu0 0.0
      %1505 = vmatpush1.msra.mxu0 0.0
      %1506 = vmatprep.subr.mxu0 0.0
      %1507 = vmatpush1.msra.mxu0 0.0
      %1508 = vmatprep.subr.mxu0 0.0
      %1509 = vmatpush1.msra.mxu0 0.0
      %1510 = vmatprep.subr.mxu0 0.0
      %1511 = vmatpush1.msra.mxu0 0.0
      %1512 = vmatprep.subr.mxu0 0.0
      %1513 = vmatpush1.msra.mxu0 0.0
      %1514 = vmatprep.subr.mxu0 0.0
      %1515 = vmatpush1.msra.mxu0 0.0
      %1516 = vmatprep.subr.mxu0 0.0
      %1517 = vmatpush1.msra.mxu0 0.0
      %1518 = vmatprep.subr.mxu0 0.0
      %1519 = vmatpush1.msra.mxu0 0.0
      %1520 = vmatprep.subr.mxu0 0.0
      %1521 = vmatpush1.msra.mxu0 0.0
      %1522 = vmatprep.subr.mxu0 0.0
      %1523 = vmatpush1.msra.mxu0 0.0
      %1524 = vmatprep.mubr.f32.mxu0 0.0
      %1525 = vmatmul.mubr.f32.gmra.mrb[0].mxu0 %v1456
      %v1526 = vpop.f32.mrb[0].mxu0
      %v1527 = vadd.f32 0.0, %v1526
      %v1528 = vpop.f32.mrb[0].mxu0
      %1529 = vdwg.mxu0
      %v1530 = vadd.f32 %v1439, %v1527
      %v1531 = vadd.f32 %v1530, %v485
      %v1532 = vmax.f32 %v1531, 0.0
      %v1534 = vcombine.high %v1532, %v1532
      %v1536 = vunpack.c.l.s4 1966171168
      %v1537 = vunpack.c.0.s8 %v1536
      %v1538 = vlaneseq
      %v1539 = vshrl.u32 %v1538, 7
      %v1540 = vsub.s32 %v1537, %v1539
      %v1541 = vrot.slane %v1532, %v1540
      %v1543 = vunpack.c.l.s4 1966171168
      %v1544 = vunpack.c.0.s8 %v1543
      %v1545 = vlaneseq
      %v1546 = vshrl.u32 %v1545, 7
      %v1547 = vsub.s32 %v1544, %v1546
      %v1548 = vrot.slane %v1534, %v1547
      %v1549 = vcombine.high %v1541, %v1541
      %v1550 = vcombine.high %v1548, %v1548
      %v1552 = vunpack.c.l.s4 1966171168
      %v1553 = vunpack.c.0.s8 %v1552
      %v1554 = vlaneseq
      %v1555 = vshrl.u32 %v1554, 7
      %v1556 = vsub.s32 %v1553, %v1555
      %v1557 = vrot.slane %v1541, %v1556
      %v1559 = vunpack.c.l.s4 1966171168
      %v1560 = vunpack.c.0.s8 %v1559
      %v1561 = vlaneseq
      %v1562 = vshrl.u32 %v1561, 7
      %v1563 = vsub.s32 %v1560, %v1562
      %v1564 = vrot.slane %v1548, %v1563
      %v1566 = vunpack.c.l.s4 1966171168
      %v1567 = vunpack.c.0.s8 %v1566
      %v1568 = vlaneseq
      %v1569 = vshrl.u32 %v1568, 7
      %v1570 = vsub.s32 %v1567, %v1569
      %v1571 = vrot.slane %v1549, %v1570
      %v1573 = vunpack.c.l.s4 1966171168
      %v1574 = vunpack.c.0.s8 %v1573
      %v1575 = vlaneseq
      %v1576 = vshrl.u32 %v1575, 7
      %v1577 = vsub.s32 %v1574, %v1576
      %v1578 = vrot.slane %v1550, %v1577
      %v1579 = vcombine.high %v1557, %v1557
      %v1580 = vcombine.high %v1564, %v1564
      %v1581 = vcombine.high %v1571, %v1571
      %v1582 = vcombine.high %v1578, %v1578
      %1591 = vst.msk [vmem:[%s201 + $0x2] sm:$0x1] %vm547, %v1557
      %1592 = vst.msk [vmem:[%s201 + $0xa] sm:$0x1] %vm547, %v1571
      %1593 = vst.msk [vmem:[%s201 + $0x12] sm:$0x1] %vm547, %v1579
      %1594 = vst.msk [vmem:[%s201 + $0x1a] sm:$0x1] %vm547, %v1581
      %1595 = vst.msk [vmem:[%s201 + $0x22] sm:$0x1] %vm547, %v1564
      %1596 = vst.msk [vmem:[%s201 + $0x2a] sm:$0x1] %vm547, %v1578
      %1597 = vst.msk [vmem:[%s201 + $0x32] sm:$0x1] %vm547, %v1580
      %1598 = vst.msk [vmem:[%s201 + $0x3a] sm:$0x1] %vm547, %v1582
      %v1599 = vld [vmem:[%s193 + $0xa] sm:$0x1]
      %v1600 = vld [vmem:[%s193 + $0x2a] sm:$0x1]
      %v1601 = vld [vmem:[%s193 + $0x4a] sm:$0x1]
      %v1602 = vld [vmem:[%s193 + $0x6a] sm:$0x1]
      %v1603 = vld [vmem:[%s1] sm:$0xff]
      %v1604 = vld [vmem:[%s193 + $0xb] sm:$0x1]
      %v1605 = vld [vmem:[%s193 + $0x2b] sm:$0x1]
      %v1606 = vld [vmem:[%s193 + $0x4b] sm:$0x1]
      %v1607 = vld [vmem:[%s193 + $0x6b] sm:$0x1]
      %v1608 = vld [vmem:[%s565] sm:$0xff]
      %v1613 = vrot.slane %v1605, 7
      %v1614 = vsel %vm220, %v1613, %v1604
      %v1615 = vrot.slane %v1606, 6
      %v1616 = vsel %vm223, %v1615, %v1614
      %v1617 = vrot.slane %v1607, 5
      %v1618 = vsel %vm226, %v1617, %v1616
      %v1620 = vsel %vm228, %v1608, 0
      %v1622 = vsel %vm232, %v1618, 0
      %1624 = vmatprep.subr.mxu0 0.0
      %1625 = vmatpush1.msra.mxu0 %v1622
      %1626 = vmatprep.subr.mxu0 0.0
      %1627 = vmatpush1.msra.mxu0 0.0
      %1628 = vmatprep.subr.mxu0 0.0
      %1629 = vmatpush1.msra.mxu0 0.0
      %1630 = vmatprep.subr.mxu0 0.0
      %1631 = vmatpush1.msra.mxu0 0.0
      %1632 = vmatprep.subr.mxu0 0.0
      %1633 = vmatpush1.msra.mxu0 0.0
      %1634 = vmatprep.subr.mxu0 0.0
      %1635 = vmatpush1.msra.mxu0 0.0
      %1636 = vmatprep.subr.mxu0 0.0
      %1637 = vmatpush1.msra.mxu0 0.0
      %1638 = vmatprep.subr.mxu0 0.0
      %1639 = vmatpush1.msra.mxu0 0.0
      %1640 = vmatprep.subr.mxu0 0.0
      %1641 = vmatpush1.msra.mxu0 0.0
      %1642 = vmatprep.subr.mxu0 0.0
      %1643 = vmatpush1.msra.mxu0 0.0
      %1644 = vmatprep.subr.mxu0 0.0
      %1645 = vmatpush1.msra.mxu0 0.0
      %1646 = vmatprep.subr.mxu0 0.0
      %1647 = vmatpush1.msra.mxu0 0.0
      %1648 = vmatprep.subr.mxu0 0.0
      %1649 = vmatpush1.msra.mxu0 0.0
      %1650 = vmatprep.subr.mxu0 0.0
      %1651 = vmatpush1.msra.mxu0 0.0
      %1652 = vmatprep.subr.mxu0 0.0
      %1653 = vmatpush1.msra.mxu0 0.0
      %1654 = vmatprep.subr.mxu0 0.0
      %1655 = vmatpush1.msra.mxu0 0.0
      %1656 = vmatprep.subr.mxu0 0.0
      %1657 = vmatpush1.msra.mxu0 0.0
      %1658 = vmatprep.subr.mxu0 0.0
      %1659 = vmatpush1.msra.mxu0 0.0
      %1660 = vmatprep.subr.mxu0 0.0
      %1661 = vmatpush1.msra.mxu0 0.0
      %1662 = vmatprep.subr.mxu0 0.0
      %1663 = vmatpush1.msra.mxu0 0.0
      %1664 = vmatprep.subr.mxu0 0.0
      %1665 = vmatpush1.msra.mxu0 0.0
      %1666 = vmatprep.subr.mxu0 0.0
      %1667 = vmatpush1.msra.mxu0 0.0
      %1668 = vmatprep.subr.mxu0 0.0
      %1669 = vmatpush1.msra.mxu0 0.0
      %1670 = vmatprep.subr.mxu0 0.0
      %1671 = vmatpush1.msra.mxu0 0.0
      %1672 = vmatprep.subr.mxu0 0.0
      %1673 = vmatpush1.msra.mxu0 0.0
      %1674 = vmatprep.subr.mxu0 0.0
      %1675 = vmatpush1.msra.mxu0 0.0
      %1676 = vmatprep.subr.mxu0 0.0
      %1677 = vmatpush1.msra.mxu0 0.0
      %1678 = vmatprep.subr.mxu0 0.0
      %1679 = vmatpush1.msra.mxu0 0.0
      %1680 = vmatprep.subr.mxu0 0.0
      %1681 = vmatpush1.msra.mxu0 0.0
      %1682 = vmatprep.subr.mxu0 0.0
      %1683 = vmatpush1.msra.mxu0 0.0
      %1684 = vmatprep.subr.mxu0 0.0
      %1685 = vmatpush1.msra.mxu0 0.0
      %1686 = vmatprep.subr.mxu0 0.0
      %1687 = vmatpush1.msra.mxu0 0.0
      %1688 = vmatprep.mubr.f32.mxu0 0.0
      %1689 = vmatmul.mubr.f32.gmra.mrb[0].mxu0 %v1620
      %v1690 = vpop.f32.mrb[0].mxu0
      %v1691 = vadd.f32 0.0, %v1690
      %v1692 = vpop.f32.mrb[0].mxu0
      %1693 = vdwg.mxu0
      %v1698 = vrot.slane %v1600, 7
      %v1699 = vsel %vm220, %v1698, %v1599
      %v1700 = vrot.slane %v1601, 6
      %v1701 = vsel %vm223, %v1700, %v1699
      %v1702 = vrot.slane %v1602, 5
      %v1703 = vsel %vm226, %v1702, %v1701
      %v1705 = vsel %vm228, %v1603, 0
      %v1707 = vsel %vm232, %v1703, 0
      %1709 = vmatprep.subr.mxu0 0.0
      %1710 = vmatpush1.msra.mxu0 %v1707
      %1711 = vmatprep.subr.mxu0 0.0
      %1712 = vmatpush1.msra.mxu0 0.0
      %1713 = vmatprep.subr.mxu0 0.0
      %1714 = vmatpush1.msra.mxu0 0.0
      %1715 = vmatprep.subr.mxu0 0.0
      %1716 = vmatpush1.msra.mxu0 0.0
      %1717 = vmatprep.subr.mxu0 0.0
      %1718 = vmatpush1.msra.mxu0 0.0
      %1719 = vmatprep.subr.mxu0 0.0
      %1720 = vmatpush1.msra.mxu0 0.0
      %1721 = vmatprep.subr.mxu0 0.0
      %1722 = vmatpush1.msra.mxu0 0.0
      %1723 = vmatprep.subr.mxu0 0.0
      %1724 = vmatpush1.msra.mxu0 0.0
      %1725 = vmatprep.subr.mxu0 0.0
      %1726 = vmatpush1.msra.mxu0 0.0
      %1727 = vmatprep.subr.mxu0 0.0
      %1728 = vmatpush1.msra.mxu0 0.0
      %1729 = vmatprep.subr.mxu0 0.0
      %1730 = vmatpush1.msra.mxu0 0.0
      %1731 = vmatprep.subr.mxu0 0.0
      %1732 = vmatpush1.msra.mxu0 0.0
      %1733 = vmatprep.subr.mxu0 0.0
      %1734 = vmatpush1.msra.mxu0 0.0
      %1735 = vmatprep.subr.mxu0 0.0
      %1736 = vmatpush1.msra.mxu0 0.0
      %1737 = vmatprep.subr.mxu0 0.0
      %1738 = vmatpush1.msra.mxu0 0.0
      %1739 = vmatprep.subr.mxu0 0.0
      %1740 = vmatpush1.msra.mxu0 0.0
      %1741 = vmatprep.subr.mxu0 0.0
      %1742 = vmatpush1.msra.mxu0 0.0
      %1743 = vmatprep.subr.mxu0 0.0
      %1744 = vmatpush1.msra.mxu0 0.0
      %1745 = vmatprep.subr.mxu0 0.0
      %1746 = vmatpush1.msra.mxu0 0.0
      %1747 = vmatprep.subr.mxu0 0.0
      %1748 = vmatpush1.msra.mxu0 0.0
      %1749 = vmatprep.subr.mxu0 0.0
      %1750 = vmatpush1.msra.mxu0 0.0
      %1751 = vmatprep.subr.mxu0 0.0
      %1752 = vmatpush1.msra.mxu0 0.0
      %1753 = vmatprep.subr.mxu0 0.0
      %1754 = vmatpush1.msra.mxu0 0.0
      %1755 = vmatprep.subr.mxu0 0.0
      %1756 = vmatpush1.msra.mxu0 0.0
      %1757 = vmatprep.subr.mxu0 0.0
      %1758 = vmatpush1.msra.mxu0 0.0
      %1759 = vmatprep.subr.mxu0 0.0
      %1760 = vmatpush1.msra.mxu0 0.0
      %1761 = vmatprep.subr.mxu0 0.0
      %1762 = vmatpush1.msra.mxu0 0.0
      %1763 = vmatprep.subr.mxu0 0.0
      %1764 = vmatpush1.msra.mxu0 0.0
      %1765 = vmatprep.subr.mxu0 0.0
      %1766 = vmatpush1.msra.mxu0 0.0
      %1767 = vmatprep.subr.mxu0 0.0
      %1768 = vmatpush1.msra.mxu0 0.0
      %1769 = vmatprep.subr.mxu0 0.0
      %1770 = vmatpush1.msra.mxu0 0.0
      %1771 = vmatprep.subr.mxu0 0.0
      %1772 = vmatpush1.msra.mxu0 0.0
      %1773 = vmatprep.mubr.f32.mxu0 0.0
      %1774 = vmatmul.mubr.f32.gmra.mrb[0].mxu0 %v1705
      %v1775 = vpop.f32.mrb[0].mxu0
      %v1776 = vadd.f32 %v1691, %v1775
      %v1777 = vpop.f32.mrb[0].mxu0
      %1778 = vdwg.mxu0
      %v1779 = vld [vmem:[%s193 + $0xc] sm:$0x1]
      %v1780 = vld [vmem:[%s193 + $0x2c] sm:$0x1]
      %v1781 = vld [vmem:[%s193 + $0x4c] sm:$0x1]
      %v1782 = vld [vmem:[%s193 + $0x6c] sm:$0x1]
      %v1783 = vld [vmem:[%s207] sm:$0xff]
      %v1788 = vrot.slane %v1780, 7
      %v1789 = vsel %vm220, %v1788, %v1779
      %v1790 = vrot.slane %v1781, 6
      %v1791 = vsel %vm223, %v1790, %v1789
      %v1792 = vrot.slane %v1782, 5
      %v1793 = vsel %vm226, %v1792, %v1791
      %v1795 = vsel %vm228, %v1783, 0
      %v1797 = vsel %vm232, %v1793, 0
      %1799 = vmatprep.subr.mxu0 0.0
      %1800 = vmatpush1.msra.mxu0 %v1797
      %1801 = vmatprep.subr.mxu0 0.0
      %1802 = vmatpush1.msra.mxu0 0.0
      %1803 = vmatprep.subr.mxu0 0.0
      %1804 = vmatpush1.msra.mxu0 0.0
      %1805 = vmatprep.subr.mxu0 0.0
      %1806 = vmatpush1.msra.mxu0 0.0
      %1807 = vmatprep.subr.mxu0 0.0
      %1808 = vmatpush1.msra.mxu0 0.0
      %1809 = vmatprep.subr.mxu0 0.0
      %1810 = vmatpush1.msra.mxu0 0.0
      %1811 = vmatprep.subr.mxu0 0.0
      %1812 = vmatpush1.msra.mxu0 0.0
      %1813 = vmatprep.subr.mxu0 0.0
      %1814 = vmatpush1.msra.mxu0 0.0
      %1815 = vmatprep.subr.mxu0 0.0
      %1816 = vmatpush1.msra.mxu0 0.0
      %1817 = vmatprep.subr.mxu0 0.0
      %1818 = vmatpush1.msra.mxu0 0.0
      %1819 = vmatprep.subr.mxu0 0.0
      %1820 = vmatpush1.msra.mxu0 0.0
      %1821 = vmatprep.subr.mxu0 0.0
      %1822 = vmatpush1.msra.mxu0 0.0
      %1823 = vmatprep.subr.mxu0 0.0
      %1824 = vmatpush1.msra.mxu0 0.0
      %1825 = vmatprep.subr.mxu0 0.0
      %1826 = vmatpush1.msra.mxu0 0.0
      %1827 = vmatprep.subr.mxu0 0.0
      %1828 = vmatpush1.msra.mxu0 0.0
      %1829 = vmatprep.subr.mxu0 0.0
      %1830 = vmatpush1.msra.mxu0 0.0
      %1831 = vmatprep.subr.mxu0 0.0
      %1832 = vmatpush1.msra.mxu0 0.0
      %1833 = vmatprep.subr.mxu0 0.0
      %1834 = vmatpush1.msra.mxu0 0.0
      %1835 = vmatprep.subr.mxu0 0.0
      %1836 = vmatpush1.msra.mxu0 0.0
      %1837 = vmatprep.subr.mxu0 0.0
      %1838 = vmatpush1.msra.mxu0 0.0
      %1839 = vmatprep.subr.mxu0 0.0
      %1840 = vmatpush1.msra.mxu0 0.0
      %1841 = vmatprep.subr.mxu0 0.0
      %1842 = vmatpush1.msra.mxu0 0.0
      %1843 = vmatprep.subr.mxu0 0.0
      %1844 = vmatpush1.msra.mxu0 0.0
      %1845 = vmatprep.subr.mxu0 0.0
      %1846 = vmatpush1.msra.mxu0 0.0
      %1847 = vmatprep.subr.mxu0 0.0
      %1848 = vmatpush1.msra.mxu0 0.0
      %1849 = vmatprep.subr.mxu0 0.0
      %1850 = vmatpush1.msra.mxu0 0.0
      %1851 = vmatprep.subr.mxu0 0.0
      %1852 = vmatpush1.msra.mxu0 0.0
      %1853 = vmatprep.subr.mxu0 0.0
      %1854 = vmatpush1.msra.mxu0 0.0
      %1855 = vmatprep.subr.mxu0 0.0
      %1856 = vmatpush1.msra.mxu0 0.0
      %1857 = vmatprep.subr.mxu0 0.0
      %1858 = vmatpush1.msra.mxu0 0.0
      %1859 = vmatprep.subr.mxu0 0.0
      %1860 = vmatpush1.msra.mxu0 0.0
      %1861 = vmatprep.subr.mxu0 0.0
      %1862 = vmatpush1.msra.mxu0 0.0
      %1863 = vmatprep.mubr.f32.mxu0 0.0
      %1864 = vmatmul.mubr.f32.gmra.mrb[0].mxu0 %v1795
      %v1865 = vpop.f32.mrb[0].mxu0
      %v1866 = vadd.f32 0.0, %v1865
      %v1867 = vpop.f32.mrb[0].mxu0
      %1868 = vdwg.mxu0
      %v1869 = vadd.f32 %v1776, %v1866
      %v1870 = vld [vmem:[%s193 + $0xd] sm:$0x1]
      %v1871 = vld [vmem:[%s193 + $0x2d] sm:$0x1]
      %v1872 = vld [vmem:[%s193 + $0x4d] sm:$0x1]
      %v1873 = vld [vmem:[%s193 + $0x6d] sm:$0x1]
      %v1874 = vld [vmem:[%s213] sm:$0xff]
      %v1879 = vrot.slane %v1871, 7
      %v1880 = vsel %vm220, %v1879, %v1870
      %v1881 = vrot.slane %v1872, 6
      %v1882 = vsel %vm223, %v1881, %v1880
      %v1883 = vrot.slane %v1873, 5
      %v1884 = vsel %vm226, %v1883, %v1882
      %v1886 = vsel %vm228, %v1874, 0
      %v1888 = vsel %vm232, %v1884, 0
      %1890 = vmatprep.subr.mxu0 0.0
      %1891 = vmatpush1.msra.mxu0 %v1888
      %1892 = vmatprep.subr.mxu0 0.0
      %1893 = vmatpush1.msra.mxu0 0.0
      %1894 = vmatprep.subr.mxu0 0.0
      %1895 = vmatpush1.msra.mxu0 0.0
      %1896 = vmatprep.subr.mxu0 0.0
      %1897 = vmatpush1.msra.mxu0 0.0
      %1898 = vmatprep.subr.mxu0 0.0
      %1899 = vmatpush1.msra.mxu0 0.0
      %1900 = vmatprep.subr.mxu0 0.0
      %1901 = vmatpush1.msra.mxu0 0.0
      %1902 = vmatprep.subr.mxu0 0.0
      %1903 = vmatpush1.msra.mxu0 0.0
      %1904 = vmatprep.subr.mxu0 0.0
      %1905 = vmatpush1.msra.mxu0 0.0
      %1906 = vmatprep.subr.mxu0 0.0
      %1907 = vmatpush1.msra.mxu0 0.0
      %1908 = vmatprep.subr.mxu0 0.0
      %1909 = vmatpush1.msra.mxu0 0.0
      %1910 = vmatprep.subr.mxu0 0.0
      %1911 = vmatpush1.msra.mxu0 0.0
      %1912 = vmatprep.subr.mxu0 0.0
      %1913 = vmatpush1.msra.mxu0 0.0
      %1914 = vmatprep.subr.mxu0 0.0
      %1915 = vmatpush1.msra.mxu0 0.0
      %1916 = vmatprep.subr.mxu0 0.0
      %1917 = vmatpush1.msra.mxu0 0.0
      %1918 = vmatprep.subr.mxu0 0.0
      %1919 = vmatpush1.msra.mxu0 0.0
      %1920 = vmatprep.subr.mxu0 0.0
      %1921 = vmatpush1.msra.mxu0 0.0
      %1922 = vmatprep.subr.mxu0 0.0
      %1923 = vmatpush1.msra.mxu0 0.0
      %1924 = vmatprep.subr.mxu0 0.0
      %1925 = vmatpush1.msra.mxu0 0.0
      %1926 = vmatprep.subr.mxu0 0.0
      %1927 = vmatpush1.msra.mxu0 0.0
      %1928 = vmatprep.subr.mxu0 0.0
      %1929 = vmatpush1.msra.mxu0 0.0
      %1930 = vmatprep.subr.mxu0 0.0
      %1931 = vmatpush1.msra.mxu0 0.0
      %1932 = vmatprep.subr.mxu0 0.0
      %1933 = vmatpush1.msra.mxu0 0.0
      %1934 = vmatprep.subr.mxu0 0.0
      %1935 = vmatpush1.msra.mxu0 0.0
      %1936 = vmatprep.subr.mxu0 0.0
      %1937 = vmatpush1.msra.mxu0 0.0
      %1938 = vmatprep.subr.mxu0 0.0
      %1939 = vmatpush1.msra.mxu0 0.0
      %1940 = vmatprep.subr.mxu0 0.0
      %1941 = vmatpush1.msra.mxu0 0.0
      %1942 = vmatprep.subr.mxu0 0.0
      %1943 = vmatpush1.msra.mxu0 0.0
      %1944 = vmatprep.subr.mxu0 0.0
      %1945 = vmatpush1.msra.mxu0 0.0
      %1946 = vmatprep.subr.mxu0 0.0
      %1947 = vmatpush1.msra.mxu0 0.0
      %1948 = vmatprep.subr.mxu0 0.0
      %1949 = vmatpush1.msra.mxu0 0.0
      %1950 = vmatprep.subr.mxu0 0.0
      %1951 = vmatpush1.msra.mxu0 0.0
      %1952 = vmatprep.subr.mxu0 0.0
      %1953 = vmatpush1.msra.mxu0 0.0
      %1954 = vmatprep.mubr.f32.mxu0 0.0
      %1955 = vmatmul.mubr.f32.gmra.mrb[0].mxu0 %v1886
      %v1956 = vpop.f32.mrb[0].mxu0
      %v1957 = vadd.f32 0.0, %v1956
      %v1958 = vpop.f32.mrb[0].mxu0
      %1959 = vdwg.mxu0
      %v1960 = vadd.f32 %v1869, %v1957
      %v1961 = vld [vmem:[%s193 + $0xe] sm:$0x1]
      %v1962 = vld [vmem:[%s193 + $0x2e] sm:$0x1]
      %v1963 = vld [vmem:[%s193 + $0x4e] sm:$0x1]
      %v1964 = vld [vmem:[%s193 + $0x6e] sm:$0x1]
      %v1965 = vld [vmem:[%s394] sm:$0xff]
      %v1970 = vrot.slane %v1962, 7
      %v1971 = vsel %vm220, %v1970, %v1961
      %v1972 = vrot.slane %v1963, 6
      %v1973 = vsel %vm223, %v1972, %v1971
      %v1974 = vrot.slane %v1964, 5
      %v1975 = vsel %vm226, %v1974, %v1973
      %v1977 = vsel %vm228, %v1965, 0
      %v1979 = vsel %vm232, %v1975, 0
      %1981 = vmatprep.subr.mxu0 0.0
      %1982 = vmatpush1.msra.mxu0 %v1979
      %1983 = vmatprep.subr.mxu0 0.0
      %1984 = vmatpush1.msra.mxu0 0.0
      %1985 = vmatprep.subr.mxu0 0.0
      %1986 = vmatpush1.msra.mxu0 0.0
      %1987 = vmatprep.subr.mxu0 0.0
      %1988 = vmatpush1.msra.mxu0 0.0
      %1989 = vmatprep.subr.mxu0 0.0
      %1990 = vmatpush1.msra.mxu0 0.0
      %1991 = vmatprep.subr.mxu0 0.0
      %1992 = vmatpush1.msra.mxu0 0.0
      %1993 = vmatprep.subr.mxu0 0.0
      %1994 = vmatpush1.msra.mxu0 0.0
      %1995 = vmatprep.subr.mxu0 0.0
      %1996 = vmatpush1.msra.mxu0 0.0
      %1997 = vmatprep.subr.mxu0 0.0
      %1998 = vmatpush1.msra.mxu0 0.0
      %1999 = vmatprep.subr.mxu0 0.0
      %2000 = vmatpush1.msra.mxu0 0.0
      %2001 = vmatprep.subr.mxu0 0.0
      %2002 = vmatpush1.msra.mxu0 0.0
      %2003 = vmatprep.subr.mxu0 0.0
      %2004 = vmatpush1.msra.mxu0 0.0
      %2005 = vmatprep.subr.mxu0 0.0
      %2006 = vmatpush1.msra.mxu0 0.0
      %2007 = vmatprep.subr.mxu0 0.0
      %2008 = vmatpush1.msra.mxu0 0.0
      %2009 = vmatprep.subr.mxu0 0.0
      %2010 = vmatpush1.msra.mxu0 0.0
      %2011 = vmatprep.subr.mxu0 0.0
      %2012 = vmatpush1.msra.mxu0 0.0
      %2013 = vmatprep.subr.mxu0 0.0
      %2014 = vmatpush1.msra.mxu0 0.0
      %2015 = vmatprep.subr.mxu0 0.0
      %2016 = vmatpush1.msra.mxu0 0.0
      %2017 = vmatprep.subr.mxu0 0.0
      %2018 = vmatpush1.msra.mxu0 0.0
      %2019 = vmatprep.subr.mxu0 0.0
      %2020 = vmatpush1.msra.mxu0 0.0
      %2021 = vmatprep.subr.mxu0 0.0
      %2022 = vmatpush1.msra.mxu0 0.0
      %2023 = vmatprep.subr.mxu0 0.0
      %2024 = vmatpush1.msra.mxu0 0.0
      %2025 = vmatprep.subr.mxu0 0.0
      %2026 = vmatpush1.msra.mxu0 0.0
      %2027 = vmatprep.subr.mxu0 0.0
      %2028 = vmatpush1.msra.mxu0 0.0
      %2029 = vmatprep.subr.mxu0 0.0
      %2030 = vmatpush1.msra.mxu0 0.0
      %2031 = vmatprep.subr.mxu0 0.0
      %2032 = vmatpush1.msra.mxu0 0.0
      %2033 = vmatprep.subr.mxu0 0.0
      %2034 = vmatpush1.msra.mxu0 0.0
      %2035 = vmatprep.subr.mxu0 0.0
      %2036 = vmatpush1.msra.mxu0 0.0
      %2037 = vmatprep.subr.mxu0 0.0
      %2038 = vmatpush1.msra.mxu0 0.0
      %2039 = vmatprep.subr.mxu0 0.0
      %2040 = vmatpush1.msra.mxu0 0.0
      %2041 = vmatprep.subr.mxu0 0.0
      %2042 = vmatpush1.msra.mxu0 0.0
      %2043 = vmatprep.subr.mxu0 0.0
      %2044 = vmatpush1.msra.mxu0 0.0
      %2045 = vmatprep.mubr.f32.mxu0 0.0
      %2046 = vmatmul.mubr.f32.gmra.mrb[0].mxu0 %v1977
      %v2047 = vpop.f32.mrb[0].mxu0
      %v2048 = vadd.f32 0.0, %v2047
      %v2049 = vpop.f32.mrb[0].mxu0
      %2050 = vdwg.mxu0
      %v2051 = vadd.f32 %v1960, %v2048
      %v2052 = vadd.f32 %v2051, %v485
      %v2053 = vmax.f32 %v2052, 0.0
      %v2055 = vcombine.high %v2053, %v2053
      %v2057 = vunpack.c.l.s4 1966171168
      %v2058 = vunpack.c.0.s8 %v2057
      %v2059 = vlaneseq
      %v2060 = vshrl.u32 %v2059, 7
      %v2061 = vsub.s32 %v2058, %v2060
      %v2062 = vrot.slane %v2053, %v2061
      %v2064 = vunpack.c.l.s4 1966171168
      %v2065 = vunpack.c.0.s8 %v2064
      %v2066 = vlaneseq
      %v2067 = vshrl.u32 %v2066, 7
      %v2068 = vsub.s32 %v2065, %v2067
      %v2069 = vrot.slane %v2055, %v2068
      %v2070 = vcombine.high %v2062, %v2062
      %v2071 = vcombine.high %v2069, %v2069
      %v2073 = vunpack.c.l.s4 1966171168
      %v2074 = vunpack.c.0.s8 %v2073
      %v2075 = vlaneseq
      %v2076 = vshrl.u32 %v2075, 7
      %v2077 = vsub.s32 %v2074, %v2076
      %v2078 = vrot.slane %v2062, %v2077
      %v2080 = vunpack.c.l.s4 1966171168
      %v2081 = vunpack.c.0.s8 %v2080
      %v2082 = vlaneseq
      %v2083 = vshrl.u32 %v2082, 7
      %v2084 = vsub.s32 %v2081, %v2083
      %v2085 = vrot.slane %v2069, %v2084
      %v2087 = vunpack.c.l.s4 1966171168
      %v2088 = vunpack.c.0.s8 %v2087
      %v2089 = vlaneseq
      %v2090 = vshrl.u32 %v2089, 7
      %v2091 = vsub.s32 %v2088, %v2090
      %v2092 = vrot.slane %v2070, %v2091
      %v2094 = vunpack.c.l.s4 1966171168
      %v2095 = vunpack.c.0.s8 %v2094
      %v2096 = vlaneseq
      %v2097 = vshrl.u32 %v2096, 7
      %v2098 = vsub.s32 %v2095, %v2097
      %v2099 = vrot.slane %v2071, %v2098
      %v2100 = vcombine.high %v2078, %v2078
      %v2101 = vcombine.high %v2085, %v2085
      %v2102 = vcombine.high %v2092, %v2092
      %v2103 = vcombine.high %v2099, %v2099
      %2112 = vst.msk [vmem:[%s201 + $0x3] sm:$0x1] %vm547, %v2078
      %2113 = vst.msk [vmem:[%s201 + $0xb] sm:$0x1] %vm547, %v2092
      %2114 = vst.msk [vmem:[%s201 + $0x13] sm:$0x1] %vm547, %v2100
      %2115 = vst.msk [vmem:[%s201 + $0x1b] sm:$0x1] %vm547, %v2102
      %2116 = vst.msk [vmem:[%s201 + $0x23] sm:$0x1] %vm547, %v2085
      %2117 = vst.msk [vmem:[%s201 + $0x2b] sm:$0x1] %vm547, %v2099
      %2118 = vst.msk [vmem:[%s201 + $0x33] sm:$0x1] %vm547, %v2101
      %2119 = vst.msk [vmem:[%s201 + $0x3b] sm:$0x1] %vm547, %v2103
      %v2120 = vld [vmem:[%s193 + $0xe] sm:$0x1]
      %v2121 = vld [vmem:[%s193 + $0x2e] sm:$0x1]
      %v2122 = vld [vmem:[%s193 + $0x4e] sm:$0x1]
      %v2123 = vld [vmem:[%s193 + $0x6e] sm:$0x1]
      %v2124 = vld [vmem:[%s1] sm:$0xff]
      %v2125 = vld [vmem:[%s193 + $0xf] sm:$0x1]
      %v2126 = vld [vmem:[%s193 + $0x2f] sm:$0x1]
      %v2127 = vld [vmem:[%s193 + $0x4f] sm:$0x1]
      %v2128 = vld [vmem:[%s193 + $0x6f] sm:$0x1]
      %v2129 = vld [vmem:[%s565] sm:$0xff]
      %v2134 = vrot.slane %v2126, 7
      %v2135 = vsel %vm220, %v2134, %v2125
      %v2136 = vrot.slane %v2127, 6
      %v2137 = vsel %vm223, %v2136, %v2135
      %v2138 = vrot.slane %v2128, 5
      %v2139 = vsel %vm226, %v2138, %v2137
      %v2141 = vsel %vm228, %v2129, 0
      %v2143 = vsel %vm232, %v2139, 0
      %2145 = vmatprep.subr.mxu0 0.0
      %2146 = vmatpush1.msra.mxu0 %v2143
      %2147 = vmatprep.subr.mxu0 0.0
      %2148 = vmatpush1.msra.mxu0 0.0
      %2149 = vmatprep.subr.mxu0 0.0
      %2150 = vmatpush1.msra.mxu0 0.0
      %2151 = vmatprep.subr.mxu0 0.0
      %2152 = vmatpush1.msra.mxu0 0.0
      %2153 = vmatprep.subr.mxu0 0.0
      %2154 = vmatpush1.msra.mxu0 0.0
      %2155 = vmatprep.subr.mxu0 0.0
      %2156 = vmatpush1.msra.mxu0 0.0
      %2157 = vmatprep.subr.mxu0 0.0
      %2158 = vmatpush1.msra.mxu0 0.0
      %2159 = vmatprep.subr.mxu0 0.0
      %2160 = vmatpush1.msra.mxu0 0.0
      %2161 = vmatprep.subr.mxu0 0.0
      %2162 = vmatpush1.msra.mxu0 0.0
      %2163 = vmatprep.subr.mxu0 0.0
      %2164 = vmatpush1.msra.mxu0 0.0
      %2165 = vmatprep.subr.mxu0 0.0
      %2166 = vmatpush1.msra.mxu0 0.0
      %2167 = vmatprep.subr.mxu0 0.0
      %2168 = vmatpush1.msra.mxu0 0.0
      %2169 = vmatprep.subr.mxu0 0.0
      %2170 = vmatpush1.msra.mxu0 0.0
      %2171 = vmatprep.subr.mxu0 0.0
      %2172 = vmatpush1.msra.mxu0 0.0
      %2173 = vmatprep.subr.mxu0 0.0
      %2174 = vmatpush1.msra.mxu0 0.0
      %2175 = vmatprep.subr.mxu0 0.0
      %2176 = vmatpush1.msra.mxu0 0.0
      %2177 = vmatprep.subr.mxu0 0.0
      %2178 = vmatpush1.msra.mxu0 0.0
      %2179 = vmatprep.subr.mxu0 0.0
      %2180 = vmatpush1.msra.mxu0 0.0
      %2181 = vmatprep.subr.mxu0 0.0
      %2182 = vmatpush1.msra.mxu0 0.0
      %2183 = vmatprep.subr.mxu0 0.0
      %2184 = vmatpush1.msra.mxu0 0.0
      %2185 = vmatprep.subr.mxu0 0.0
      %2186 = vmatpush1.msra.mxu0 0.0
      %2187 = vmatprep.subr.mxu0 0.0
      %2188 = vmatpush1.msra.mxu0 0.0
      %2189 = vmatprep.subr.mxu0 0.0
      %2190 = vmatpush1.msra.mxu0 0.0
      %2191 = vmatprep.subr.mxu0 0.0
      %2192 = vmatpush1.msra.mxu0 0.0
      %2193 = vmatprep.subr.mxu0 0.0
      %2194 = vmatpush1.msra.mxu0 0.0
      %2195 = vmatprep.subr.mxu0 0.0
      %2196 = vmatpush1.msra.mxu0 0.0
      %2197 = vmatprep.subr.mxu0 0.0
      %2198 = vmatpush1.msra.mxu0 0.0
      %2199 = vmatprep.subr.mxu0 0.0
      %2200 = vmatpush1.msra.mxu0 0.0
      %2201 = vmatprep.subr.mxu0 0.0
      %2202 = vmatpush1.msra.mxu0 0.0
      %2203 = vmatprep.subr.mxu0 0.0
      %2204 = vmatpush1.msra.mxu0 0.0
      %2205 = vmatprep.subr.mxu0 0.0
      %2206 = vmatpush1.msra.mxu0 0.0
      %2207 = vmatprep.subr.mxu0 0.0
      %2208 = vmatpush1.msra.mxu0 0.0
      %2209 = vmatprep.mubr.f32.mxu0 0.0
      %2210 = vmatmul.mubr.f32.gmra.mrb[0].mxu0 %v2141
      %v2211 = vpop.f32.mrb[0].mxu0
      %v2212 = vadd.f32 0.0, %v2211
      %v2213 = vpop.f32.mrb[0].mxu0
      %2214 = vdwg.mxu0
      %v2219 = vrot.slane %v2121, 7
      %v2220 = vsel %vm220, %v2219, %v2120
      %v2221 = vrot.slane %v2122, 6
      %v2222 = vsel %vm223, %v2221, %v2220
      %v2223 = vrot.slane %v2123, 5
      %v2224 = vsel %vm226, %v2223, %v2222
      %v2226 = vsel %vm228, %v2124, 0
      %v2228 = vsel %vm232, %v2224, 0
      %2230 = vmatprep.subr.mxu0 0.0
      %2231 = vmatpush1.msra.mxu0 %v2228
      %2232 = vmatprep.subr.mxu0 0.0
      %2233 = vmatpush1.msra.mxu0 0.0
      %2234 = vmatprep.subr.mxu0 0.0
      %2235 = vmatpush1.msra.mxu0 0.0
      %2236 = vmatprep.subr.mxu0 0.0
      %2237 = vmatpush1.msra.mxu0 0.0
      %2238 = vmatprep.subr.mxu0 0.0
      %2239 = vmatpush1.msra.mxu0 0.0
      %2240 = vmatprep.subr.mxu0 0.0
      %2241 = vmatpush1.msra.mxu0 0.0
      %2242 = vmatprep.subr.mxu0 0.0
      %2243 = vmatpush1.msra.mxu0 0.0
      %2244 = vmatprep.subr.mxu0 0.0
      %2245 = vmatpush1.msra.mxu0 0.0
      %2246 = vmatprep.subr.mxu0 0.0
      %2247 = vmatpush1.msra.mxu0 0.0
      %2248 = vmatprep.subr.mxu0 0.0
      %2249 = vmatpush1.msra.mxu0 0.0
      %2250 = vmatprep.subr.mxu0 0.0
      %2251 = vmatpush1.msra.mxu0 0.0
      %2252 = vmatprep.subr.mxu0 0.0
      %2253 = vmatpush1.msra.mxu0 0.0
      %2254 = vmatprep.subr.mxu0 0.0
      %2255 = vmatpush1.msra.mxu0 0.0
      %2256 = vmatprep.subr.mxu0 0.0
      %2257 = vmatpush1.msra.mxu0 0.0
      %2258 = vmatprep.subr.mxu0 0.0
      %2259 = vmatpush1.msra.mxu0 0.0
      %2260 = vmatprep.subr.mxu0 0.0
      %2261 = vmatpush1.msra.mxu0 0.0
      %2262 = vmatprep.subr.mxu0 0.0
      %2263 = vmatpush1.msra.mxu0 0.0
      %2264 = vmatprep.subr.mxu0 0.0
      %2265 = vmatpush1.msra.mxu0 0.0
      %2266 = vmatprep.subr.mxu0 0.0
      %2267 = vmatpush1.msra.mxu0 0.0
      %2268 = vmatprep.subr.mxu0 0.0
      %2269 = vmatpush1.msra.mxu0 0.0
      %2270 = vmatprep.subr.mxu0 0.0
      %2271 = vmatpush1.msra.mxu0 0.0
      %2272 = vmatprep.subr.mxu0 0.0
      %2273 = vmatpush1.msra.mxu0 0.0
      %2274 = vmatprep.subr.mxu0 0.0
      %2275 = vmatpush1.msra.mxu0 0.0
      %2276 = vmatprep.subr.mxu0 0.0
      %2277 = vmatpush1.msra.mxu0 0.0
      %2278 = vmatprep.subr.mxu0 0.0
      %2279 = vmatpush1.msra.mxu0 0.0
      %2280 = vmatprep.subr.mxu0 0.0
      %2281 = vmatpush1.msra.mxu0 0.0
      %2282 = vmatprep.subr.mxu0 0.0
      %2283 = vmatpush1.msra.mxu0 0.0
      %2284 = vmatprep.subr.mxu0 0.0
      %2285 = vmatpush1.msra.mxu0 0.0
      %2286 = vmatprep.subr.mxu0 0.0
      %2287 = vmatpush1.msra.mxu0 0.0
      %2288 = vmatprep.subr.mxu0 0.0
      %2289 = vmatpush1.msra.mxu0 0.0
      %2290 = vmatprep.subr.mxu0 0.0
      %2291 = vmatpush1.msra.mxu0 0.0
      %2292 = vmatprep.subr.mxu0 0.0
      %2293 = vmatpush1.msra.mxu0 0.0
      %2294 = vmatprep.mubr.f32.mxu0 0.0
      %2295 = vmatmul.mubr.f32.gmra.mrb[0].mxu0 %v2226
      %v2296 = vpop.f32.mrb[0].mxu0
      %v2297 = vadd.f32 %v2212, %v2296
      %v2298 = vpop.f32.mrb[0].mxu0
      %2299 = vdwg.mxu0
      %v2300 = vld [vmem:[%s193 + $0x10] sm:$0x1]
      %v2301 = vld [vmem:[%s193 + $0x30] sm:$0x1]
      %v2302 = vld [vmem:[%s193 + $0x50] sm:$0x1]
      %v2303 = vld [vmem:[%s193 + $0x70] sm:$0x1]
      %v2304 = vld [vmem:[%s207] sm:$0xff]
      %v2309 = vrot.slane %v2301, 7
      %v2310 = vsel %vm220, %v2309, %v2300
      %v2311 = vrot.slane %v2302, 6
      %v2312 = vsel %vm223, %v2311, %v2310
      %v2313 = vrot.slane %v2303, 5
      %v2314 = vsel %vm226, %v2313, %v2312
      %v2316 = vsel %vm228, %v2304, 0
      %v2318 = vsel %vm232, %v2314, 0
      %2320 = vmatprep.subr.mxu0 0.0
      %2321 = vmatpush1.msra.mxu0 %v2318
      %2322 = vmatprep.subr.mxu0 0.0
      %2323 = vmatpush1.msra.mxu0 0.0
      %2324 = vmatprep.subr.mxu0 0.0
      %2325 = vmatpush1.msra.mxu0 0.0
      %2326 = vmatprep.subr.mxu0 0.0
      %2327 = vmatpush1.msra.mxu0 0.0
      %2328 = vmatprep.subr.mxu0 0.0
      %2329 = vmatpush1.msra.mxu0 0.0
      %2330 = vmatprep.subr.mxu0 0.0
      %2331 = vmatpush1.msra.mxu0 0.0
      %2332 = vmatprep.subr.mxu0 0.0
      %2333 = vmatpush1.msra.mxu0 0.0
      %2334 = vmatprep.subr.mxu0 0.0
      %2335 = vmatpush1.msra.mxu0 0.0
      %2336 = vmatprep.subr.mxu0 0.0
      %2337 = vmatpush1.msra.mxu0 0.0
      %2338 = vmatprep.subr.mxu0 0.0
      %2339 = vmatpush1.msra.mxu0 0.0
      %2340 = vmatprep.subr.mxu0 0.0
      %2341 = vmatpush1.msra.mxu0 0.0
      %2342 = vmatprep.subr.mxu0 0.0
      %2343 = vmatpush1.msra.mxu0 0.0
      %2344 = vmatprep.subr.mxu0 0.0
      %2345 = vmatpush1.msra.mxu0 0.0
      %2346 = vmatprep.subr.mxu0 0.0
      %2347 = vmatpush1.msra.mxu0 0.0
      %2348 = vmatprep.subr.mxu0 0.0
      %2349 = vmatpush1.msra.mxu0 0.0
      %2350 = vmatprep.subr.mxu0 0.0
      %2351 = vmatpush1.msra.mxu0 0.0
      %2352 = vmatprep.subr.mxu0 0.0
      %2353 = vmatpush1.msra.mxu0 0.0
      %2354 = vmatprep.subr.mxu0 0.0
      %2355 = vmatpush1.msra.mxu0 0.0
      %2356 = vmatprep.subr.mxu0 0.0
      %2357 = vmatpush1.msra.mxu0 0.0
      %2358 = vmatprep.subr.mxu0 0.0
      %2359 = vmatpush1.msra.mxu0 0.0
      %2360 = vmatprep.subr.mxu0 0.0
      %2361 = vmatpush1.msra.mxu0 0.0
      %2362 = vmatprep.subr.mxu0 0.0
      %2363 = vmatpush1.msra.mxu0 0.0
      %2364 = vmatprep.subr.mxu0 0.0
      %2365 = vmatpush1.msra.mxu0 0.0
      %2366 = vmatprep.subr.mxu0 0.0
      %2367 = vmatpush1.msra.mxu0 0.0
      %2368 = vmatprep.subr.mxu0 0.0
      %2369 = vmatpush1.msra.mxu0 0.0
      %2370 = vmatprep.subr.mxu0 0.0
      %2371 = vmatpush1.msra.mxu0 0.0
      %2372 = vmatprep.subr.mxu0 0.0
      %2373 = vmatpush1.msra.mxu0 0.0
      %2374 = vmatprep.subr.mxu0 0.0
      %2375 = vmatpush1.msra.mxu0 0.0
      %2376 = vmatprep.subr.mxu0 0.0
      %2377 = vmatpush1.msra.mxu0 0.0
      %2378 = vmatprep.subr.mxu0 0.0
      %2379 = vmatpush1.msra.mxu0 0.0
      %2380 = vmatprep.subr.mxu0 0.0
      %2381 = vmatpush1.msra.mxu0 0.0
      %2382 = vmatprep.subr.mxu0 0.0
      %2383 = vmatpush1.msra.mxu0 0.0
      %2384 = vmatprep.mubr.f32.mxu0 0.0
      %2385 = vmatmul.mubr.f32.gmra.mrb[0].mxu0 %v2316
      %v2386 = vpop.f32.mrb[0].mxu0
      %v2387 = vadd.f32 0.0, %v2386
      %v2388 = vpop.f32.mrb[0].mxu0
      %2389 = vdwg.mxu0
      %v2390 = vadd.f32 %v2297, %v2387
      %v2391 = vld [vmem:[%s193 + $0x11] sm:$0x1]
      %v2392 = vld [vmem:[%s193 + $0x31] sm:$0x1]
      %v2393 = vld [vmem:[%s193 + $0x51] sm:$0x1]
      %v2394 = vld [vmem:[%s193 + $0x71] sm:$0x1]
      %v2395 = vld [vmem:[%s213] sm:$0xff]
      %v2400 = vrot.slane %v2392, 7
      %v2401 = vsel %vm220, %v2400, %v2391
      %v2402 = vrot.slane %v2393, 6
      %v2403 = vsel %vm223, %v2402, %v2401
      %v2404 = vrot.slane %v2394, 5
      %v2405 = vsel %vm226, %v2404, %v2403
      %v2407 = vsel %vm228, %v2395, 0
      %v2409 = vsel %vm232, %v2405, 0
      %2411 = vmatprep.subr.mxu0 0.0
      %2412 = vmatpush1.msra.mxu0 %v2409
      %2413 = vmatprep.subr.mxu0 0.0
      %2414 = vmatpush1.msra.mxu0 0.0
      %2415 = vmatprep.subr.mxu0 0.0
      %2416 = vmatpush1.msra.mxu0 0.0
      %2417 = vmatprep.subr.mxu0 0.0
      %2418 = vmatpush1.msra.mxu0 0.0
      %2419 = vmatprep.subr.mxu0 0.0
      %2420 = vmatpush1.msra.mxu0 0.0
      %2421 = vmatprep.subr.mxu0 0.0
      %2422 = vmatpush1.msra.mxu0 0.0
      %2423 = vmatprep.subr.mxu0 0.0
      %2424 = vmatpush1.msra.mxu0 0.0
      %2425 = vmatprep.subr.mxu0 0.0
      %2426 = vmatpush1.msra.mxu0 0.0
      %2427 = vmatprep.subr.mxu0 0.0
      %2428 = vmatpush1.msra.mxu0 0.0
      %2429 = vmatprep.subr.mxu0 0.0
      %2430 = vmatpush1.msra.mxu0 0.0
      %2431 = vmatprep.subr.mxu0 0.0
      %2432 = vmatpush1.msra.mxu0 0.0
      %2433 = vmatprep.subr.mxu0 0.0
      %2434 = vmatpush1.msra.mxu0 0.0
      %2435 = vmatprep.subr.mxu0 0.0
      %2436 = vmatpush1.msra.mxu0 0.0
      %2437 = vmatprep.subr.mxu0 0.0
      %2438 = vmatpush1.msra.mxu0 0.0
      %2439 = vmatprep.subr.mxu0 0.0
      %2440 = vmatpush1.msra.mxu0 0.0
      %2441 = vmatprep.subr.mxu0 0.0
      %2442 = vmatpush1.msra.mxu0 0.0
      %2443 = vmatprep.subr.mxu0 0.0
      %2444 = vmatpush1.msra.mxu0 0.0
      %2445 = vmatprep.subr.mxu0 0.0
      %2446 = vmatpush1.msra.mxu0 0.0
      %2447 = vmatprep.subr.mxu0 0.0
      %2448 = vmatpush1.msra.mxu0 0.0
      %2449 = vmatprep.subr.mxu0 0.0
      %2450 = vmatpush1.msra.mxu0 0.0
      %2451 = vmatprep.subr.mxu0 0.0
      %2452 = vmatpush1.msra.mxu0 0.0
      %2453 = vmatprep.subr.mxu0 0.0
      %2454 = vmatpush1.msra.mxu0 0.0
      %2455 = vmatprep.subr.mxu0 0.0
      %2456 = vmatpush1.msra.mxu0 0.0
      %2457 = vmatprep.subr.mxu0 0.0
      %2458 = vmatpush1.msra.mxu0 0.0
      %2459 = vmatprep.subr.mxu0 0.0
      %2460 = vmatpush1.msra.mxu0 0.0
      %2461 = vmatprep.subr.mxu0 0.0
      %2462 = vmatpush1.msra.mxu0 0.0
      %2463 = vmatprep.subr.mxu0 0.0
      %2464 = vmatpush1.msra.mxu0 0.0
      %2465 = vmatprep.subr.mxu0 0.0
      %2466 = vmatpush1.msra.mxu0 0.0
      %2467 = vmatprep.subr.mxu0 0.0
      %2468 = vmatpush1.msra.mxu0 0.0
      %2469 = vmatprep.subr.mxu0 0.0
      %2470 = vmatpush1.msra.mxu0 0.0
      %2471 = vmatprep.subr.mxu0 0.0
      %2472 = vmatpush1.msra.mxu0 0.0
      %2473 = vmatprep.subr.mxu0 0.0
      %2474 = vmatpush1.msra.mxu0 0.0
      %2475 = vmatprep.mubr.f32.mxu0 0.0
      %2476 = vmatmul.mubr.f32.gmra.mrb[0].mxu0 %v2407
      %v2477 = vpop.f32.mrb[0].mxu0
      %v2478 = vadd.f32 0.0, %v2477
      %v2479 = vpop.f32.mrb[0].mxu0
      %2480 = vdwg.mxu0
      %v2481 = vadd.f32 %v2390, %v2478
      %v2482 = vld [vmem:[%s193 + $0x12] sm:$0x1]
      %v2483 = vld [vmem:[%s193 + $0x32] sm:$0x1]
      %v2484 = vld [vmem:[%s193 + $0x52] sm:$0x1]
      %v2485 = vld [vmem:[%s193 + $0x72] sm:$0x1]
      %v2486 = vld [vmem:[%s394] sm:$0xff]
      %v2491 = vrot.slane %v2483, 7
      %v2492 = vsel %vm220, %v2491, %v2482
      %v2493 = vrot.slane %v2484, 6
      %v2494 = vsel %vm223, %v2493, %v2492
      %v2495 = vrot.slane %v2485, 5
      %v2496 = vsel %vm226, %v2495, %v2494
      %v2498 = vsel %vm228, %v2486, 0
      %v2500 = vsel %vm232, %v2496, 0
      %2502 = vmatprep.subr.mxu0 0.0
      %2503 = vmatpush1.msra.mxu0 %v2500
      %2504 = vmatprep.subr.mxu0 0.0
      %2505 = vmatpush1.msra.mxu0 0.0
      %2506 = vmatprep.subr.mxu0 0.0
      %2507 = vmatpush1.msra.mxu0 0.0
      %2508 = vmatprep.subr.mxu0 0.0
      %2509 = vmatpush1.msra.mxu0 0.0
      %2510 = vmatprep.subr.mxu0 0.0
      %2511 = vmatpush1.msra.mxu0 0.0
      %2512 = vmatprep.subr.mxu0 0.0
      %2513 = vmatpush1.msra.mxu0 0.0
      %2514 = vmatprep.subr.mxu0 0.0
      %2515 = vmatpush1.msra.mxu0 0.0
      %2516 = vmatprep.subr.mxu0 0.0
      %2517 = vmatpush1.msra.mxu0 0.0
      %2518 = vmatprep.subr.mxu0 0.0
      %2519 = vmatpush1.msra.mxu0 0.0
      %2520 = vmatprep.subr.mxu0 0.0
      %2521 = vmatpush1.msra.mxu0 0.0
      %2522 = vmatprep.subr.mxu0 0.0
      %2523 = vmatpush1.msra.mxu0 0.0
      %2524 = vmatprep.subr.mxu0 0.0
      %2525 = vmatpush1.msra.mxu0 0.0
      %2526 = vmatprep.subr.mxu0 0.0
      %2527 = vmatpush1.msra.mxu0 0.0
      %2528 = vmatprep.subr.mxu0 0.0
      %2529 = vmatpush1.msra.mxu0 0.0
      %2530 = vmatprep.subr.mxu0 0.0
      %2531 = vmatpush1.msra.mxu0 0.0
      %2532 = vmatprep.subr.mxu0 0.0
      %2533 = vmatpush1.msra.mxu0 0.0
      %2534 = vmatprep.subr.mxu0 0.0
      %2535 = vmatpush1.msra.mxu0 0.0
      %2536 = vmatprep.subr.mxu0 0.0
      %2537 = vmatpush1.msra.mxu0 0.0
      %2538 = vmatprep.subr.mxu0 0.0
      %2539 = vmatpush1.msra.mxu0 0.0
      %2540 = vmatprep.subr.mxu0 0.0
      %2541 = vmatpush1.msra.mxu0 0.0
      %2542 = vmatprep.subr.mxu0 0.0
      %2543 = vmatpush1.msra.mxu0 0.0
      %2544 = vmatprep.subr.mxu0 0.0
      %2545 = vmatpush1.msra.mxu0 0.0
      %2546 = vmatprep.subr.mxu0 0.0
      %2547 = vmatpush1.msra.mxu0 0.0
      %2548 = vmatprep.subr.mxu0 0.0
      %2549 = vmatpush1.msra.mxu0 0.0
      %2550 = vmatprep.subr.mxu0 0.0
      %2551 = vmatpush1.msra.mxu0 0.0
      %2552 = vmatprep.subr.mxu0 0.0
      %2553 = vmatpush1.msra.mxu0 0.0
      %2554 = vmatprep.subr.mxu0 0.0
      %2555 = vmatpush1.msra.mxu0 0.0
      %2556 = vmatprep.subr.mxu0 0.0
      %2557 = vmatpush1.msra.mxu0 0.0
      %2558 = vmatprep.subr.mxu0 0.0
      %2559 = vmatpush1.msra.mxu0 0.0
      %2560 = vmatprep.subr.mxu0 0.0
      %2561 = vmatpush1.msra.mxu0 0.0
      %2562 = vmatprep.subr.mxu0 0.0
      %2563 = vmatpush1.msra.mxu0 0.0
      %2564 = vmatprep.subr.mxu0 0.0
      %2565 = vmatpush1.msra.mxu0 0.0
      %2566 = vmatprep.mubr.f32.mxu0 0.0
      %2567 = vmatmul.mubr.f32.gmra.mrb[0].mxu0 %v2498
      %v2568 = vpop.f32.mrb[0].mxu0
      %v2569 = vadd.f32 0.0, %v2568
      %v2570 = vpop.f32.mrb[0].mxu0
      %2571 = vdwg.mxu0
      %v2572 = vadd.f32 %v2481, %v2569
      %v2573 = vadd.f32 %v2572, %v485
      %v2574 = vmax.f32 %v2573, 0.0
      %v2576 = vcombine.high %v2574, %v2574
      %v2578 = vunpack.c.l.s4 1966171168
      %v2579 = vunpack.c.0.s8 %v2578
      %v2580 = vlaneseq
      %v2581 = vshrl.u32 %v2580, 7
      %v2582 = vsub.s32 %v2579, %v2581
      %v2583 = vrot.slane %v2574, %v2582
      %v2585 = vunpack.c.l.s4 1966171168
      %v2586 = vunpack.c.0.s8 %v2585
      %v2587 = vlaneseq
      %v2588 = vshrl.u32 %v2587, 7
      %v2589 = vsub.s32 %v2586, %v2588
      %v2590 = vrot.slane %v2576, %v2589
      %v2591 = vcombine.high %v2583, %v2583
      %v2592 = vcombine.high %v2590, %v2590
      %v2594 = vunpack.c.l.s4 1966171168
      %v2595 = vunpack.c.0.s8 %v2594
      %v2596 = vlaneseq
      %v2597 = vshrl.u32 %v2596, 7
      %v2598 = vsub.s32 %v2595, %v2597
      %v2599 = vrot.slane %v2583, %v2598
      %v2601 = vunpack.c.l.s4 1966171168
      %v2602 = vunpack.c.0.s8 %v2601
      %v2603 = vlaneseq
      %v2604 = vshrl.u32 %v2603, 7
      %v2605 = vsub.s32 %v2602, %v2604
      %v2606 = vrot.slane %v2590, %v2605
      %v2608 = vunpack.c.l.s4 1966171168
      %v2609 = vunpack.c.0.s8 %v2608
      %v2610 = vlaneseq
      %v2611 = vshrl.u32 %v2610, 7
      %v2612 = vsub.s32 %v2609, %v2611
      %v2613 = vrot.slane %v2591, %v2612
      %v2615 = vunpack.c.l.s4 1966171168
      %v2616 = vunpack.c.0.s8 %v2615
      %v2617 = vlaneseq
      %v2618 = vshrl.u32 %v2617, 7
      %v2619 = vsub.s32 %v2616, %v2618
      %v2620 = vrot.slane %v2592, %v2619
      %v2621 = vcombine.high %v2599, %v2599
      %v2622 = vcombine.high %v2606, %v2606
      %v2623 = vcombine.high %v2613, %v2613
      %v2624 = vcombine.high %v2620, %v2620
      %2633 = vst.msk [vmem:[%s201 + $0x4] sm:$0x1] %vm547, %v2599
      %2634 = vst.msk [vmem:[%s201 + $0xc] sm:$0x1] %vm547, %v2613
      %2635 = vst.msk [vmem:[%s201 + $0x14] sm:$0x1] %vm547, %v2621
      %2636 = vst.msk [vmem:[%s201 + $0x1c] sm:$0x1] %vm547, %v2623
      %2637 = vst.msk [vmem:[%s201 + $0x24] sm:$0x1] %vm547, %v2606
      %2638 = vst.msk [vmem:[%s201 + $0x2c] sm:$0x1] %vm547, %v2620
      %2639 = vst.msk [vmem:[%s201 + $0x34] sm:$0x1] %vm547, %v2622
      %2640 = vst.msk [vmem:[%s201 + $0x3c] sm:$0x1] %vm547, %v2624
      %v2641 = vld [vmem:[%s193 + $0x12] sm:$0x1]
      %v2642 = vld [vmem:[%s193 + $0x32] sm:$0x1]
      %v2643 = vld [vmem:[%s193 + $0x52] sm:$0x1]
      %v2644 = vld [vmem:[%s193 + $0x72] sm:$0x1]
      %v2645 = vld [vmem:[%s1] sm:$0xff]
      %v2646 = vld [vmem:[%s193 + $0x13] sm:$0x1]
      %v2647 = vld [vmem:[%s193 + $0x33] sm:$0x1]
      %v2648 = vld [vmem:[%s193 + $0x53] sm:$0x1]
      %v2649 = vld [vmem:[%s193 + $0x73] sm:$0x1]
      %v2650 = vld [vmem:[%s565] sm:$0xff]
      %v2655 = vrot.slane %v2647, 7
      %v2656 = vsel %vm220, %v2655, %v2646
      %v2657 = vrot.slane %v2648, 6
      %v2658 = vsel %vm223, %v2657, %v2656
      %v2659 = vrot.slane %v2649, 5
      %v2660 = vsel %vm226, %v2659, %v2658
      %v2662 = vsel %vm228, %v2650, 0
      %v2664 = vsel %vm232, %v2660, 0
      %2666 = vmatprep.subr.mxu0 0.0
      %2667 = vmatpush1.msra.mxu0 %v2664
      %2668 = vmatprep.subr.mxu0 0.0
      %2669 = vmatpush1.msra.mxu0 0.0
      %2670 = vmatprep.subr.mxu0 0.0
      %2671 = vmatpush1.msra.mxu0 0.0
      %2672 = vmatprep.subr.mxu0 0.0
      %2673 = vmatpush1.msra.mxu0 0.0
      %2674 = vmatprep.subr.mxu0 0.0
      %2675 = vmatpush1.msra.mxu0 0.0
      %2676 = vmatprep.subr.mxu0 0.0
      %2677 = vmatpush1.msra.mxu0 0.0
      %2678 = vmatprep.subr.mxu0 0.0
      %2679 = vmatpush1.msra.mxu0 0.0
      %2680 = vmatprep.subr.mxu0 0.0
      %2681 = vmatpush1.msra.mxu0 0.0
      %2682 = vmatprep.subr.mxu0 0.0
      %2683 = vmatpush1.msra.mxu0 0.0
      %2684 = vmatprep.subr.mxu0 0.0
      %2685 = vmatpush1.msra.mxu0 0.0
      %2686 = vmatprep.subr.mxu0 0.0
      %2687 = vmatpush1.msra.mxu0 0.0
      %2688 = vmatprep.subr.mxu0 0.0
      %2689 = vmatpush1.msra.mxu0 0.0
      %2690 = vmatprep.subr.mxu0 0.0
      %2691 = vmatpush1.msra.mxu0 0.0
      %2692 = vmatprep.subr.mxu0 0.0
      %2693 = vmatpush1.msra.mxu0 0.0
      %2694 = vmatprep.subr.mxu0 0.0
      %2695 = vmatpush1.msra.mxu0 0.0
      %2696 = vmatprep.subr.mxu0 0.0
      %2697 = vmatpush1.msra.mxu0 0.0
      %2698 = vmatprep.subr.mxu0 0.0
      %2699 = vmatpush1.msra.mxu0 0.0
      %2700 = vmatprep.subr.mxu0 0.0
      %2701 = vmatpush1.msra.mxu0 0.0
      %2702 = vmatprep.subr.mxu0 0.0
      %2703 = vmatpush1.msra.mxu0 0.0
      %2704 = vmatprep.subr.mxu0 0.0
      %2705 = vmatpush1.msra.mxu0 0.0
      %2706 = vmatprep.subr.mxu0 0.0
      %2707 = vmatpush1.msra.mxu0 0.0
      %2708 = vmatprep.subr.mxu0 0.0
      %2709 = vmatpush1.msra.mxu0 0.0
      %2710 = vmatprep.subr.mxu0 0.0
      %2711 = vmatpush1.msra.mxu0 0.0
      %2712 = vmatprep.subr.mxu0 0.0
      %2713 = vmatpush1.msra.mxu0 0.0
      %2714 = vmatprep.subr.mxu0 0.0
      %2715 = vmatpush1.msra.mxu0 0.0
      %2716 = vmatprep.subr.mxu0 0.0
      %2717 = vmatpush1.msra.mxu0 0.0
      %2718 = vmatprep.subr.mxu0 0.0
      %2719 = vmatpush1.msra.mxu0 0.0
      %2720 = vmatprep.subr.mxu0 0.0
      %2721 = vmatpush1.msra.mxu0 0.0
      %2722 = vmatprep.subr.mxu0 0.0
      %2723 = vmatpush1.msra.mxu0 0.0
      %2724 = vmatprep.subr.mxu0 0.0
      %2725 = vmatpush1.msra.mxu0 0.0
      %2726 = vmatprep.subr.mxu0 0.0
      %2727 = vmatpush1.msra.mxu0 0.0
      %2728 = vmatprep.subr.mxu0 0.0
      %2729 = vmatpush1.msra.mxu0 0.0
      %2730 = vmatprep.mubr.f32.mxu0 0.0
      %2731 = vmatmul.mubr.f32.gmra.mrb[0].mxu0 %v2662
      %v2732 = vpop.f32.mrb[0].mxu0
      %v2733 = vadd.f32 0.0, %v2732
      %v2734 = vpop.f32.mrb[0].mxu0
      %2735 = vdwg.mxu0
      %v2740 = vrot.slane %v2642, 7
      %v2741 = vsel %vm220, %v2740, %v2641
      %v2742 = vrot.slane %v2643, 6
      %v2743 = vsel %vm223, %v2742, %v2741
      %v2744 = vrot.slane %v2644, 5
      %v2745 = vsel %vm226, %v2744, %v2743
      %v2747 = vsel %vm228, %v2645, 0
      %v2749 = vsel %vm232, %v2745, 0
      %2751 = vmatprep.subr.mxu0 0.0
      %2752 = vmatpush1.msra.mxu0 %v2749
      %2753 = vmatprep.subr.mxu0 0.0
      %2754 = vmatpush1.msra.mxu0 0.0
      %2755 = vmatprep.subr.mxu0 0.0
      %2756 = vmatpush1.msra.mxu0 0.0
      %2757 = vmatprep.subr.mxu0 0.0
      %2758 = vmatpush1.msra.mxu0 0.0
      %2759 = vmatprep.subr.mxu0 0.0
      %2760 = vmatpush1.msra.mxu0 0.0
      %2761 = vmatprep.subr.mxu0 0.0
      %2762 = vmatpush1.msra.mxu0 0.0
      %2763 = vmatprep.subr.mxu0 0.0
      %2764 = vmatpush1.msra.mxu0 0.0
      %2765 = vmatprep.subr.mxu0 0.0
      %2766 = vmatpush1.msra.mxu0 0.0
      %2767 = vmatprep.subr.mxu0 0.0
      %2768 = vmatpush1.msra.mxu0 0.0
      %2769 = vmatprep.subr.mxu0 0.0
      %2770 = vmatpush1.msra.mxu0 0.0
      %2771 = vmatprep.subr.mxu0 0.0
      %2772 = vmatpush1.msra.mxu0 0.0
      %2773 = vmatprep.subr.mxu0 0.0
      %2774 = vmatpush1.msra.mxu0 0.0
      %2775 = vmatprep.subr.mxu0 0.0
      %2776 = vmatpush1.msra.mxu0 0.0
      %2777 = vmatprep.subr.mxu0 0.0
      %2778 = vmatpush1.msra.mxu0 0.0
      %2779 = vmatprep.subr.mxu0 0.0
      %2780 = vmatpush1.msra.mxu0 0.0
      %2781 = vmatprep.subr.mxu0 0.0
      %2782 = vmatpush1.msra.mxu0 0.0
      %2783 = vmatprep.subr.mxu0 0.0
      %2784 = vmatpush1.msra.mxu0 0.0
      %2785 = vmatprep.subr.mxu0 0.0
      %2786 = vmatpush1.msra.mxu0 0.0
      %2787 = vmatprep.subr.mxu0 0.0
      %2788 = vmatpush1.msra.mxu0 0.0
      %2789 = vmatprep.subr.mxu0 0.0
      %2790 = vmatpush1.msra.mxu0 0.0
      %2791 = vmatprep.subr.mxu0 0.0
      %2792 = vmatpush1.msra.mxu0 0.0
      %2793 = vmatprep.subr.mxu0 0.0
      %2794 = vmatpush1.msra.mxu0 0.0
      %2795 = vmatprep.subr.mxu0 0.0
      %2796 = vmatpush1.msra.mxu0 0.0
      %2797 = vmatprep.subr.mxu0 0.0
      %2798 = vmatpush1.msra.mxu0 0.0
      %2799 = vmatprep.subr.mxu0 0.0
      %2800 = vmatpush1.msra.mxu0 0.0
      %2801 = vmatprep.subr.mxu0 0.0
      %2802 = vmatpush1.msra.mxu0 0.0
      %2803 = vmatprep.subr.mxu0 0.0
      %2804 = vmatpush1.msra.mxu0 0.0
      %2805 = vmatprep.subr.mxu0 0.0
      %2806 = vmatpush1.msra.mxu0 0.0
      %2807 = vmatprep.subr.mxu0 0.0
      %2808 = vmatpush1.msra.mxu0 0.0
      %2809 = vmatprep.subr.mxu0 0.0
      %2810 = vmatpush1.msra.mxu0 0.0
      %2811 = vmatprep.subr.mxu0 0.0
      %2812 = vmatpush1.msra.mxu0 0.0
      %2813 = vmatprep.subr.mxu0 0.0
      %2814 = vmatpush1.msra.mxu0 0.0
      %2815 = vmatprep.mubr.f32.mxu0 0.0
      %2816 = vmatmul.mubr.f32.gmra.mrb[0].mxu0 %v2747
      %v2817 = vpop.f32.mrb[0].mxu0
      %v2818 = vadd.f32 %v2733, %v2817
      %v2819 = vpop.f32.mrb[0].mxu0
      %2820 = vdwg.mxu0
      %v2821 = vld [vmem:[%s193 + $0x14] sm:$0x1]
      %v2822 = vld [vmem:[%s193 + $0x34] sm:$0x1]
      %v2823 = vld [vmem:[%s193 + $0x54] sm:$0x1]
      %v2824 = vld [vmem:[%s193 + $0x74] sm:$0x1]
      %v2825 = vld [vmem:[%s207] sm:$0xff]
      %v2830 = vrot.slane %v2822, 7
      %v2831 = vsel %vm220, %v2830, %v2821
      %v2832 = vrot.slane %v2823, 6
      %v2833 = vsel %vm223, %v2832, %v2831
      %v2834 = vrot.slane %v2824, 5
      %v2835 = vsel %vm226, %v2834, %v2833
      %v2837 = vsel %vm228, %v2825, 0
      %v2839 = vsel %vm232, %v2835, 0
      %2841 = vmatprep.subr.mxu0 0.0
      %2842 = vmatpush1.msra.mxu0 %v2839
      %2843 = vmatprep.subr.mxu0 0.0
      %2844 = vmatpush1.msra.mxu0 0.0
      %2845 = vmatprep.subr.mxu0 0.0
      %2846 = vmatpush1.msra.mxu0 0.0
      %2847 = vmatprep.subr.mxu0 0.0
      %2848 = vmatpush1.msra.mxu0 0.0
      %2849 = vmatprep.subr.mxu0 0.0
      %2850 = vmatpush1.msra.mxu0 0.0
      %2851 = vmatprep.subr.mxu0 0.0
      %2852 = vmatpush1.msra.mxu0 0.0
      %2853 = vmatprep.subr.mxu0 0.0
      %2854 = vmatpush1.msra.mxu0 0.0
      %2855 = vmatprep.subr.mxu0 0.0
      %2856 = vmatpush1.msra.mxu0 0.0
      %2857 = vmatprep.subr.mxu0 0.0
      %2858 = vmatpush1.msra.mxu0 0.0
      %2859 = vmatprep.subr.mxu0 0.0
      %2860 = vmatpush1.msra.mxu0 0.0
      %2861 = vmatprep.subr.mxu0 0.0
      %2862 = vmatpush1.msra.mxu0 0.0
      %2863 = vmatprep.subr.mxu0 0.0
      %2864 = vmatpush1.msra.mxu0 0.0
      %2865 = vmatprep.subr.mxu0 0.0
      %2866 = vmatpush1.msra.mxu0 0.0
      %2867 = vmatprep.subr.mxu0 0.0
      %2868 = vmatpush1.msra.mxu0 0.0
      %2869 = vmatprep.subr.mxu0 0.0
      %2870 = vmatpush1.msra.mxu0 0.0
      %2871 = vmatprep.subr.mxu0 0.0
      %2872 = vmatpush1.msra.mxu0 0.0
      %2873 = vmatprep.subr.mxu0 0.0
      %2874 = vmatpush1.msra.mxu0 0.0
      %2875 = vmatprep.subr.mxu0 0.0
      %2876 = vmatpush1.msra.mxu0 0.0
      %2877 = vmatprep.subr.mxu0 0.0
      %2878 = vmatpush1.msra.mxu0 0.0
      %2879 = vmatprep.subr.mxu0 0.0
      %2880 = vmatpush1.msra.mxu0 0.0
      %2881 = vmatprep.subr.mxu0 0.0
      %2882 = vmatpush1.msra.mxu0 0.0
      %2883 = vmatprep.subr.mxu0 0.0
      %2884 = vmatpush1.msra.mxu0 0.0
      %2885 = vmatprep.subr.mxu0 0.0
      %2886 = vmatpush1.msra.mxu0 0.0
      %2887 = vmatprep.subr.mxu0 0.0
      %2888 = vmatpush1.msra.mxu0 0.0
      %2889 = vmatprep.subr.mxu0 0.0
      %2890 = vmatpush1.msra.mxu0 0.0
      %2891 = vmatprep.subr.mxu0 0.0
      %2892 = vmatpush1.msra.mxu0 0.0
      %2893 = vmatprep.subr.mxu0 0.0
      %2894 = vmatpush1.msra.mxu0 0.0
      %2895 = vmatprep.subr.mxu0 0.0
      %2896 = vmatpush1.msra.mxu0 0.0
      %2897 = vmatprep.subr.mxu0 0.0
      %2898 = vmatpush1.msra.mxu0 0.0
      %2899 = vmatprep.subr.mxu0 0.0
      %2900 = vmatpush1.msra.mxu0 0.0
      %2901 = vmatprep.subr.mxu0 0.0
      %2902 = vmatpush1.msra.mxu0 0.0
      %2903 = vmatprep.subr.mxu0 0.0
      %2904 = vmatpush1.msra.mxu0 0.0
      %2905 = vmatprep.mubr.f32.mxu0 0.0
      %2906 = vmatmul.mubr.f32.gmra.mrb[0].mxu0 %v2837
      %v2907 = vpop.f32.mrb[0].mxu0
      %v2908 = vadd.f32 0.0, %v2907
      %v2909 = vpop.f32.mrb[0].mxu0
      %2910 = vdwg.mxu0
      %v2911 = vadd.f32 %v2818, %v2908
      %v2912 = vld [vmem:[%s193 + $0x15] sm:$0x1]
      %v2913 = vld [vmem:[%s193 + $0x35] sm:$0x1]
      %v2914 = vld [vmem:[%s193 + $0x55] sm:$0x1]
      %v2915 = vld [vmem:[%s193 + $0x75] sm:$0x1]
      %v2916 = vld [vmem:[%s213] sm:$0xff]
      %v2921 = vrot.slane %v2913, 7
      %v2922 = vsel %vm220, %v2921, %v2912
      %v2923 = vrot.slane %v2914, 6
      %v2924 = vsel %vm223, %v2923, %v2922
      %v2925 = vrot.slane %v2915, 5
      %v2926 = vsel %vm226, %v2925, %v2924
      %v2928 = vsel %vm228, %v2916, 0
      %v2930 = vsel %vm232, %v2926, 0
      %2932 = vmatprep.subr.mxu0 0.0
      %2933 = vmatpush1.msra.mxu0 %v2930
      %2934 = vmatprep.subr.mxu0 0.0
      %2935 = vmatpush1.msra.mxu0 0.0
      %2936 = vmatprep.subr.mxu0 0.0
      %2937 = vmatpush1.msra.mxu0 0.0
      %2938 = vmatprep.subr.mxu0 0.0
      %2939 = vmatpush1.msra.mxu0 0.0
      %2940 = vmatprep.subr.mxu0 0.0
      %2941 = vmatpush1.msra.mxu0 0.0
      %2942 = vmatprep.subr.mxu0 0.0
      %2943 = vmatpush1.msra.mxu0 0.0
      %2944 = vmatprep.subr.mxu0 0.0
      %2945 = vmatpush1.msra.mxu0 0.0
      %2946 = vmatprep.subr.mxu0 0.0
      %2947 = vmatpush1.msra.mxu0 0.0
      %2948 = vmatprep.subr.mxu0 0.0
      %2949 = vmatpush1.msra.mxu0 0.0
      %2950 = vmatprep.subr.mxu0 0.0
      %2951 = vmatpush1.msra.mxu0 0.0
      %2952 = vmatprep.subr.mxu0 0.0
      %2953 = vmatpush1.msra.mxu0 0.0
      %2954 = vmatprep.subr.mxu0 0.0
      %2955 = vmatpush1.msra.mxu0 0.0
      %2956 = vmatprep.subr.mxu0 0.0
      %2957 = vmatpush1.msra.mxu0 0.0
      %2958 = vmatprep.subr.mxu0 0.0
      %2959 = vmatpush1.msra.mxu0 0.0
      %2960 = vmatprep.subr.mxu0 0.0
      %2961 = vmatpush1.msra.mxu0 0.0
      %2962 = vmatprep.subr.mxu0 0.0
      %2963 = vmatpush1.msra.mxu0 0.0
      %2964 = vmatprep.subr.mxu0 0.0
      %2965 = vmatpush1.msra.mxu0 0.0
      %2966 = vmatprep.subr.mxu0 0.0
      %2967 = vmatpush1.msra.mxu0 0.0
      %2968 = vmatprep.subr.mxu0 0.0
      %2969 = vmatpush1.msra.mxu0 0.0
      %2970 = vmatprep.subr.mxu0 0.0
      %2971 = vmatpush1.msra.mxu0 0.0
      %2972 = vmatprep.subr.mxu0 0.0
      %2973 = vmatpush1.msra.mxu0 0.0
      %2974 = vmatprep.subr.mxu0 0.0
      %2975 = vmatpush1.msra.mxu0 0.0
      %2976 = vmatprep.subr.mxu0 0.0
      %2977 = vmatpush1.msra.mxu0 0.0
      %2978 = vmatprep.subr.mxu0 0.0
      %2979 = vmatpush1.msra.mxu0 0.0
      %2980 = vmatprep.subr.mxu0 0.0
      %2981 = vmatpush1.msra.mxu0 0.0
      %2982 = vmatprep.subr.mxu0 0.0
      %2983 = vmatpush1.msra.mxu0 0.0
      %2984 = vmatprep.subr.mxu0 0.0
      %2985 = vmatpush1.msra.mxu0 0.0
      %2986 = vmatprep.subr.mxu0 0.0
      %2987 = vmatpush1.msra.mxu0 0.0
      %2988 = vmatprep.subr.mxu0 0.0
      %2989 = vmatpush1.msra.mxu0 0.0
      %2990 = vmatprep.subr.mxu0 0.0
      %2991 = vmatpush1.msra.mxu0 0.0
      %2992 = vmatprep.subr.mxu0 0.0
      %2993 = vmatpush1.msra.mxu0 0.0
      %2994 = vmatprep.subr.mxu0 0.0
      %2995 = vmatpush1.msra.mxu0 0.0
      %2996 = vmatprep.mubr.f32.mxu0 0.0
      %2997 = vmatmul.mubr.f32.gmra.mrb[0].mxu0 %v2928
      %v2998 = vpop.f32.mrb[0].mxu0
      %v2999 = vadd.f32 0.0, %v2998
      %v3000 = vpop.f32.mrb[0].mxu0
      %3001 = vdwg.mxu0
      %v3002 = vadd.f32 %v2911, %v2999
      %v3003 = vld [vmem:[%s193 + $0x16] sm:$0x1]
      %v3004 = vld [vmem:[%s193 + $0x36] sm:$0x1]
      %v3005 = vld [vmem:[%s193 + $0x56] sm:$0x1]
      %v3006 = vld [vmem:[%s193 + $0x76] sm:$0x1]
      %v3007 = vld [vmem:[%s394] sm:$0xff]
      %v3012 = vrot.slane %v3004, 7
      %v3013 = vsel %vm220, %v3012, %v3003
      %v3014 = vrot.slane %v3005, 6
      %v3015 = vsel %vm223, %v3014, %v3013
      %v3016 = vrot.slane %v3006, 5
      %v3017 = vsel %vm226, %v3016, %v3015
      %v3019 = vsel %vm228, %v3007, 0
      %v3021 = vsel %vm232, %v3017, 0
      %3023 = vmatprep.subr.mxu0 0.0
      %3024 = vmatpush1.msra.mxu0 %v3021
      %3025 = vmatprep.subr.mxu0 0.0
      %3026 = vmatpush1.msra.mxu0 0.0
      %3027 = vmatprep.subr.mxu0 0.0
      %3028 = vmatpush1.msra.mxu0 0.0
      %3029 = vmatprep.subr.mxu0 0.0
      %3030 = vmatpush1.msra.mxu0 0.0
      %3031 = vmatprep.subr.mxu0 0.0
      %3032 = vmatpush1.msra.mxu0 0.0
      %3033 = vmatprep.subr.mxu0 0.0
      %3034 = vmatpush1.msra.mxu0 0.0
      %3035 = vmatprep.subr.mxu0 0.0
      %3036 = vmatpush1.msra.mxu0 0.0
      %3037 = vmatprep.subr.mxu0 0.0
      %3038 = vmatpush1.msra.mxu0 0.0
      %3039 = vmatprep.subr.mxu0 0.0
      %3040 = vmatpush1.msra.mxu0 0.0
      %3041 = vmatprep.subr.mxu0 0.0
      %3042 = vmatpush1.msra.mxu0 0.0
      %3043 = vmatprep.subr.mxu0 0.0
      %3044 = vmatpush1.msra.mxu0 0.0
      %3045 = vmatprep.subr.mxu0 0.0
      %3046 = vmatpush1.msra.mxu0 0.0
      %3047 = vmatprep.subr.mxu0 0.0
      %3048 = vmatpush1.msra.mxu0 0.0
      %3049 = vmatprep.subr.mxu0 0.0
      %3050 = vmatpush1.msra.mxu0 0.0
      %3051 = vmatprep.subr.mxu0 0.0
      %3052 = vmatpush1.msra.mxu0 0.0
      %3053 = vmatprep.subr.mxu0 0.0
      %3054 = vmatpush1.msra.mxu0 0.0
      %3055 = vmatprep.subr.mxu0 0.0
      %3056 = vmatpush1.msra.mxu0 0.0
      %3057 = vmatprep.subr.mxu0 0.0
      %3058 = vmatpush1.msra.mxu0 0.0
      %3059 = vmatprep.subr.mxu0 0.0
      %3060 = vmatpush1.msra.mxu0 0.0
      %3061 = vmatprep.subr.mxu0 0.0
      %3062 = vmatpush1.msra.mxu0 0.0
      %3063 = vmatprep.subr.mxu0 0.0
      %3064 = vmatpush1.msra.mxu0 0.0
      %3065 = vmatprep.subr.mxu0 0.0
      %3066 = vmatpush1.msra.mxu0 0.0
      %3067 = vmatprep.subr.mxu0 0.0
      %3068 = vmatpush1.msra.mxu0 0.0
      %3069 = vmatprep.subr.mxu0 0.0
      %3070 = vmatpush1.msra.mxu0 0.0
      %3071 = vmatprep.subr.mxu0 0.0
      %3072 = vmatpush1.msra.mxu0 0.0
      %3073 = vmatprep.subr.mxu0 0.0
      %3074 = vmatpush1.msra.mxu0 0.0
      %3075 = vmatprep.subr.mxu0 0.0
      %3076 = vmatpush1.msra.mxu0 0.0
      %3077 = vmatprep.subr.mxu0 0.0
      %3078 = vmatpush1.msra.mxu0 0.0
      %3079 = vmatprep.subr.mxu0 0.0
      %3080 = vmatpush1.msra.mxu0 0.0
      %3081 = vmatprep.subr.mxu0 0.0
      %3082 = vmatpush1.msra.mxu0 0.0
      %3083 = vmatprep.subr.mxu0 0.0
      %3084 = vmatpush1.msra.mxu0 0.0
      %3085 = vmatprep.subr.mxu0 0.0
      %3086 = vmatpush1.msra.mxu0 0.0
      %3087 = vmatprep.mubr.f32.mxu0 0.0
      %3088 = vmatmul.mubr.f32.gmra.mrb[0].mxu0 %v3019
      %v3089 = vpop.f32.mrb[0].mxu0
      %v3090 = vadd.f32 0.0, %v3089
      %v3091 = vpop.f32.mrb[0].mxu0
      %3092 = vdwg.mxu0
      %v3093 = vadd.f32 %v3002, %v3090
      %v3094 = vadd.f32 %v3093, %v485
      %v3095 = vmax.f32 %v3094, 0.0
      %v3097 = vcombine.high %v3095, %v3095
      %v3099 = vunpack.c.l.s4 1966171168
      %v3100 = vunpack.c.0.s8 %v3099
      %v3101 = vlaneseq
      %v3102 = vshrl.u32 %v3101, 7
      %v3103 = vsub.s32 %v3100, %v3102
      %v3104 = vrot.slane %v3095, %v3103
      %v3106 = vunpack.c.l.s4 1966171168
      %v3107 = vunpack.c.0.s8 %v3106
      %v3108 = vlaneseq
      %v3109 = vshrl.u32 %v3108, 7
      %v3110 = vsub.s32 %v3107, %v3109
      %v3111 = vrot.slane %v3097, %v3110
      %v3112 = vcombine.high %v3104, %v3104
      %v3113 = vcombine.high %v3111, %v3111
      %v3115 = vunpack.c.l.s4 1966171168
      %v3116 = vunpack.c.0.s8 %v3115
      %v3117 = vlaneseq
      %v3118 = vshrl.u32 %v3117, 7
      %v3119 = vsub.s32 %v3116, %v3118
      %v3120 = vrot.slane %v3104, %v3119
      %v3122 = vunpack.c.l.s4 1966171168
      %v3123 = vunpack.c.0.s8 %v3122
      %v3124 = vlaneseq
      %v3125 = vshrl.u32 %v3124, 7
      %v3126 = vsub.s32 %v3123, %v3125
      %v3127 = vrot.slane %v3111, %v3126
      %v3129 = vunpack.c.l.s4 1966171168
      %v3130 = vunpack.c.0.s8 %v3129
      %v3131 = vlaneseq
      %v3132 = vshrl.u32 %v3131, 7
      %v3133 = vsub.s32 %v3130, %v3132
      %v3134 = vrot.slane %v3112, %v3133
      %v3136 = vunpack.c.l.s4 1966171168
      %v3137 = vunpack.c.0.s8 %v3136
      %v3138 = vlaneseq
      %v3139 = vshrl.u32 %v3138, 7
      %v3140 = vsub.s32 %v3137, %v3139
      %v3141 = vrot.slane %v3113, %v3140
      %v3142 = vcombine.high %v3120, %v3120
      %v3143 = vcombine.high %v3127, %v3127
      %v3144 = vcombine.high %v3134, %v3134
      %v3145 = vcombine.high %v3141, %v3141
      %3154 = vst.msk [vmem:[%s201 + $0x5] sm:$0x1] %vm547, %v3120
      %3155 = vst.msk [vmem:[%s201 + $0xd] sm:$0x1] %vm547, %v3134
      %3156 = vst.msk [vmem:[%s201 + $0x15] sm:$0x1] %vm547, %v3142
      %3157 = vst.msk [vmem:[%s201 + $0x1d] sm:$0x1] %vm547, %v3144
      %3158 = vst.msk [vmem:[%s201 + $0x25] sm:$0x1] %vm547, %v3127
      %3159 = vst.msk [vmem:[%s201 + $0x2d] sm:$0x1] %vm547, %v3141
      %3160 = vst.msk [vmem:[%s201 + $0x35] sm:$0x1] %vm547, %v3143
      %3161 = vst.msk [vmem:[%s201 + $0x3d] sm:$0x1] %vm547, %v3145
      %v3162 = vld [vmem:[%s193 + $0x16] sm:$0x1]
      %v3163 = vld [vmem:[%s193 + $0x36] sm:$0x1]
      %v3164 = vld [vmem:[%s193 + $0x56] sm:$0x1]
      %v3165 = vld [vmem:[%s193 + $0x76] sm:$0x1]
      %v3166 = vld [vmem:[%s1] sm:$0xff]
      %v3167 = vld [vmem:[%s193 + $0x17] sm:$0x1]
      %v3168 = vld [vmem:[%s193 + $0x37] sm:$0x1]
      %v3169 = vld [vmem:[%s193 + $0x57] sm:$0x1]
      %v3170 = vld [vmem:[%s193 + $0x77] sm:$0x1]
      %v3171 = vld [vmem:[%s565] sm:$0xff]
      %v3176 = vrot.slane %v3168, 7
      %v3177 = vsel %vm220, %v3176, %v3167
      %v3178 = vrot.slane %v3169, 6
      %v3179 = vsel %vm223, %v3178, %v3177
      %v3180 = vrot.slane %v3170, 5
      %v3181 = vsel %vm226, %v3180, %v3179
      %v3183 = vsel %vm228, %v3171, 0
      %v3185 = vsel %vm232, %v3181, 0
      %3187 = vmatprep.subr.mxu0 0.0
      %3188 = vmatpush1.msra.mxu0 %v3185
      %3189 = vmatprep.subr.mxu0 0.0
      %3190 = vmatpush1.msra.mxu0 0.0
      %3191 = vmatprep.subr.mxu0 0.0
      %3192 = vmatpush1.msra.mxu0 0.0
      %3193 = vmatprep.subr.mxu0 0.0
      %3194 = vmatpush1.msra.mxu0 0.0
      %3195 = vmatprep.subr.mxu0 0.0
      %3196 = vmatpush1.msra.mxu0 0.0
      %3197 = vmatprep.subr.mxu0 0.0
      %3198 = vmatpush1.msra.mxu0 0.0
      %3199 = vmatprep.subr.mxu0 0.0
      %3200 = vmatpush1.msra.mxu0 0.0
      %3201 = vmatprep.subr.mxu0 0.0
      %3202 = vmatpush1.msra.mxu0 0.0
      %3203 = vmatprep.subr.mxu0 0.0
      %3204 = vmatpush1.msra.mxu0 0.0
      %3205 = vmatprep.subr.mxu0 0.0
      %3206 = vmatpush1.msra.mxu0 0.0
      %3207 = vmatprep.subr.mxu0 0.0
      %3208 = vmatpush1.msra.mxu0 0.0
      %3209 = vmatprep.subr.mxu0 0.0
      %3210 = vmatpush1.msra.mxu0 0.0
      %3211 = vmatprep.subr.mxu0 0.0
      %3212 = vmatpush1.msra.mxu0 0.0
      %3213 = vmatprep.subr.mxu0 0.0
      %3214 = vmatpush1.msra.mxu0 0.0
      %3215 = vmatprep.subr.mxu0 0.0
      %3216 = vmatpush1.msra.mxu0 0.0
      %3217 = vmatprep.subr.mxu0 0.0
      %3218 = vmatpush1.msra.mxu0 0.0
      %3219 = vmatprep.subr.mxu0 0.0
      %3220 = vmatpush1.msra.mxu0 0.0
      %3221 = vmatprep.subr.mxu0 0.0
      %3222 = vmatpush1.msra.mxu0 0.0
      %3223 = vmatprep.subr.mxu0 0.0
      %3224 = vmatpush1.msra.mxu0 0.0
      %3225 = vmatprep.subr.mxu0 0.0
      %3226 = vmatpush1.msra.mxu0 0.0
      %3227 = vmatprep.subr.mxu0 0.0
      %3228 = vmatpush1.msra.mxu0 0.0
      %3229 = vmatprep.subr.mxu0 0.0
      %3230 = vmatpush1.msra.mxu0 0.0
      %3231 = vmatprep.subr.mxu0 0.0
      %3232 = vmatpush1.msra.mxu0 0.0
      %3233 = vmatprep.subr.mxu0 0.0
      %3234 = vmatpush1.msra.mxu0 0.0
      %3235 = vmatprep.subr.mxu0 0.0
      %3236 = vmatpush1.msra.mxu0 0.0
      %3237 = vmatprep.subr.mxu0 0.0
      %3238 = vmatpush1.msra.mxu0 0.0
      %3239 = vmatprep.subr.mxu0 0.0
      %3240 = vmatpush1.msra.mxu0 0.0
      %3241 = vmatprep.subr.mxu0 0.0
      %3242 = vmatpush1.msra.mxu0 0.0
      %3243 = vmatprep.subr.mxu0 0.0
      %3244 = vmatpush1.msra.mxu0 0.0
      %3245 = vmatprep.subr.mxu0 0.0
      %3246 = vmatpush1.msra.mxu0 0.0
      %3247 = vmatprep.subr.mxu0 0.0
      %3248 = vmatpush1.msra.mxu0 0.0
      %3249 = vmatprep.subr.mxu0 0.0
      %3250 = vmatpush1.msra.mxu0 0.0
      %3251 = vmatprep.mubr.f32.mxu0 0.0
      %3252 = vmatmul.mubr.f32.gmra.mrb[0].mxu0 %v3183
      %v3253 = vpop.f32.mrb[0].mxu0
      %v3254 = vadd.f32 0.0, %v3253
      %v3255 = vpop.f32.mrb[0].mxu0
      %3256 = vdwg.mxu0
      %v3261 = vrot.slane %v3163, 7
      %v3262 = vsel %vm220, %v3261, %v3162
      %v3263 = vrot.slane %v3164, 6
      %v3264 = vsel %vm223, %v3263, %v3262
      %v3265 = vrot.slane %v3165, 5
      %v3266 = vsel %vm226, %v3265, %v3264
      %v3268 = vsel %vm228, %v3166, 0
      %v3270 = vsel %vm232, %v3266, 0
      %3272 = vmatprep.subr.mxu0 0.0
      %3273 = vmatpush1.msra.mxu0 %v3270
      %3274 = vmatprep.subr.mxu0 0.0
      %3275 = vmatpush1.msra.mxu0 0.0
      %3276 = vmatprep.subr.mxu0 0.0
      %3277 = vmatpush1.msra.mxu0 0.0
      %3278 = vmatprep.subr.mxu0 0.0
      %3279 = vmatpush1.msra.mxu0 0.0
      %3280 = vmatprep.subr.mxu0 0.0
      %3281 = vmatpush1.msra.mxu0 0.0
      %3282 = vmatprep.subr.mxu0 0.0
      %3283 = vmatpush1.msra.mxu0 0.0
      %3284 = vmatprep.subr.mxu0 0.0
      %3285 = vmatpush1.msra.mxu0 0.0
      %3286 = vmatprep.subr.mxu0 0.0
      %3287 = vmatpush1.msra.mxu0 0.0
      %3288 = vmatprep.subr.mxu0 0.0
      %3289 = vmatpush1.msra.mxu0 0.0
      %3290 = vmatprep.subr.mxu0 0.0
      %3291 = vmatpush1.msra.mxu0 0.0
      %3292 = vmatprep.subr.mxu0 0.0
      %3293 = vmatpush1.msra.mxu0 0.0
      %3294 = vmatprep.subr.mxu0 0.0
      %3295 = vmatpush1.msra.mxu0 0.0
      %3296 = vmatprep.subr.mxu0 0.0
      %3297 = vmatpush1.msra.mxu0 0.0
      %3298 = vmatprep.subr.mxu0 0.0
      %3299 = vmatpush1.msra.mxu0 0.0
      %3300 = vmatprep.subr.mxu0 0.0
      %3301 = vmatpush1.msra.mxu0 0.0
      %3302 = vmatprep.subr.mxu0 0.0
      %3303 = vmatpush1.msra.mxu0 0.0
      %3304 = vmatprep.subr.mxu0 0.0
      %3305 = vmatpush1.msra.mxu0 0.0
      %3306 = vmatprep.subr.mxu0 0.0
      %3307 = vmatpush1.msra.mxu0 0.0
      %3308 = vmatprep.subr.mxu0 0.0
      %3309 = vmatpush1.msra.mxu0 0.0
      %3310 = vmatprep.subr.mxu0 0.0
      %3311 = vmatpush1.msra.mxu0 0.0
      %3312 = vmatprep.subr.mxu0 0.0
      %3313 = vmatpush1.msra.mxu0 0.0
      %3314 = vmatprep.subr.mxu0 0.0
      %3315 = vmatpush1.msra.mxu0 0.0
      %3316 = vmatprep.subr.mxu0 0.0
      %3317 = vmatpush1.msra.mxu0 0.0
      %3318 = vmatprep.subr.mxu0 0.0
      %3319 = vmatpush1.msra.mxu0 0.0
      %3320 = vmatprep.subr.mxu0 0.0
      %3321 = vmatpush1.msra.mxu0 0.0
      %3322 = vmatprep.subr.mxu0 0.0
      %3323 = vmatpush1.msra.mxu0 0.0
      %3324 = vmatprep.subr.mxu0 0.0
      %3325 = vmatpush1.msra.mxu0 0.0
      %3326 = vmatprep.subr.mxu0 0.0
      %3327 = vmatpush1.msra.mxu0 0.0
      %3328 = vmatprep.subr.mxu0 0.0
      %3329 = vmatpush1.msra.mxu0 0.0
      %3330 = vmatprep.subr.mxu0 0.0
      %3331 = vmatpush1.msra.mxu0 0.0
      %3332 = vmatprep.subr.mxu0 0.0
      %3333 = vmatpush1.msra.mxu0 0.0
      %3334 = vmatprep.subr.mxu0 0.0
      %3335 = vmatpush1.msra.mxu0 0.0
      %3336 = vmatprep.mubr.f32.mxu0 0.0
      %3337 = vmatmul.mubr.f32.gmra.mrb[0].mxu0 %v3268
      %v3338 = vpop.f32.mrb[0].mxu0
      %v3339 = vadd.f32 %v3254, %v3338
      %v3340 = vpop.f32.mrb[0].mxu0
      %3341 = vdwg.mxu0
      %v3342 = vld [vmem:[%s193 + $0x18] sm:$0x1]
      %v3343 = vld [vmem:[%s193 + $0x38] sm:$0x1]
      %v3344 = vld [vmem:[%s193 + $0x58] sm:$0x1]
      %v3345 = vld [vmem:[%s193 + $0x78] sm:$0x1]
      %v3346 = vld [vmem:[%s207] sm:$0xff]
      %v3351 = vrot.slane %v3343, 7
      %v3352 = vsel %vm220, %v3351, %v3342
      %v3353 = vrot.slane %v3344, 6
      %v3354 = vsel %vm223, %v3353, %v3352
      %v3355 = vrot.slane %v3345, 5
      %v3356 = vsel %vm226, %v3355, %v3354
      %v3358 = vsel %vm228, %v3346, 0
      %v3360 = vsel %vm232, %v3356, 0
      %3362 = vmatprep.subr.mxu0 0.0
      %3363 = vmatpush1.msra.mxu0 %v3360
      %3364 = vmatprep.subr.mxu0 0.0
      %3365 = vmatpush1.msra.mxu0 0.0
      %3366 = vmatprep.subr.mxu0 0.0
      %3367 = vmatpush1.msra.mxu0 0.0
      %3368 = vmatprep.subr.mxu0 0.0
      %3369 = vmatpush1.msra.mxu0 0.0
      %3370 = vmatprep.subr.mxu0 0.0
      %3371 = vmatpush1.msra.mxu0 0.0
      %3372 = vmatprep.subr.mxu0 0.0
      %3373 = vmatpush1.msra.mxu0 0.0
      %3374 = vmatprep.subr.mxu0 0.0
      %3375 = vmatpush1.msra.mxu0 0.0
      %3376 = vmatprep.subr.mxu0 0.0
      %3377 = vmatpush1.msra.mxu0 0.0
      %3378 = vmatprep.subr.mxu0 0.0
      %3379 = vmatpush1.msra.mxu0 0.0
      %3380 = vmatprep.subr.mxu0 0.0
      %3381 = vmatpush1.msra.mxu0 0.0
      %3382 = vmatprep.subr.mxu0 0.0
      %3383 = vmatpush1.msra.mxu0 0.0
      %3384 = vmatprep.subr.mxu0 0.0
      %3385 = vmatpush1.msra.mxu0 0.0
      %3386 = vmatprep.subr.mxu0 0.0
      %3387 = vmatpush1.msra.mxu0 0.0
      %3388 = vmatprep.subr.mxu0 0.0
      %3389 = vmatpush1.msra.mxu0 0.0
      %3390 = vmatprep.subr.mxu0 0.0
      %3391 = vmatpush1.msra.mxu0 0.0
      %3392 = vmatprep.subr.mxu0 0.0
      %3393 = vmatpush1.msra.mxu0 0.0
      %3394 = vmatprep.subr.mxu0 0.0
      %3395 = vmatpush1.msra.mxu0 0.0
      %3396 = vmatprep.subr.mxu0 0.0
      %3397 = vmatpush1.msra.mxu0 0.0
      %3398 = vmatprep.subr.mxu0 0.0
      %3399 = vmatpush1.msra.mxu0 0.0
      %3400 = vmatprep.subr.mxu0 0.0
      %3401 = vmatpush1.msra.mxu0 0.0
      %3402 = vmatprep.subr.mxu0 0.0
      %3403 = vmatpush1.msra.mxu0 0.0
      %3404 = vmatprep.subr.mxu0 0.0
      %3405 = vmatpush1.msra.mxu0 0.0
      %3406 = vmatprep.subr.mxu0 0.0
      %3407 = vmatpush1.msra.mxu0 0.0
      %3408 = vmatprep.subr.mxu0 0.0
      %3409 = vmatpush1.msra.mxu0 0.0
      %3410 = vmatprep.subr.mxu0 0.0
      %3411 = vmatpush1.msra.mxu0 0.0
      %3412 = vmatprep.subr.mxu0 0.0
      %3413 = vmatpush1.msra.mxu0 0.0
      %3414 = vmatprep.subr.mxu0 0.0
      %3415 = vmatpush1.msra.mxu0 0.0
      %3416 = vmatprep.subr.mxu0 0.0
      %3417 = vmatpush1.msra.mxu0 0.0
      %3418 = vmatprep.subr.mxu0 0.0
      %3419 = vmatpush1.msra.mxu0 0.0
      %3420 = vmatprep.subr.mxu0 0.0
      %3421 = vmatpush1.msra.mxu0 0.0
      %3422 = vmatprep.subr.mxu0 0.0
      %3423 = vmatpush1.msra.mxu0 0.0
      %3424 = vmatprep.subr.mxu0 0.0
      %3425 = vmatpush1.msra.mxu0 0.0
      %3426 = vmatprep.mubr.f32.mxu0 0.0
      %3427 = vmatmul.mubr.f32.gmra.mrb[0].mxu0 %v3358
      %v3428 = vpop.f32.mrb[0].mxu0
      %v3429 = vadd.f32 0.0, %v3428
      %v3430 = vpop.f32.mrb[0].mxu0
      %3431 = vdwg.mxu0
      %v3432 = vadd.f32 %v3339, %v3429
      %v3433 = vld [vmem:[%s193 + $0x19] sm:$0x1]
      %v3434 = vld [vmem:[%s193 + $0x39] sm:$0x1]
      %v3435 = vld [vmem:[%s193 + $0x59] sm:$0x1]
      %v3436 = vld [vmem:[%s193 + $0x79] sm:$0x1]
      %v3437 = vld [vmem:[%s213] sm:$0xff]
      %v3442 = vrot.slane %v3434, 7
      %v3443 = vsel %vm220, %v3442, %v3433
      %v3444 = vrot.slane %v3435, 6
      %v3445 = vsel %vm223, %v3444, %v3443
      %v3446 = vrot.slane %v3436, 5
      %v3447 = vsel %vm226, %v3446, %v3445
      %v3449 = vsel %vm228, %v3437, 0
      %v3451 = vsel %vm232, %v3447, 0
      %3453 = vmatprep.subr.mxu0 0.0
      %3454 = vmatpush1.msra.mxu0 %v3451
      %3455 = vmatprep.subr.mxu0 0.0
      %3456 = vmatpush1.msra.mxu0 0.0
      %3457 = vmatprep.subr.mxu0 0.0
      %3458 = vmatpush1.msra.mxu0 0.0
      %3459 = vmatprep.subr.mxu0 0.0
      %3460 = vmatpush1.msra.mxu0 0.0
      %3461 = vmatprep.subr.mxu0 0.0
      %3462 = vmatpush1.msra.mxu0 0.0
      %3463 = vmatprep.subr.mxu0 0.0
      %3464 = vmatpush1.msra.mxu0 0.0
      %3465 = vmatprep.subr.mxu0 0.0
      %3466 = vmatpush1.msra.mxu0 0.0
      %3467 = vmatprep.subr.mxu0 0.0
      %3468 = vmatpush1.msra.mxu0 0.0
      %3469 = vmatprep.subr.mxu0 0.0
      %3470 = vmatpush1.msra.mxu0 0.0
      %3471 = vmatprep.subr.mxu0 0.0
      %3472 = vmatpush1.msra.mxu0 0.0
      %3473 = vmatprep.subr.mxu0 0.0
      %3474 = vmatpush1.msra.mxu0 0.0
      %3475 = vmatprep.subr.mxu0 0.0
      %3476 = vmatpush1.msra.mxu0 0.0
      %3477 = vmatprep.subr.mxu0 0.0
      %3478 = vmatpush1.msra.mxu0 0.0
      %3479 = vmatprep.subr.mxu0 0.0
      %3480 = vmatpush1.msra.mxu0 0.0
      %3481 = vmatprep.subr.mxu0 0.0
      %3482 = vmatpush1.msra.mxu0 0.0
      %3483 = vmatprep.subr.mxu0 0.0
      %3484 = vmatpush1.msra.mxu0 0.0
      %3485 = vmatprep.subr.mxu0 0.0
      %3486 = vmatpush1.msra.mxu0 0.0
      %3487 = vmatprep.subr.mxu0 0.0
      %3488 = vmatpush1.msra.mxu0 0.0
      %3489 = vmatprep.subr.mxu0 0.0
      %3490 = vmatpush1.msra.mxu0 0.0
      %3491 = vmatprep.subr.mxu0 0.0
      %3492 = vmatpush1.msra.mxu0 0.0
      %3493 = vmatprep.subr.mxu0 0.0
      %3494 = vmatpush1.msra.mxu0 0.0
      %3495 = vmatprep.subr.mxu0 0.0
      %3496 = vmatpush1.msra.mxu0 0.0
      %3497 = vmatprep.subr.mxu0 0.0
      %3498 = vmatpush1.msra.mxu0 0.0
      %3499 = vmatprep.subr.mxu0 0.0
      %3500 = vmatpush1.msra.mxu0 0.0
      %3501 = vmatprep.subr.mxu0 0.0
      %3502 = vmatpush1.msra.mxu0 0.0
      %3503 = vmatprep.subr.mxu0 0.0
      %3504 = vmatpush1.msra.mxu0 0.0
      %3505 = vmatprep.subr.mxu0 0.0
      %3506 = vmatpush1.msra.mxu0 0.0
      %3507 = vmatprep.subr.mxu0 0.0
      %3508 = vmatpush1.msra.mxu0 0.0
      %3509 = vmatprep.subr.mxu0 0.0
      %3510 = vmatpush1.msra.mxu0 0.0
      %3511 = vmatprep.subr.mxu0 0.0
      %3512 = vmatpush1.msra.mxu0 0.0
      %3513 = vmatprep.subr.mxu0 0.0
      %3514 = vmatpush1.msra.mxu0 0.0
      %3515 = vmatprep.subr.mxu0 0.0
      %3516 = vmatpush1.msra.mxu0 0.0
      %3517 = vmatprep.mubr.f32.mxu0 0.0
      %3518 = vmatmul.mubr.f32.gmra.mrb[0].mxu0 %v3449
      %v3519 = vpop.f32.mrb[0].mxu0
      %v3520 = vadd.f32 0.0, %v3519
      %v3521 = vpop.f32.mrb[0].mxu0
      %3522 = vdwg.mxu0
      %v3523 = vadd.f32 %v3432, %v3520
      %v3524 = vld [vmem:[%s193 + $0x1a] sm:$0x1]
      %v3525 = vld [vmem:[%s193 + $0x3a] sm:$0x1]
      %v3526 = vld [vmem:[%s193 + $0x5a] sm:$0x1]
      %v3527 = vld [vmem:[%s193 + $0x7a] sm:$0x1]
      %v3528 = vld [vmem:[%s394] sm:$0xff]
      %v3533 = vrot.slane %v3525, 7
      %v3534 = vsel %vm220, %v3533, %v3524
      %v3535 = vrot.slane %v3526, 6
      %v3536 = vsel %vm223, %v3535, %v3534
      %v3537 = vrot.slane %v3527, 5
      %v3538 = vsel %vm226, %v3537, %v3536
      %v3540 = vsel %vm228, %v3528, 0
      %v3542 = vsel %vm232, %v3538, 0
      %3544 = vmatprep.subr.mxu0 0.0
      %3545 = vmatpush1.msra.mxu0 %v3542
      %3546 = vmatprep.subr.mxu0 0.0
      %3547 = vmatpush1.msra.mxu0 0.0
      %3548 = vmatprep.subr.mxu0 0.0
      %3549 = vmatpush1.msra.mxu0 0.0
      %3550 = vmatprep.subr.mxu0 0.0
      %3551 = vmatpush1.msra.mxu0 0.0
      %3552 = vmatprep.subr.mxu0 0.0
      %3553 = vmatpush1.msra.mxu0 0.0
      %3554 = vmatprep.subr.mxu0 0.0
      %3555 = vmatpush1.msra.mxu0 0.0
      %3556 = vmatprep.subr.mxu0 0.0
      %3557 = vmatpush1.msra.mxu0 0.0
      %3558 = vmatprep.subr.mxu0 0.0
      %3559 = vmatpush1.msra.mxu0 0.0
      %3560 = vmatprep.subr.mxu0 0.0
      %3561 = vmatpush1.msra.mxu0 0.0
      %3562 = vmatprep.subr.mxu0 0.0
      %3563 = vmatpush1.msra.mxu0 0.0
      %3564 = vmatprep.subr.mxu0 0.0
      %3565 = vmatpush1.msra.mxu0 0.0
      %3566 = vmatprep.subr.mxu0 0.0
      %3567 = vmatpush1.msra.mxu0 0.0
      %3568 = vmatprep.subr.mxu0 0.0
      %3569 = vmatpush1.msra.mxu0 0.0
      %3570 = vmatprep.subr.mxu0 0.0
      %3571 = vmatpush1.msra.mxu0 0.0
      %3572 = vmatprep.subr.mxu0 0.0
      %3573 = vmatpush1.msra.mxu0 0.0
      %3574 = vmatprep.subr.mxu0 0.0
      %3575 = vmatpush1.msra.mxu0 0.0
      %3576 = vmatprep.subr.mxu0 0.0
      %3577 = vmatpush1.msra.mxu0 0.0
      %3578 = vmatprep.subr.mxu0 0.0
      %3579 = vmatpush1.msra.mxu0 0.0
      %3580 = vmatprep.subr.mxu0 0.0
      %3581 = vmatpush1.msra.mxu0 0.0
      %3582 = vmatprep.subr.mxu0 0.0
      %3583 = vmatpush1.msra.mxu0 0.0
      %3584 = vmatprep.subr.mxu0 0.0
      %3585 = vmatpush1.msra.mxu0 0.0
      %3586 = vmatprep.subr.mxu0 0.0
      %3587 = vmatpush1.msra.mxu0 0.0
      %3588 = vmatprep.subr.mxu0 0.0
      %3589 = vmatpush1.msra.mxu0 0.0
      %3590 = vmatprep.subr.mxu0 0.0
      %3591 = vmatpush1.msra.mxu0 0.0
      %3592 = vmatprep.subr.mxu0 0.0
      %3593 = vmatpush1.msra.mxu0 0.0
      %3594 = vmatprep.subr.mxu0 0.0
      %3595 = vmatpush1.msra.mxu0 0.0
      %3596 = vmatprep.subr.mxu0 0.0
      %3597 = vmatpush1.msra.mxu0 0.0
      %3598 = vmatprep.subr.mxu0 0.0
      %3599 = vmatpush1.msra.mxu0 0.0
      %3600 = vmatprep.subr.mxu0 0.0
      %3601 = vmatpush1.msra.mxu0 0.0
      %3602 = vmatprep.subr.mxu0 0.0
      %3603 = vmatpush1.msra.mxu0 0.0
      %3604 = vmatprep.subr.mxu0 0.0
      %3605 = vmatpush1.msra.mxu0 0.0
      %3606 = vmatprep.subr.mxu0 0.0
      %3607 = vmatpush1.msra.mxu0 0.0
      %3608 = vmatprep.mubr.f32.mxu0 0.0
      %3609 = vmatmul.mubr.f32.gmra.mrb[0].mxu0 %v3540
      %v3610 = vpop.f32.mrb[0].mxu0
      %v3611 = vadd.f32 0.0, %v3610
      %v3612 = vpop.f32.mrb[0].mxu0
      %3613 = vdwg.mxu0
      %v3614 = vadd.f32 %v3523, %v3611
      %v3615 = vadd.f32 %v3614, %v485
      %v3616 = vmax.f32 %v3615, 0.0
      %v3618 = vcombine.high %v3616, %v3616
      %v3620 = vunpack.c.l.s4 1966171168
      %v3621 = vunpack.c.0.s8 %v3620
      %v3622 = vlaneseq
      %v3623 = vshrl.u32 %v3622, 7
      %v3624 = vsub.s32 %v3621, %v3623
      %v3625 = vrot.slane %v3616, %v3624
      %v3627 = vunpack.c.l.s4 1966171168
      %v3628 = vunpack.c.0.s8 %v3627
      %v3629 = vlaneseq
      %v3630 = vshrl.u32 %v3629, 7
      %v3631 = vsub.s32 %v3628, %v3630
      %v3632 = vrot.slane %v3618, %v3631
      %v3633 = vcombine.high %v3625, %v3625
      %v3634 = vcombine.high %v3632, %v3632
      %v3636 = vunpack.c.l.s4 1966171168
      %v3637 = vunpack.c.0.s8 %v3636
      %v3638 = vlaneseq
      %v3639 = vshrl.u32 %v3638, 7
      %v3640 = vsub.s32 %v3637, %v3639
      %v3641 = vrot.slane %v3625, %v3640
      %v3643 = vunpack.c.l.s4 1966171168
      %v3644 = vunpack.c.0.s8 %v3643
      %v3645 = vlaneseq
      %v3646 = vshrl.u32 %v3645, 7
      %v3647 = vsub.s32 %v3644, %v3646
      %v3648 = vrot.slane %v3632, %v3647
      %v3650 = vunpack.c.l.s4 1966171168
      %v3651 = vunpack.c.0.s8 %v3650
      %v3652 = vlaneseq
      %v3653 = vshrl.u32 %v3652, 7
      %v3654 = vsub.s32 %v3651, %v3653
      %v3655 = vrot.slane %v3633, %v3654
      %v3657 = vunpack.c.l.s4 1966171168
      %v3658 = vunpack.c.0.s8 %v3657
      %v3659 = vlaneseq
      %v3660 = vshrl.u32 %v3659, 7
      %v3661 = vsub.s32 %v3658, %v3660
      %v3662 = vrot.slane %v3634, %v3661
      %v3663 = vcombine.high %v3641, %v3641
      %v3664 = vcombine.high %v3648, %v3648
      %v3665 = vcombine.high %v3655, %v3655
      %v3666 = vcombine.high %v3662, %v3662
      %3675 = vst.msk [vmem:[%s201 + $0x6] sm:$0x1] %vm547, %v3641
      %3676 = vst.msk [vmem:[%s201 + $0xe] sm:$0x1] %vm547, %v3655
      %3677 = vst.msk [vmem:[%s201 + $0x16] sm:$0x1] %vm547, %v3663
      %3678 = vst.msk [vmem:[%s201 + $0x1e] sm:$0x1] %vm547, %v3665
      %3679 = vst.msk [vmem:[%s201 + $0x26] sm:$0x1] %vm547, %v3648
      %3680 = vst.msk [vmem:[%s201 + $0x2e] sm:$0x1] %vm547, %v3662
      %3681 = vst.msk [vmem:[%s201 + $0x36] sm:$0x1] %vm547, %v3664
      %3682 = vst.msk [vmem:[%s201 + $0x3e] sm:$0x1] %vm547, %v3666
      %v3683 = vld [vmem:[%s193 + $0x1a] sm:$0x1]
      %v3684 = vld [vmem:[%s193 + $0x3a] sm:$0x1]
      %v3685 = vld [vmem:[%s193 + $0x5a] sm:$0x1]
      %v3686 = vld [vmem:[%s193 + $0x7a] sm:$0x1]
      %v3687 = vld [vmem:[%s1] sm:$0xff]
      %v3688 = vld [vmem:[%s193 + $0x1b] sm:$0x1]
      %v3689 = vld [vmem:[%s193 + $0x3b] sm:$0x1]
      %v3690 = vld [vmem:[%s193 + $0x5b] sm:$0x1]
      %v3691 = vld [vmem:[%s193 + $0x7b] sm:$0x1]
      %v3692 = vld [vmem:[%s565] sm:$0xff]
      %v3697 = vrot.slane %v3689, 7
      %v3698 = vsel %vm220, %v3697, %v3688
      %v3699 = vrot.slane %v3690, 6
      %v3700 = vsel %vm223, %v3699, %v3698
      %v3701 = vrot.slane %v3691, 5
      %v3702 = vsel %vm226, %v3701, %v3700
      %v3704 = vsel %vm228, %v3692, 0
      %v3706 = vsel %vm232, %v3702, 0
      %3708 = vmatprep.subr.mxu0 0.0
      %3709 = vmatpush1.msra.mxu0 %v3706
      %3710 = vmatprep.subr.mxu0 0.0
      %3711 = vmatpush1.msra.mxu0 0.0
      %3712 = vmatprep.subr.mxu0 0.0
      %3713 = vmatpush1.msra.mxu0 0.0
      %3714 = vmatprep.subr.mxu0 0.0
      %3715 = vmatpush1.msra.mxu0 0.0
      %3716 = vmatprep.subr.mxu0 0.0
      %3717 = vmatpush1.msra.mxu0 0.0
      %3718 = vmatprep.subr.mxu0 0.0
      %3719 = vmatpush1.msra.mxu0 0.0
      %3720 = vmatprep.subr.mxu0 0.0
      %3721 = vmatpush1.msra.mxu0 0.0
      %3722 = vmatprep.subr.mxu0 0.0
      %3723 = vmatpush1.msra.mxu0 0.0
      %3724 = vmatprep.subr.mxu0 0.0
      %3725 = vmatpush1.msra.mxu0 0.0
      %3726 = vmatprep.subr.mxu0 0.0
      %3727 = vmatpush1.msra.mxu0 0.0
      %3728 = vmatprep.subr.mxu0 0.0
      %3729 = vmatpush1.msra.mxu0 0.0
      %3730 = vmatprep.subr.mxu0 0.0
      %3731 = vmatpush1.msra.mxu0 0.0
      %3732 = vmatprep.subr.mxu0 0.0
      %3733 = vmatpush1.msra.mxu0 0.0
      %3734 = vmatprep.subr.mxu0 0.0
      %3735 = vmatpush1.msra.mxu0 0.0
      %3736 = vmatprep.subr.mxu0 0.0
      %3737 = vmatpush1.msra.mxu0 0.0
      %3738 = vmatprep.subr.mxu0 0.0
      %3739 = vmatpush1.msra.mxu0 0.0
      %3740 = vmatprep.subr.mxu0 0.0
      %3741 = vmatpush1.msra.mxu0 0.0
      %3742 = vmatprep.subr.mxu0 0.0
      %3743 = vmatpush1.msra.mxu0 0.0
      %3744 = vmatprep.subr.mxu0 0.0
      %3745 = vmatpush1.msra.mxu0 0.0
      %3746 = vmatprep.subr.mxu0 0.0
      %3747 = vmatpush1.msra.mxu0 0.0
      %3748 = vmatprep.subr.mxu0 0.0
      %3749 = vmatpush1.msra.mxu0 0.0
      %3750 = vmatprep.subr.mxu0 0.0
      %3751 = vmatpush1.msra.mxu0 0.0
      %3752 = vmatprep.subr.mxu0 0.0
      %3753 = vmatpush1.msra.mxu0 0.0
      %3754 = vmatprep.subr.mxu0 0.0
      %3755 = vmatpush1.msra.mxu0 0.0
      %3756 = vmatprep.subr.mxu0 0.0
      %3757 = vmatpush1.msra.mxu0 0.0
      %3758 = vmatprep.subr.mxu0 0.0
      %3759 = vmatpush1.msra.mxu0 0.0
      %3760 = vmatprep.subr.mxu0 0.0
      %3761 = vmatpush1.msra.mxu0 0.0
      %3762 = vmatprep.subr.mxu0 0.0
      %3763 = vmatpush1.msra.mxu0 0.0
      %3764 = vmatprep.subr.mxu0 0.0
      %3765 = vmatpush1.msra.mxu0 0.0
      %3766 = vmatprep.subr.mxu0 0.0
      %3767 = vmatpush1.msra.mxu0 0.0
      %3768 = vmatprep.subr.mxu0 0.0
      %3769 = vmatpush1.msra.mxu0 0.0
      %3770 = vmatprep.subr.mxu0 0.0
      %3771 = vmatpush1.msra.mxu0 0.0
      %3772 = vmatprep.mubr.f32.mxu0 0.0
      %3773 = vmatmul.mubr.f32.gmra.mrb[0].mxu0 %v3704
      %v3774 = vpop.f32.mrb[0].mxu0
      %v3775 = vadd.f32 0.0, %v3774
      %v3776 = vpop.f32.mrb[0].mxu0
      %3777 = vdwg.mxu0
      %v3782 = vrot.slane %v3684, 7
      %v3783 = vsel %vm220, %v3782, %v3683
      %v3784 = vrot.slane %v3685, 6
      %v3785 = vsel %vm223, %v3784, %v3783
      %v3786 = vrot.slane %v3686, 5
      %v3787 = vsel %vm226, %v3786, %v3785
      %v3789 = vsel %vm228, %v3687, 0
      %v3791 = vsel %vm232, %v3787, 0
      %3793 = vmatprep.subr.mxu0 0.0
      %3794 = vmatpush1.msra.mxu0 %v3791
      %3795 = vmatprep.subr.mxu0 0.0
      %3796 = vmatpush1.msra.mxu0 0.0
      %3797 = vmatprep.subr.mxu0 0.0
      %3798 = vmatpush1.msra.mxu0 0.0
      %3799 = vmatprep.subr.mxu0 0.0
      %3800 = vmatpush1.msra.mxu0 0.0
      %3801 = vmatprep.subr.mxu0 0.0
      %3802 = vmatpush1.msra.mxu0 0.0
      %3803 = vmatprep.subr.mxu0 0.0
      %3804 = vmatpush1.msra.mxu0 0.0
      %3805 = vmatprep.subr.mxu0 0.0
      %3806 = vmatpush1.msra.mxu0 0.0
      %3807 = vmatprep.subr.mxu0 0.0
      %3808 = vmatpush1.msra.mxu0 0.0
      %3809 = vmatprep.subr.mxu0 0.0
      %3810 = vmatpush1.msra.mxu0 0.0
      %3811 = vmatprep.subr.mxu0 0.0
      %3812 = vmatpush1.msra.mxu0 0.0
      %3813 = vmatprep.subr.mxu0 0.0
      %3814 = vmatpush1.msra.mxu0 0.0
      %3815 = vmatprep.subr.mxu0 0.0
      %3816 = vmatpush1.msra.mxu0 0.0
      %3817 = vmatprep.subr.mxu0 0.0
      %3818 = vmatpush1.msra.mxu0 0.0
      %3819 = vmatprep.subr.mxu0 0.0
      %3820 = vmatpush1.msra.mxu0 0.0
      %3821 = vmatprep.subr.mxu0 0.0
      %3822 = vmatpush1.msra.mxu0 0.0
      %3823 = vmatprep.subr.mxu0 0.0
      %3824 = vmatpush1.msra.mxu0 0.0
      %3825 = vmatprep.subr.mxu0 0.0
      %3826 = vmatpush1.msra.mxu0 0.0
      %3827 = vmatprep.subr.mxu0 0.0
      %3828 = vmatpush1.msra.mxu0 0.0
      %3829 = vmatprep.subr.mxu0 0.0
      %3830 = vmatpush1.msra.mxu0 0.0
      %3831 = vmatprep.subr.mxu0 0.0
      %3832 = vmatpush1.msra.mxu0 0.0
      %3833 = vmatprep.subr.mxu0 0.0
      %3834 = vmatpush1.msra.mxu0 0.0
      %3835 = vmatprep.subr.mxu0 0.0
      %3836 = vmatpush1.msra.mxu0 0.0
      %3837 = vmatprep.subr.mxu0 0.0
      %3838 = vmatpush1.msra.mxu0 0.0
      %3839 = vmatprep.subr.mxu0 0.0
      %3840 = vmatpush1.msra.mxu0 0.0
      %3841 = vmatprep.subr.mxu0 0.0
      %3842 = vmatpush1.msra.mxu0 0.0
      %3843 = vmatprep.subr.mxu0 0.0
      %3844 = vmatpush1.msra.mxu0 0.0
      %3845 = vmatprep.subr.mxu0 0.0
      %3846 = vmatpush1.msra.mxu0 0.0
      %3847 = vmatprep.subr.mxu0 0.0
      %3848 = vmatpush1.msra.mxu0 0.0
      %3849 = vmatprep.subr.mxu0 0.0
      %3850 = vmatpush1.msra.mxu0 0.0
      %3851 = vmatprep.subr.mxu0 0.0
      %3852 = vmatpush1.msra.mxu0 0.0
      %3853 = vmatprep.subr.mxu0 0.0
      %3854 = vmatpush1.msra.mxu0 0.0
      %3855 = vmatprep.subr.mxu0 0.0
      %3856 = vmatpush1.msra.mxu0 0.0
      %3857 = vmatprep.mubr.f32.mxu0 0.0
      %3858 = vmatmul.mubr.f32.gmra.mrb[0].mxu0 %v3789
      %v3859 = vpop.f32.mrb[0].mxu0
      %v3860 = vadd.f32 %v3775, %v3859
      %v3861 = vpop.f32.mrb[0].mxu0
      %3862 = vdwg.mxu0
      %v3863 = vld [vmem:[%s193 + $0x1c] sm:$0x1]
      %v3864 = vld [vmem:[%s193 + $0x3c] sm:$0x1]
      %v3865 = vld [vmem:[%s193 + $0x5c] sm:$0x1]
      %v3866 = vld [vmem:[%s193 + $0x7c] sm:$0x1]
      %v3867 = vld [vmem:[%s207] sm:$0xff]
      %v3872 = vrot.slane %v3864, 7
      %v3873 = vsel %vm220, %v3872, %v3863
      %v3874 = vrot.slane %v3865, 6
      %v3875 = vsel %vm223, %v3874, %v3873
      %v3876 = vrot.slane %v3866, 5
      %v3877 = vsel %vm226, %v3876, %v3875
      %v3879 = vsel %vm228, %v3867, 0
      %v3881 = vsel %vm232, %v3877, 0
      %3883 = vmatprep.subr.mxu0 0.0
      %3884 = vmatpush1.msra.mxu0 %v3881
      %3885 = vmatprep.subr.mxu0 0.0
      %3886 = vmatpush1.msra.mxu0 0.0
      %3887 = vmatprep.subr.mxu0 0.0
      %3888 = vmatpush1.msra.mxu0 0.0
      %3889 = vmatprep.subr.mxu0 0.0
      %3890 = vmatpush1.msra.mxu0 0.0
      %3891 = vmatprep.subr.mxu0 0.0
      %3892 = vmatpush1.msra.mxu0 0.0
      %3893 = vmatprep.subr.mxu0 0.0
      %3894 = vmatpush1.msra.mxu0 0.0
      %3895 = vmatprep.subr.mxu0 0.0
      %3896 = vmatpush1.msra.mxu0 0.0
      %3897 = vmatprep.subr.mxu0 0.0
      %3898 = vmatpush1.msra.mxu0 0.0
      %3899 = vmatprep.subr.mxu0 0.0
      %3900 = vmatpush1.msra.mxu0 0.0
      %3901 = vmatprep.subr.mxu0 0.0
      %3902 = vmatpush1.msra.mxu0 0.0
      %3903 = vmatprep.subr.mxu0 0.0
      %3904 = vmatpush1.msra.mxu0 0.0
      %3905 = vmatprep.subr.mxu0 0.0
      %3906 = vmatpush1.msra.mxu0 0.0
      %3907 = vmatprep.subr.mxu0 0.0
      %3908 = vmatpush1.msra.mxu0 0.0
      %3909 = vmatprep.subr.mxu0 0.0
      %3910 = vmatpush1.msra.mxu0 0.0
      %3911 = vmatprep.subr.mxu0 0.0
      %3912 = vmatpush1.msra.mxu0 0.0
      %3913 = vmatprep.subr.mxu0 0.0
      %3914 = vmatpush1.msra.mxu0 0.0
      %3915 = vmatprep.subr.mxu0 0.0
      %3916 = vmatpush1.msra.mxu0 0.0
      %3917 = vmatprep.subr.mxu0 0.0
      %3918 = vmatpush1.msra.mxu0 0.0
      %3919 = vmatprep.subr.mxu0 0.0
      %3920 = vmatpush1.msra.mxu0 0.0
      %3921 = vmatprep.subr.mxu0 0.0
      %3922 = vmatpush1.msra.mxu0 0.0
      %3923 = vmatprep.subr.mxu0 0.0
      %3924 = vmatpush1.msra.mxu0 0.0
      %3925 = vmatprep.subr.mxu0 0.0
      %3926 = vmatpush1.msra.mxu0 0.0
      %3927 = vmatprep.subr.mxu0 0.0
      %3928 = vmatpush1.msra.mxu0 0.0
      %3929 = vmatprep.subr.mxu0 0.0
      %3930 = vmatpush1.msra.mxu0 0.0
      %3931 = vmatprep.subr.mxu0 0.0
      %3932 = vmatpush1.msra.mxu0 0.0
      %3933 = vmatprep.subr.mxu0 0.0
      %3934 = vmatpush1.msra.mxu0 0.0
      %3935 = vmatprep.subr.mxu0 0.0
      %3936 = vmatpush1.msra.mxu0 0.0
      %3937 = vmatprep.subr.mxu0 0.0
      %3938 = vmatpush1.msra.mxu0 0.0
      %3939 = vmatprep.subr.mxu0 0.0
      %3940 = vmatpush1.msra.mxu0 0.0
      %3941 = vmatprep.subr.mxu0 0.0
      %3942 = vmatpush1.msra.mxu0 0.0
      %3943 = vmatprep.subr.mxu0 0.0
      %3944 = vmatpush1.msra.mxu0 0.0
      %3945 = vmatprep.subr.mxu0 0.0
      %3946 = vmatpush1.msra.mxu0 0.0
      %3947 = vmatprep.mubr.f32.mxu0 0.0
      %3948 = vmatmul.mubr.f32.gmra.mrb[0].mxu0 %v3879
      %v3949 = vpop.f32.mrb[0].mxu0
      %v3950 = vadd.f32 0.0, %v3949
      %v3951 = vpop.f32.mrb[0].mxu0
      %3952 = vdwg.mxu0
      %v3953 = vadd.f32 %v3860, %v3950
      %v3954 = vld [vmem:[%s193 + $0x1d] sm:$0x1]
      %v3955 = vld [vmem:[%s193 + $0x3d] sm:$0x1]
      %v3956 = vld [vmem:[%s193 + $0x5d] sm:$0x1]
      %v3957 = vld [vmem:[%s193 + $0x7d] sm:$0x1]
      %v3958 = vld [vmem:[%s213] sm:$0xff]
      %v3963 = vrot.slane %v3955, 7
      %v3964 = vsel %vm220, %v3963, %v3954
      %v3965 = vrot.slane %v3956, 6
      %v3966 = vsel %vm223, %v3965, %v3964
      %v3967 = vrot.slane %v3957, 5
      %v3968 = vsel %vm226, %v3967, %v3966
      %v3970 = vsel %vm228, %v3958, 0
      %v3972 = vsel %vm232, %v3968, 0
      %3974 = vmatprep.subr.mxu0 0.0
      %3975 = vmatpush1.msra.mxu0 %v3972
      %3976 = vmatprep.subr.mxu0 0.0
      %3977 = vmatpush1.msra.mxu0 0.0
      %3978 = vmatprep.subr.mxu0 0.0
      %3979 = vmatpush1.msra.mxu0 0.0
      %3980 = vmatprep.subr.mxu0 0.0
      %3981 = vmatpush1.msra.mxu0 0.0
      %3982 = vmatprep.subr.mxu0 0.0
      %3983 = vmatpush1.msra.mxu0 0.0
      %3984 = vmatprep.subr.mxu0 0.0
      %3985 = vmatpush1.msra.mxu0 0.0
      %3986 = vmatprep.subr.mxu0 0.0
      %3987 = vmatpush1.msra.mxu0 0.0
      %3988 = vmatprep.subr.mxu0 0.0
      %3989 = vmatpush1.msra.mxu0 0.0
      %3990 = vmatprep.subr.mxu0 0.0
      %3991 = vmatpush1.msra.mxu0 0.0
      %3992 = vmatprep.subr.mxu0 0.0
      %3993 = vmatpush1.msra.mxu0 0.0
      %3994 = vmatprep.subr.mxu0 0.0
      %3995 = vmatpush1.msra.mxu0 0.0
      %3996 = vmatprep.subr.mxu0 0.0
      %3997 = vmatpush1.msra.mxu0 0.0
      %3998 = vmatprep.subr.mxu0 0.0
      %3999 = vmatpush1.msra.mxu0 0.0
      %4000 = vmatprep.subr.mxu0 0.0
      %4001 = vmatpush1.msra.mxu0 0.0
      %4002 = vmatprep.subr.mxu0 0.0
      %4003 = vmatpush1.msra.mxu0 0.0
      %4004 = vmatprep.subr.mxu0 0.0
      %4005 = vmatpush1.msra.mxu0 0.0
      %4006 = vmatprep.subr.mxu0 0.0
      %4007 = vmatpush1.msra.mxu0 0.0
      %4008 = vmatprep.subr.mxu0 0.0
      %4009 = vmatpush1.msra.mxu0 0.0
      %4010 = vmatprep.subr.mxu0 0.0
      %4011 = vmatpush1.msra.mxu0 0.0
      %4012 = vmatprep.subr.mxu0 0.0
      %4013 = vmatpush1.msra.mxu0 0.0
      %4014 = vmatprep.subr.mxu0 0.0
      %4015 = vmatpush1.msra.mxu0 0.0
      %4016 = vmatprep.subr.mxu0 0.0
      %4017 = vmatpush1.msra.mxu0 0.0
      %4018 = vmatprep.subr.mxu0 0.0
      %4019 = vmatpush1.msra.mxu0 0.0
      %4020 = vmatprep.subr.mxu0 0.0
      %4021 = vmatpush1.msra.mxu0 0.0
      %4022 = vmatprep.subr.mxu0 0.0
      %4023 = vmatpush1.msra.mxu0 0.0
      %4024 = vmatprep.subr.mxu0 0.0
      %4025 = vmatpush1.msra.mxu0 0.0
      %4026 = vmatprep.subr.mxu0 0.0
      %4027 = vmatpush1.msra.mxu0 0.0
      %4028 = vmatprep.subr.mxu0 0.0
      %4029 = vmatpush1.msra.mxu0 0.0
      %4030 = vmatprep.subr.mxu0 0.0
      %4031 = vmatpush1.msra.mxu0 0.0
      %4032 = vmatprep.subr.mxu0 0.0
      %4033 = vmatpush1.msra.mxu0 0.0
      %4034 = vmatprep.subr.mxu0 0.0
      %4035 = vmatpush1.msra.mxu0 0.0
      %4036 = vmatprep.subr.mxu0 0.0
      %4037 = vmatpush1.msra.mxu0 0.0
      %4038 = vmatprep.mubr.f32.mxu0 0.0
      %4039 = vmatmul.mubr.f32.gmra.mrb[0].mxu0 %v3970
      %v4040 = vpop.f32.mrb[0].mxu0
      %v4041 = vadd.f32 0.0, %v4040
      %v4042 = vpop.f32.mrb[0].mxu0
      %4043 = vdwg.mxu0
      %v4044 = vadd.f32 %v3953, %v4041
      %v4045 = vld [vmem:[%s193 + $0x1e] sm:$0x1]
      %v4046 = vld [vmem:[%s193 + $0x3e] sm:$0x1]
      %v4047 = vld [vmem:[%s193 + $0x5e] sm:$0x1]
      %v4048 = vld [vmem:[%s193 + $0x7e] sm:$0x1]
      %v4049 = vld [vmem:[%s394] sm:$0xff]
      %v4054 = vrot.slane %v4046, 7
      %v4055 = vsel %vm220, %v4054, %v4045
      %v4056 = vrot.slane %v4047, 6
      %v4057 = vsel %vm223, %v4056, %v4055
      %v4058 = vrot.slane %v4048, 5
      %v4059 = vsel %vm226, %v4058, %v4057
      %v4061 = vsel %vm228, %v4049, 0
      %v4063 = vsel %vm232, %v4059, 0
      %4065 = vmatprep.subr.mxu0 0.0
      %4066 = vmatpush1.msra.mxu0 %v4063
      %4067 = vmatprep.subr.mxu0 0.0
      %4068 = vmatpush1.msra.mxu0 0.0
      %4069 = vmatprep.subr.mxu0 0.0
      %4070 = vmatpush1.msra.mxu0 0.0
      %4071 = vmatprep.subr.mxu0 0.0
      %4072 = vmatpush1.msra.mxu0 0.0
      %4073 = vmatprep.subr.mxu0 0.0
      %4074 = vmatpush1.msra.mxu0 0.0
      %4075 = vmatprep.subr.mxu0 0.0
      %4076 = vmatpush1.msra.mxu0 0.0
      %4077 = vmatprep.subr.mxu0 0.0
      %4078 = vmatpush1.msra.mxu0 0.0
      %4079 = vmatprep.subr.mxu0 0.0
      %4080 = vmatpush1.msra.mxu0 0.0
      %4081 = vmatprep.subr.mxu0 0.0
      %4082 = vmatpush1.msra.mxu0 0.0
      %4083 = vmatprep.subr.mxu0 0.0
      %4084 = vmatpush1.msra.mxu0 0.0
      %4085 = vmatprep.subr.mxu0 0.0
      %4086 = vmatpush1.msra.mxu0 0.0
      %4087 = vmatprep.subr.mxu0 0.0
      %4088 = vmatpush1.msra.mxu0 0.0
      %4089 = vmatprep.subr.mxu0 0.0
      %4090 = vmatpush1.msra.mxu0 0.0
      %4091 = vmatprep.subr.mxu0 0.0
      %4092 = vmatpush1.msra.mxu0 0.0
      %4093 = vmatprep.subr.mxu0 0.0
      %4094 = vmatpush1.msra.mxu0 0.0
      %4095 = vmatprep.subr.mxu0 0.0
      %4096 = vmatpush1.msra.mxu0 0.0
      %4097 = vmatprep.subr.mxu0 0.0
      %4098 = vmatpush1.msra.mxu0 0.0
      %4099 = vmatprep.subr.mxu0 0.0
      %4100 = vmatpush1.msra.mxu0 0.0
      %4101 = vmatprep.subr.mxu0 0.0
      %4102 = vmatpush1.msra.mxu0 0.0
      %4103 = vmatprep.subr.mxu0 0.0
      %4104 = vmatpush1.msra.mxu0 0.0
      %4105 = vmatprep.subr.mxu0 0.0
      %4106 = vmatpush1.msra.mxu0 0.0
      %4107 = vmatprep.subr.mxu0 0.0
      %4108 = vmatpush1.msra.mxu0 0.0
      %4109 = vmatprep.subr.mxu0 0.0
      %4110 = vmatpush1.msra.mxu0 0.0
      %4111 = vmatprep.subr.mxu0 0.0
      %4112 = vmatpush1.msra.mxu0 0.0
      %4113 = vmatprep.subr.mxu0 0.0
      %4114 = vmatpush1.msra.mxu0 0.0
      %4115 = vmatprep.subr.mxu0 0.0
      %4116 = vmatpush1.msra.mxu0 0.0
      %4117 = vmatprep.subr.mxu0 0.0
      %4118 = vmatpush1.msra.mxu0 0.0
      %4119 = vmatprep.subr.mxu0 0.0
      %4120 = vmatpush1.msra.mxu0 0.0
      %4121 = vmatprep.subr.mxu0 0.0
      %4122 = vmatpush1.msra.mxu0 0.0
      %4123 = vmatprep.subr.mxu0 0.0
      %4124 = vmatpush1.msra.mxu0 0.0
      %4125 = vmatprep.subr.mxu0 0.0
      %4126 = vmatpush1.msra.mxu0 0.0
      %4127 = vmatprep.subr.mxu0 0.0
      %4128 = vmatpush1.msra.mxu0 0.0
      %4129 = vmatprep.mubr.f32.mxu0 0.0
      %4130 = vmatmul.mubr.f32.gmra.mrb[0].mxu0 %v4061
      %v4131 = vpop.f32.mrb[0].mxu0
      %v4132 = vadd.f32 0.0, %v4131
      %v4133 = vpop.f32.mrb[0].mxu0
      %4134 = vdwg.mxu0
      %v4135 = vadd.f32 %v4044, %v4132
      %v4136 = vadd.f32 %v4135, %v485
      %v4137 = vmax.f32 %v4136, 0.0
      %v4139 = vcombine.high %v4137, %v4137
      %v4141 = vunpack.c.l.s4 1966171168
      %v4142 = vunpack.c.0.s8 %v4141
      %v4143 = vlaneseq
      %v4144 = vshrl.u32 %v4143, 7
      %v4145 = vsub.s32 %v4142, %v4144
      %v4146 = vrot.slane %v4137, %v4145
      %v4148 = vunpack.c.l.s4 1966171168
      %v4149 = vunpack.c.0.s8 %v4148
      %v4150 = vlaneseq
      %v4151 = vshrl.u32 %v4150, 7
      %v4152 = vsub.s32 %v4149, %v4151
      %v4153 = vrot.slane %v4139, %v4152
      %v4154 = vcombine.high %v4146, %v4146
      %v4155 = vcombine.high %v4153, %v4153
      %v4157 = vunpack.c.l.s4 1966171168
      %v4158 = vunpack.c.0.s8 %v4157
      %v4159 = vlaneseq
      %v4160 = vshrl.u32 %v4159, 7
      %v4161 = vsub.s32 %v4158, %v4160
      %v4162 = vrot.slane %v4146, %v4161
      %v4164 = vunpack.c.l.s4 1966171168
      %v4165 = vunpack.c.0.s8 %v4164
      %v4166 = vlaneseq
      %v4167 = vshrl.u32 %v4166, 7
      %v4168 = vsub.s32 %v4165, %v4167
      %v4169 = vrot.slane %v4153, %v4168
      %v4171 = vunpack.c.l.s4 1966171168
      %v4172 = vunpack.c.0.s8 %v4171
      %v4173 = vlaneseq
      %v4174 = vshrl.u32 %v4173, 7
      %v4175 = vsub.s32 %v4172, %v4174
      %v4176 = vrot.slane %v4154, %v4175
      %v4178 = vunpack.c.l.s4 1966171168
      %v4179 = vunpack.c.0.s8 %v4178
      %v4180 = vlaneseq
      %v4181 = vshrl.u32 %v4180, 7
      %v4182 = vsub.s32 %v4179, %v4181
      %v4183 = vrot.slane %v4155, %v4182
      %v4184 = vcombine.high %v4162, %v4162
      %v4185 = vcombine.high %v4169, %v4169
      %v4186 = vcombine.high %v4176, %v4176
      %v4187 = vcombine.high %v4183, %v4183
      %4196 = vst.msk [vmem:[%s201 + $0x7] sm:$0x1] %vm547, %v4162
      %4197 = vst.msk [vmem:[%s201 + $0xf] sm:$0x1] %vm547, %v4176
      %4198 = vst.msk [vmem:[%s201 + $0x17] sm:$0x1] %vm547, %v4184
      %4199 = vst.msk [vmem:[%s201 + $0x1f] sm:$0x1] %vm547, %v4186
      %4200 = vst.msk [vmem:[%s201 + $0x27] sm:$0x1] %vm547, %v4169
      %4201 = vst.msk [vmem:[%s201 + $0x2f] sm:$0x1] %vm547, %v4183
      %4202 = vst.msk [vmem:[%s201 + $0x37] sm:$0x1] %vm547, %v4185
      %4203 = vst.msk [vmem:[%s201 + $0x3f] sm:$0x1] %vm547, %v4187
      %p4204 = scmp.lt.s32.totalorder %s18, 1
      %s4205 = scalar_select %p4204, %s18, 1
      %p4206 = scmp.lt.s32.totalorder %s19, 0
      %s4207 = scalar_select %p4206, %s19, 0
      %s4208 = smul.addr %s4205, 8
      %s4209 = sadd.s32 %s4207, %s4208
      %s4210 = smul.addr %s4209, 8
      %s4211 = scalar_lea.vmem %s3, %s4210
      // Predicated region
      $region33: #{fuse_fast_to_slow.1} parent=31 // pred_check
        %p4212 = pneg %p116
      $region34: #{fuse_fast_to_slow.1} parent=31 // pred_check_branch
        %4214 = sbr.rel (%p4212) target = $region36
      $region35: #{fuse_fast_to_slow.1} parent=31 // pred_region
        _
      $region36: #{fuse_fast_to_slow.1} parent=31 // pred_fallthru
        _
    $region32: #{fuse_fast_to_slow.1} parent=5 // pred_fallthru
      _
    %p4215 = scmp.le.s32.totalorder 2, %s9
    // Predicated region
    $region37: #{fuse_fast_to_slow.1} parent=5 // pred_check
      %p4216 = pneg %p4215
    $region38: #{fuse_fast_to_slow.1} parent=5 // pred_check_branch
      %4218 = sbr.rel (%p4216) target = $region40
    $region39: #{fuse_fast_to_slow.1} parent=5 // pred_region
      %s4219 = ssub.s32 %s9, 2
      // Predicated region
      $region41: #{fuse_fast_to_slow.1} parent=39 // pred_check
        %p4220 = pneg %p122
      $region42: #{fuse_fast_to_slow.1} parent=39 // pred_check_branch
        %4222 = sbr.rel (%p4220) target = $region44
      $region43: #{fuse_fast_to_slow.1} parent=39 // pred_region
        %p4223 = scmp.lt.s32.totalorder %s20, 1
        %s4224 = scalar_select %p4223, %s20, 1
        %p4225 = scmp.lt.s32.totalorder %s21, 0
        %s4226 = scalar_select %p4225, %s21, 0
        %s4227 = smul.addr %s4224, 8
        %s4228 = sadd.s32 %s4226, %s4227
        %s4229 = smul.addr %s4228, 8
        %s4230 = scalar_lea.vmem %s3, %s4229
      $region44: #{fuse_fast_to_slow.1} parent=39 // pred_fallthru
        _
    $region40: #{fuse_fast_to_slow.1} parent=5 // pred_fallthru
      _
  $region6: #{fuse_fast_to_slow.1} parent=0 // loop_footer
    %s13 = sadd.s32 1, %s9
  $region7: #{fuse_fast_to_slow.1} parent=0 // loop_footer_branch
    %8 = sbr.rel target = $region3
  $region8: #{fuse_fast_to_slow.1} parent=0 // loop_exit
    _

</llo_original>
